<compile_context>
chip_gen: v7x
topology: tpu7x:2x2x1
jax: 0.10.0
libtpu: 0.0.40
codegen_flags: <defaults>
</compile_context>

<pallas_src>
import functools
import numpy as np
import jax
import jax.numpy as jnp
from jax import lax
from jax.experimental import pallas as pl
from jax.experimental.pallas import tpu as pltpu

EPS = 1e-5


# --------------------------------------------------------------------------
# kernel
# --------------------------------------------------------------------------
def _tap(pad_ref, kh, kw, nh, nw, stride):
    """(nh, nw, C) window of the zero-padded scratch at spatial `stride`."""
    if stride == 1:
        return pad_ref[pl.ds(kh, nh), pl.ds(kw, nw), :]
    return pad_ref[pl.ds(kh, nh, stride=stride),
                   pl.ds(kw, nw, stride=stride), :]


def _conv3x3(pad_ref, w_ref, nh, nw, stride):
    """3x3 conv (padding already materialised in pad_ref), output at stride.

    w_ref is (3, 3*Cin, Dout): the 3 kw taps of each kh row are packed along
    the K axis, matching the in-kernel lane-concat below -> 3 fat MXU calls.
    """
    cin = pad_ref.shape[-1]
    dout = w_ref.shape[-1]
    q = nh * nw
    acc = jnp.zeros((q, dout), jnp.float32)
    for kh in range(3):
        row = jnp.concatenate(
            [_tap(pad_ref, kh, kw, nh, nw, stride)
             .reshape(q, cin).astype(jnp.bfloat16) for kw in range(3)],
            axis=-1)                                            # (q, 3*cin) bf16
        acc = acc + jnp.dot(row, w_ref[kh],
                            preferred_element_type=jnp.float32)
    return acc                                                  # (q, dout) f32


def _bottleneck_kernel(H, W, Ho, Wo, stride,
                       x_ref, xs_ref, w1_ref, w2_ref, wsc_ref,
                       scale1_ref, bias1_ref, alpha_ref,
                       scale2_ref, bias2_ref, scale_sc_ref, bias_sc_ref,
                       out_ref, pad1_ref, pad2_ref):
    Cp = pad1_ref.shape[-1]
    Dp = pad2_ref.shape[-1]
    P, Q = H * W, Ho * Wo

    # ---- BN1 (eval mode, folded to scale/bias; f32 elementwise) ----
    x = x_ref[0].reshape(P, Cp).astype(jnp.float32)
    y = x * scale1_ref[...] + bias1_ref[...]

    # zero-padded copy of y in VMEM (border re-zeroed every step: scratch must
    # not carry state across grid steps under megacore sharding).
    pad1_ref[...] = jnp.zeros(pad1_ref.shape, pad1_ref.dtype)
    pad1_ref[pl.ds(1, H), pl.ds(1, W), :] = y.reshape(H, W, Cp)

    # ---- conv1: 3x3, stride 1, pad 1, then PReLU ----
    t = _conv3x3(pad1_ref, w1_ref, H, W, 1)                     # (P, Dp) f32
    t = jnp.where(t > 0, t, t * alpha_ref[...])

    pad2_ref[...] = jnp.zeros(pad2_ref.shape, pad2_ref.dtype)
    pad2_ref[pl.ds(1, H), pl.ds(1, W), :] = t.reshape(H, W, Dp)

    # ---- conv2: 3x3, stride, pad 1 -- evaluated only at output pixels ----
    r = _conv3x3(pad2_ref, w2_ref, Ho, Wo, stride)              # (Q, Dp) f32
    res = r * scale2_ref[...] + bias2_ref[...]                  # BN2 (folded)

    # ---- shortcut: 1x1 conv (identity for MaxPool case) on strided x + BN ----
    xs = xs_ref[0].reshape(Q, Cp)                               # bf16
    sc = jnp.dot(xs, wsc_ref[...], preferred_element_type=jnp.float32)
    sc = sc * scale_sc_ref[...] + bias_sc_ref[...]

    out_ref[0] = (res + sc).reshape(Ho, Wo, Dp).astype(out_ref.dtype)


# --------------------------------------------------------------------------
# wrapper
# --------------------------------------------------------------------------
def _round_up(x, m):
    return (x + m - 1) // m * m


def _fold_bn(gamma, beta, mean, var, width):
    s = gamma / jnp.sqrt(var + EPS)
    b = beta - mean * s
    pad = width - s.shape[0]
    return (jnp.pad(s, (0, pad)).reshape(1, width).astype(jnp.float32),
            jnp.pad(b, (0, pad)).reshape(1, width).astype(jnp.float32))


@functools.partial(jax.jit, static_argnames=("stride",))
def bottleneck_forward(x_nchw, params, stride):
    """Pallas forward for Bottleneck.  x_nchw: (N, Cin, H, W) float32 (PyTorch layout)."""
    N, Cin, H, W = x_nchw.shape
    depth = params["w1"].shape[-1]
    Ho = (H - 1) // stride + 1
    Wo = (W - 1) // stride + 1
    Cp = _round_up(Cin, 128)
    Dp = _round_up(depth, 128)

    # NCHW -> NHWC, zero-pad channels to 128 lanes, bf16 for the MXU operands.
    x = jnp.transpose(x_nchw, (0, 2, 3, 1))
    x = jnp.pad(x, ((0, 0), (0, 0), (0, 0), (0, Cp - Cin))).astype(jnp.bfloat16)
    xs = x[:, ::stride, ::stride, :]                 # shortcut input (layout plumbing)

    # conv weights HWIO -> (3, 3*C, D): kw-major along K, matching the kernel's
    # lane-concat of the 3 kw taps.  Channels zero-padded to 128.
    w1 = jnp.pad(params["w1"], ((0, 0), (0, 0), (0, Cp - Cin), (0, Dp - depth)))
    w1 = w1.reshape(3, 3 * Cp, Dp).astype(jnp.bfloat16)
    w2 = jnp.pad(params["w2"], ((0, 0), (0, 0), (0, Dp - depth), (0, Dp - depth)))
    w2 = w2.reshape(3, 3 * Dp, Dp).astype(jnp.bfloat16)

    scale1, bias1 = _fold_bn(params["g1"], params["b1"], params["m1"], params["v1"], Cp)
    scale2, bias2 = _fold_bn(params["g2"], params["b2"], params["m2"], params["v2"], Dp)
    alpha = jnp.pad(params["alpha"], (0, Dp - depth)).reshape(1, Dp).astype(jnp.float32)

    if "wsc" in params:   # Conv2d(1x1, stride, bias=False) + BatchNorm2d shortcut
        wsc = jnp.pad(params["wsc"].reshape(Cin, depth),
                      ((0, Cp - Cin), (0, Dp - depth))).astype(jnp.bfloat16)
        scale_sc, bias_sc = _fold_bn(params["gsc"], params["bsc"],
                                     params["msc"], params["vsc"], Dp)
    else:                 # MaxPool2d(1, stride): pure subsampling (Cin == depth)
        wsc = jnp.eye(Cp, Dp, dtype=jnp.bfloat16)
        scale_sc = jnp.ones((1, Dp), jnp.float32)
        bias_sc = jnp.zeros((1, Dp), jnp.float32)

    operands = (x, xs, w1, w2, wsc, scale1, bias1, alpha,
                scale2, bias2, scale_sc, bias_sc)

    def _res(shape):      # resident across the grid (constant index_map)
        if len(shape) == 2:
            return pl.BlockSpec(shape, lambda n: (0, 0))
        return pl.BlockSpec(shape, lambda n: (0, 0, 0))

    in_specs = [
        pl.BlockSpec((1, H, W, Cp), lambda n: (n, 0, 0, 0)),     # x, one image / step
        pl.BlockSpec((1, Ho, Wo, Cp), lambda n: (n, 0, 0, 0)),   # strided shortcut input
        _res((3, 3 * Cp, Dp)), _res((3, 3 * Dp, Dp)), _res((Cp, Dp)),
        _res((1, Cp)), _res((1, Cp)), _res((1, Dp)),
        _res((1, Dp)), _res((1, Dp)), _res((1, Dp)), _res((1, Dp)),
    ]

    out = pl.pallas_call(
        functools.partial(_bottleneck_kernel, H, W, Ho, Wo, stride),
        out_shape=jax.ShapeDtypeStruct((N, Ho, Wo, Dp), jnp.float32),
        grid=(N,),
        in_specs=in_specs,
        out_specs=pl.BlockSpec((1, Ho, Wo, Dp), lambda n: (n, 0, 0, 0)),
        scratch_shapes=[pltpu.VMEM((H + 2, W + 2, Cp), jnp.float32),
                        pltpu.VMEM((H + 2, W + 2, Dp), jnp.float32)],
        compiler_params=pltpu.CompilerParams(
            dimension_semantics=("parallel",)),
    )(*operands)

    # drop channel padding, back to NCHW
    return jnp.transpose(out[..., :depth], (0, 3, 1, 2)).astype(x_nchw.dtype)


# --------------------------------------------------------------------------
# pure-JAX reference (eval-mode BN) + parameter init + smoke test
# --------------------------------------------------------------------------
def bottleneck_reference(x_nchw, params, stride):
    x = jnp.transpose(x_nchw, (0, 2, 3, 1)).astype(jnp.float32)   # NHWC

    def bn(v, g, b, m, var):
        return (v - m) / jnp.sqrt(var + EPS) * g + b

    dn = ("NHWC", "HWIO", "NHWC")
    y = bn(x, params["g1"], params["b1"], params["m1"], params["v1"])
    y = lax.conv_general_dilated(y, params["w1"], (1, 1), ((1, 1), (1, 1)),
                                 dimension_numbers=dn)
    y = jnp.where(y > 0, y, params["alpha"] * y)
    y = lax.conv_general_dilated(y, params["w2"], (stride, stride), ((1, 1), (1, 1)),
                                 dimension_numbers=dn)
    y = bn(y, params["g2"], params["b2"], params["m2"], params["v2"])

    if "wsc" in params:
        s = lax.conv_general_dilated(x, params["wsc"], (stride, stride), "VALID",
                                     dimension_numbers=dn)
        s = bn(s, params["gsc"], params["bsc"], params["msc"], params["vsc"])
    else:
        s = x[:, ::stride, ::stride, :]
    return jnp.transpose(y + s, (0, 3, 1, 2))


def init_params(key, channel_in, depth):
    ks = jax.random.split(key, 16)
    p = {
        "g1": 1.0 + 0.1 * jax.random.normal(ks[0], (channel_in,)),
        "b1": 0.1 * jax.random.normal(ks[1], (channel_in,)),
        "m1": 0.1 * jax.random.normal(ks[2], (channel_in,)),
        "v1": 0.8 + 0.4 * jax.random.uniform(ks[3], (channel_in,)),
        "w1": 0.2 * jax.random.normal(ks[4], (3, 3, channel_in, depth)),   # HWIO
        "alpha": 0.25 + 0.1 * jax.random.uniform(ks[5], (depth,)),
        "w2": 0.2 * jax.random.normal(ks[6], (3, 3, depth, depth)),
        "g2": 1.0 + 0.1 * jax.random.normal(ks[7], (depth,)),
        "b2": 0.1 * jax.random.normal(ks[8], (depth,)),
        "m2": 0.1 * jax.random.normal(ks[9], (depth,)),
        "v2": 0.8 + 0.4 * jax.random.uniform(ks[10], (depth,)),
    }
    if channel_in != depth:
        p.update({
            "wsc": 0.2 * jax.random.normal(ks[11], (1, 1, channel_in, depth)),
            "gsc": 1.0 + 0.1 * jax.random.normal(ks[12], (depth,)),
            "bsc": 0.1 * jax.random.normal(ks[13], (depth,)),
            "msc": 0.1 * jax.random.normal(ks[14], (depth,)),
            "vsc": 0.8 + 0.4 * jax.random.uniform(ks[15], (depth,)),
        })
    return jax.tree_util.tree_map(lambda a: a.astype(jnp.float32), p)


if __name__ == "__main__":
    key = jax.random.PRNGKey(0)
    kx1, kp1, kx2, kp2, kx3, kp3 = jax.random.split(key, 6)
    # tolerance: bf16 MXU operands (f32 accumulation) vs. an f32 reference.
    TOL = dict(rtol=5e-2, atol=5e-2)

    # case 1: channel_in != depth, stride 2 -> Conv1x1(stride) + BN shortcut
    x1 = jax.random.normal(kx1, (2, 4, 16, 16), jnp.float32)      # NCHW
    p1 = init_params(kp1, 4, 8)
    out1 = jax.block_until_ready(bottleneck_forward(x1, p1, stride=2))
    assert out1.shape == (2, 8, 8, 8), out1.shape
    np.testing.assert_allclose(np.asarray(out1),
                               np.asarray(bottleneck_reference(x1, p1, 2)), **TOL)

    # case 2: channel_in == depth, stride 2 -> MaxPool2d(1, stride) shortcut
    x2 = jax.random.normal(kx2, (2, 8, 16, 16), jnp.float32)
    p2 = init_params(kp2, 8, 8)
    out2 = jax.block_until_ready(bottleneck_forward(x2, p2, stride=2))
    assert out2.shape == (2, 8, 8, 8), out2.shape
    np.testing.assert_allclose(np.asarray(out2),
                               np.asarray(bottleneck_reference(x2, p2, 2)), **TOL)

    # case 3: stride 1 path (contiguous conv2 taps)
    x3 = jax.random.normal(kx3, (2, 4, 16, 16), jnp.float32)
    p3 = init_params(kp3, 4, 8)
    out3 = jax.block_until_ready(bottleneck_forward(x3, p3, stride=1))
    assert out3.shape == (2, 8, 16, 16), out3.shape
    np.testing.assert_allclose(np.asarray(out3),
                               np.asarray(bottleneck_reference(x3, p3, 1)), **TOL)

    print("KERNEL_OK")
</pallas_src>

<mosaic_0001>
module attributes {stable_mosaic.version = 11 : i64} {
  func.func @_bottleneck_kernel(%arg0: i32, %arg1: memref<1x16x16x128xbf16, #tpu.memory_space<vmem>>, %arg2: memref<1x8x8x128xbf16, #tpu.memory_space<vmem>>, %arg3: memref<3x384x128xbf16, #tpu.memory_space<vmem>>, %arg4: memref<3x384x128xbf16, #tpu.memory_space<vmem>>, %arg5: memref<128x128xbf16, #tpu.memory_space<vmem>>, %arg6: memref<1x128xf32, #tpu.memory_space<vmem>>, %arg7: memref<1x128xf32, #tpu.memory_space<vmem>>, %arg8: memref<1x128xf32, #tpu.memory_space<vmem>>, %arg9: memref<1x128xf32, #tpu.memory_space<vmem>>, %arg10: memref<1x128xf32, #tpu.memory_space<vmem>>, %arg11: memref<1x128xf32, #tpu.memory_space<vmem>>, %arg12: memref<1x128xf32, #tpu.memory_space<vmem>>, %arg13: memref<1x8x8x128xf32, #tpu.memory_space<vmem>>, %arg14: memref<18x18x128xf32, #tpu.memory_space<vmem>>, %arg15: memref<18x18x128xf32, #tpu.memory_space<vmem>>) attributes {dimension_semantics = [#tpu.dimension_semantics<parallel>], iteration_bounds = array<i64: 2>, scalar_prefetch = 0 : i64, scratch_operands = 2 : i64, tpu.core_type = #tpu.core_type<tc>, window_params = [{transform_indices = @transform_0, window_bounds = array<i64: 1, 16, 16, 128>}, {transform_indices = @transform_1, window_bounds = array<i64: 1, 8, 8, 128>}, {pipeline_mode = #tpu.pipeline_mode<synchronous>, transform_indices = @transform_2, window_bounds = array<i64: 3, 384, 128>}, {pipeline_mode = #tpu.pipeline_mode<synchronous>, transform_indices = @transform_3, window_bounds = array<i64: 3, 384, 128>}, {pipeline_mode = #tpu.pipeline_mode<synchronous>, transform_indices = @transform_4, window_bounds = array<i64: 128, 128>}, {pipeline_mode = #tpu.pipeline_mode<synchronous>, transform_indices = @transform_5, window_bounds = array<i64: 1, 128>}, {pipeline_mode = #tpu.pipeline_mode<synchronous>, transform_indices = @transform_6, window_bounds = array<i64: 1, 128>}, {pipeline_mode = #tpu.pipeline_mode<synchronous>, transform_indices = @transform_7, window_bounds = array<i64: 1, 128>}, {pipeline_mode = #tpu.pipeline_mode<synchronous>, transform_indices = @transform_8, window_bounds = array<i64: 1, 128>}, {pipeline_mode = #tpu.pipeline_mode<synchronous>, transform_indices = @transform_9, window_bounds = array<i64: 1, 128>}, {pipeline_mode = #tpu.pipeline_mode<synchronous>, transform_indices = @transform_10, window_bounds = array<i64: 1, 128>}, {pipeline_mode = #tpu.pipeline_mode<synchronous>, transform_indices = @transform_11, window_bounds = array<i64: 1, 128>}, {transform_indices = @transform_12, window_bounds = array<i64: 1, 8, 8, 128>}]} {
    %c0 = arith.constant 0 : index
    %c0_0 = arith.constant 0 : index
    %c0_1 = arith.constant 0 : index
    %c0_2 = arith.constant 0 : index
    %0 = vector.load %arg1[%c0, %c0_0, %c0_1, %c0_2] : memref<1x16x16x128xbf16, #tpu.memory_space<vmem>>, vector<1x16x16x128xbf16>
    %1 = vector.shape_cast %0 : vector<1x16x16x128xbf16> to vector<16x16x128xbf16>
    %2 = vector.shape_cast %1 : vector<16x16x128xbf16> to vector<256x128xbf16>
    %3 = arith.extf %2 : vector<256x128xbf16> to vector<256x128xf32>
    %c0_3 = arith.constant 0 : index
    %c0_4 = arith.constant 0 : index
    %4 = vector.load %arg6[%c0_3, %c0_4] : memref<1x128xf32, #tpu.memory_space<vmem>>, vector<1x128xf32>
    %5 = vector.broadcast %4 : vector<1x128xf32> to vector<256x128xf32>
    %6 = arith.mulf %3, %5 : vector<256x128xf32>
    %c0_5 = arith.constant 0 : index
    %c0_6 = arith.constant 0 : index
    %7 = vector.load %arg7[%c0_5, %c0_6] : memref<1x128xf32, #tpu.memory_space<vmem>>, vector<1x128xf32>
    %8 = vector.broadcast %7 : vector<1x128xf32> to vector<256x128xf32>
    %9 = arith.addf %6, %8 : vector<256x128xf32>
    %cst = arith.constant 0.000000e+00 : f32
    %10 = vector.broadcast %cst : f32 to vector<18x18x128xf32>
    %c0_7 = arith.constant 0 : index
    %c0_8 = arith.constant 0 : index
    %c0_9 = arith.constant 0 : index
    %11 = vector.load %arg14[%c0_7, %c0_8, %c0_9] : memref<18x18x128xf32, #tpu.memory_space<vmem>>, vector<18x18x128xf32>
    tpu.vector_store %arg14[%c0_7, %c0_8, %c0_9], %10 {strides = array<i32>} : memref<18x18x128xf32, #tpu.memory_space<vmem>>, vector<18x18x128xf32>,
    %12 = vector.shape_cast %9 : vector<256x128xf32> to vector<16x16x128xf32>
    %c1 = arith.constant 1 : index
    %c1_10 = arith.constant 1 : index
    %c0_11 = arith.constant 0 : index
    %13 = vector.load %arg14[%c1, %c1_10, %c0_11] : memref<18x18x128xf32, #tpu.memory_space<vmem>>, vector<16x16x128xf32>
    tpu.vector_store %arg14[%c1, %c1_10, %c0_11], %12 {strides = array<i32>} : memref<18x18x128xf32, #tpu.memory_space<vmem>>, vector<16x16x128xf32>,
    %cst_12 = arith.constant 0.000000e+00 : f32
    %14 = vector.broadcast %cst_12 : f32 to vector<256x128xf32>
    %c0_13 = arith.constant 0 : index
    %c0_14 = arith.constant 0 : index
    %c0_15 = arith.constant 0 : index
    %15 = vector.load %arg14[%c0_13, %c0_14, %c0_15] : memref<18x18x128xf32, #tpu.memory_space<vmem>>, vector<16x16x128xf32>
    %16 = vector.shape_cast %15 : vector<16x16x128xf32> to vector<256x128xf32>
    %17 = arith.truncf %16 : vector<256x128xf32> to vector<256x128xbf16>
    %c0_16 = arith.constant 0 : index
    %c1_17 = arith.constant 1 : index
    %c0_18 = arith.constant 0 : index
    %18 = vector.load %arg14[%c0_16, %c1_17, %c0_18] : memref<18x18x128xf32, #tpu.memory_space<vmem>>, vector<16x16x128xf32>
    %19 = vector.shape_cast %18 : vector<16x16x128xf32> to vector<256x128xf32>
    %20 = arith.truncf %19 : vector<256x128xf32> to vector<256x128xbf16>
    %c0_19 = arith.constant 0 : index
    %c2 = arith.constant 2 : index
    %c0_20 = arith.constant 0 : index
    %21 = vector.load %arg14[%c0_19, %c2, %c0_20] : memref<18x18x128xf32, #tpu.memory_space<vmem>>, vector<16x16x128xf32>
    %22 = vector.shape_cast %21 : vector<16x16x128xf32> to vector<256x128xf32>
    %23 = arith.truncf %22 : vector<256x128xf32> to vector<256x128xbf16>
    %24 = tpu.concatenate %17, %20, %23 in 1 : vector<256x128xbf16>, vector<256x128xbf16>, vector<256x128xbf16> -> vector<256x384xbf16>
    %c0_21 = arith.constant 0 : index
    %c0_22 = arith.constant 0 : index
    %c0_23 = arith.constant 0 : index
    %25 = vector.load %arg3[%c0_21, %c0_22, %c0_23] : memref<3x384x128xbf16, #tpu.memory_space<vmem>>, vector<1x384x128xbf16>
    %26 = vector.shape_cast %25 : vector<1x384x128xbf16> to vector<384x128xbf16>
    %cst_24 = arith.constant dense<0.000000e+00> : vector<256x128xf32>
    %27 = tpu.matmul %24, %26, %cst_24 {dimension_numbers = #tpu.dot_dimension_numbers<[1], [0], [0], [1], [0, 0, 1, 1], [], []>} : vector<256x384xbf16>, vector<384x128xbf16>, vector<256x128xf32> -> vector<256x128xf32>
    %28 = arith.addf %14, %27 : vector<256x128xf32>
    %c1_25 = arith.constant 1 : index
    %c0_26 = arith.constant 0 : index
    %c0_27 = arith.constant 0 : index
    %29 = vector.load %arg14[%c1_25, %c0_26, %c0_27] : memref<18x18x128xf32, #tpu.memory_space<vmem>>, vector<16x16x128xf32>
    %30 = vector.shape_cast %29 : vector<16x16x128xf32> to vector<256x128xf32>
    %31 = arith.truncf %30 : vector<256x128xf32> to vector<256x128xbf16>
    %c1_28 = arith.constant 1 : index
    %c1_29 = arith.constant 1 : index
    %c0_30 = arith.constant 0 : index
    %32 = vector.load %arg14[%c1_28, %c1_29, %c0_30] : memref<18x18x128xf32, #tpu.memory_space<vmem>>, vector<16x16x128xf32>
    %33 = vector.shape_cast %32 : vector<16x16x128xf32> to vector<256x128xf32>
    %34 = arith.truncf %33 : vector<256x128xf32> to vector<256x128xbf16>
    %c1_31 = arith.constant 1 : index
    %c2_32 = arith.constant 2 : index
    %c0_33 = arith.constant 0 : index
    %35 = vector.load %arg14[%c1_31, %c2_32, %c0_33] : memref<18x18x128xf32, #tpu.memory_space<vmem>>, vector<16x16x128xf32>
    %36 = vector.shape_cast %35 : vector<16x16x128xf32> to vector<256x128xf32>
    %37 = arith.truncf %36 : vector<256x128xf32> to vector<256x128xbf16>
    %38 = tpu.concatenate %31, %34, %37 in 1 : vector<256x128xbf16>, vector<256x128xbf16>, vector<256x128xbf16> -> vector<256x384xbf16>
    %c1_34 = arith.constant 1 : index
    %c0_35 = arith.constant 0 : index
    %c0_36 = arith.constant 0 : index
    %39 = vector.load %arg3[%c1_34, %c0_35, %c0_36] : memref<3x384x128xbf16, #tpu.memory_space<vmem>>, vector<1x384x128xbf16>
    %40 = vector.shape_cast %39 : vector<1x384x128xbf16> to vector<384x128xbf16>
    %cst_37 = arith.constant dense<0.000000e+00> : vector<256x128xf32>
    %41 = tpu.matmul %38, %40, %cst_37 {dimension_numbers = #tpu.dot_dimension_numbers<[1], [0], [0], [1], [0, 0, 1, 1], [], []>} : vector<256x384xbf16>, vector<384x128xbf16>, vector<256x128xf32> -> vector<256x128xf32>
    %42 = arith.addf %28, %41 : vector<256x128xf32>
    %c2_38 = arith.constant 2 : index
    %c0_39 = arith.constant 0 : index
    %c0_40 = arith.constant 0 : index
    %43 = vector.load %arg14[%c2_38, %c0_39, %c0_40] : memref<18x18x128xf32, #tpu.memory_space<vmem>>, vector<16x16x128xf32>
    %44 = vector.shape_cast %43 : vector<16x16x128xf32> to vector<256x128xf32>
    %45 = arith.truncf %44 : vector<256x128xf32> to vector<256x128xbf16>
    %c2_41 = arith.constant 2 : index
    %c1_42 = arith.constant 1 : index
    %c0_43 = arith.constant 0 : index
    %46 = vector.load %arg14[%c2_41, %c1_42, %c0_43] : memref<18x18x128xf32, #tpu.memory_space<vmem>>, vector<16x16x128xf32>
    %47 = vector.shape_cast %46 : vector<16x16x128xf32> to vector<256x128xf32>
    %48 = arith.truncf %47 : vector<256x128xf32> to vector<256x128xbf16>
    %c2_44 = arith.constant 2 : index
    %c2_45 = arith.constant 2 : index
    %c0_46 = arith.constant 0 : index
    %49 = vector.load %arg14[%c2_44, %c2_45, %c0_46] : memref<18x18x128xf32, #tpu.memory_space<vmem>>, vector<16x16x128xf32>
    %50 = vector.shape_cast %49 : vector<16x16x128xf32> to vector<256x128xf32>
    %51 = arith.truncf %50 : vector<256x128xf32> to vector<256x128xbf16>
    %52 = tpu.concatenate %45, %48, %51 in 1 : vector<256x128xbf16>, vector<256x128xbf16>, vector<256x128xbf16> -> vector<256x384xbf16>
    %c2_47 = arith.constant 2 : index
    %c0_48 = arith.constant 0 : index
    %c0_49 = arith.constant 0 : index
    %53 = vector.load %arg3[%c2_47, %c0_48, %c0_49] : memref<3x384x128xbf16, #tpu.memory_space<vmem>>, vector<1x384x128xbf16>
    %54 = vector.shape_cast %53 : vector<1x384x128xbf16> to vector<384x128xbf16>
    %cst_50 = arith.constant dense<0.000000e+00> : vector<256x128xf32>
    %55 = tpu.matmul %52, %54, %cst_50 {dimension_numbers = #tpu.dot_dimension_numbers<[1], [0], [0], [1], [0, 0, 1, 1], [], []>} : vector<256x384xbf16>, vector<384x128xbf16>, vector<256x128xf32> -> vector<256x128xf32>
    %56 = arith.addf %42, %55 : vector<256x128xf32>
    %cst_51 = arith.constant 0.000000e+00 : f32
    %57 = vector.broadcast %cst_51 : f32 to vector<256x128xf32>
    %58 = arith.cmpf ogt, %56, %57 : vector<256x128xf32>
    %c0_52 = arith.constant 0 : index
    %c0_53 = arith.constant 0 : index
    %59 = vector.load %arg8[%c0_52, %c0_53] : memref<1x128xf32, #tpu.memory_space<vmem>>, vector<1x128xf32>
    %60 = vector.broadcast %59 : vector<1x128xf32> to vector<256x128xf32>
    %61 = arith.mulf %56, %60 : vector<256x128xf32>
    %62 = arith.select %58, %56, %61 : vector<256x128xi1>, vector<256x128xf32>
    %cst_54 = arith.constant 0.000000e+00 : f32
    %63 = vector.broadcast %cst_54 : f32 to vector<18x18x128xf32>
    %c0_55 = arith.constant 0 : index
    %c0_56 = arith.constant 0 : index
    %c0_57 = arith.constant 0 : index
    %64 = vector.load %arg15[%c0_55, %c0_56, %c0_57] : memref<18x18x128xf32, #tpu.memory_space<vmem>>, vector<18x18x128xf32>
    tpu.vector_store %arg15[%c0_55, %c0_56, %c0_57], %63 {strides = array<i32>} : memref<18x18x128xf32, #tpu.memory_space<vmem>>, vector<18x18x128xf32>,
    %65 = vector.shape_cast %62 : vector<256x128xf32> to vector<16x16x128xf32>
    %c1_58 = arith.constant 1 : index
    %c1_59 = arith.constant 1 : index
    %c0_60 = arith.constant 0 : index
    %66 = vector.load %arg15[%c1_58, %c1_59, %c0_60] : memref<18x18x128xf32, #tpu.memory_space<vmem>>, vector<16x16x128xf32>
    tpu.vector_store %arg15[%c1_58, %c1_59, %c0_60], %65 {strides = array<i32>} : memref<18x18x128xf32, #tpu.memory_space<vmem>>, vector<16x16x128xf32>,
    %cst_61 = arith.constant 0.000000e+00 : f32
    %67 = vector.broadcast %cst_61 : f32 to vector<64x128xf32>
    %c0_62 = arith.constant 0 : index
    %c0_63 = arith.constant 0 : index
    %c0_64 = arith.constant 0 : index
    %68 = tpu.strided_load %arg15[%c0_62, %c0_63, %c0_64] {strides = array<i32: 2, 2, 1>} : memref<18x18x128xf32, #tpu.memory_space<vmem>>, vector<8x8x128xf32>
    %69 = vector.shape_cast %68 : vector<8x8x128xf32> to vector<64x128xf32>
    %70 = arith.truncf %69 : vector<64x128xf32> to vector<64x128xbf16>
    %c0_65 = arith.constant 0 : index
    %c1_66 = arith.constant 1 : index
    %c0_67 = arith.constant 0 : index
    %71 = tpu.strided_load %arg15[%c0_65, %c1_66, %c0_67] {strides = array<i32: 2, 2, 1>} : memref<18x18x128xf32, #tpu.memory_space<vmem>>, vector<8x8x128xf32>
    %72 = vector.shape_cast %71 : vector<8x8x128xf32> to vector<64x128xf32>
    %73 = arith.truncf %72 : vector<64x128xf32> to vector<64x128xbf16>
    %c0_68 = arith.constant 0 : index
    %c2_69 = arith.constant 2 : index
    %c0_70 = arith.constant 0 : index
    %74 = tpu.strided_load %arg15[%c0_68, %c2_69, %c0_70] {strides = array<i32: 2, 2, 1>} : memref<18x18x128xf32, #tpu.memory_space<vmem>>, vector<8x8x128xf32>
    %75 = vector.shape_cast %74 : vector<8x8x128xf32> to vector<64x128xf32>
    %76 = arith.truncf %75 : vector<64x128xf32> to vector<64x128xbf16>
    %77 = tpu.concatenate %70, %73, %76 in 1 : vector<64x128xbf16>, vector<64x128xbf16>, vector<64x128xbf16> -> vector<64x384xbf16>
    %c0_71 = arith.constant 0 : index
    %c0_72 = arith.constant 0 : index
    %c0_73 = arith.constant 0 : index
    %78 = vector.load %arg4[%c0_71, %c0_72, %c0_73] : memref<3x384x128xbf16, #tpu.memory_space<vmem>>, vector<1x384x128xbf16>
    %79 = vector.shape_cast %78 : vector<1x384x128xbf16> to vector<384x128xbf16>
    %cst_74 = arith.constant dense<0.000000e+00> : vector<64x128xf32>
    %80 = tpu.matmul %77, %79, %cst_74 {dimension_numbers = #tpu.dot_dimension_numbers<[1], [0], [0], [1], [0, 0, 1, 1], [], []>} : vector<64x384xbf16>, vector<384x128xbf16>, vector<64x128xf32> -> vector<64x128xf32>
    %81 = arith.addf %67, %80 : vector<64x128xf32>
    %c1_75 = arith.constant 1 : index
    %c0_76 = arith.constant 0 : index
    %c0_77 = arith.constant 0 : index
    %82 = tpu.strided_load %arg15[%c1_75, %c0_76, %c0_77] {strides = array<i32: 2, 2, 1>} : memref<18x18x128xf32, #tpu.memory_space<vmem>>, vector<8x8x128xf32>
    %83 = vector.shape_cast %82 : vector<8x8x128xf32> to vector<64x128xf32>
    %84 = arith.truncf %83 : vector<64x128xf32> to vector<64x128xbf16>
    %c1_78 = arith.constant 1 : index
    %c1_79 = arith.constant 1 : index
    %c0_80 = arith.constant 0 : index
    %85 = tpu.strided_load %arg15[%c1_78, %c1_79, %c0_80] {strides = array<i32: 2, 2, 1>} : memref<18x18x128xf32, #tpu.memory_space<vmem>>, vector<8x8x128xf32>
    %86 = vector.shape_cast %85 : vector<8x8x128xf32> to vector<64x128xf32>
    %87 = arith.truncf %86 : vector<64x128xf32> to vector<64x128xbf16>
    %c1_81 = arith.constant 1 : index
    %c2_82 = arith.constant 2 : index
    %c0_83 = arith.constant 0 : index
    %88 = tpu.strided_load %arg15[%c1_81, %c2_82, %c0_83] {strides = array<i32: 2, 2, 1>} : memref<18x18x128xf32, #tpu.memory_space<vmem>>, vector<8x8x128xf32>
    %89 = vector.shape_cast %88 : vector<8x8x128xf32> to vector<64x128xf32>
    %90 = arith.truncf %89 : vector<64x128xf32> to vector<64x128xbf16>
    %91 = tpu.concatenate %84, %87, %90 in 1 : vector<64x128xbf16>, vector<64x128xbf16>, vector<64x128xbf16> -> vector<64x384xbf16>
    %c1_84 = arith.constant 1 : index
    %c0_85 = arith.constant 0 : index
    %c0_86 = arith.constant 0 : index
    %92 = vector.load %arg4[%c1_84, %c0_85, %c0_86] : memref<3x384x128xbf16, #tpu.memory_space<vmem>>, vector<1x384x128xbf16>
    %93 = vector.shape_cast %92 : vector<1x384x128xbf16> to vector<384x128xbf16>
    %cst_87 = arith.constant dense<0.000000e+00> : vector<64x128xf32>
    %94 = tpu.matmul %91, %93, %cst_87 {dimension_numbers = #tpu.dot_dimension_numbers<[1], [0], [0], [1], [0, 0, 1, 1], [], []>} : vector<64x384xbf16>, vector<384x128xbf16>, vector<64x128xf32> -> vector<64x128xf32>
    %95 = arith.addf %81, %94 : vector<64x128xf32>
    %c2_88 = arith.constant 2 : index
    %c0_89 = arith.constant 0 : index
    %c0_90 = arith.constant 0 : index
    %96 = tpu.strided_load %arg15[%c2_88, %c0_89, %c0_90] {strides = array<i32: 2, 2, 1>} : memref<18x18x128xf32, #tpu.memory_space<vmem>>, vector<8x8x128xf32>
    %97 = vector.shape_cast %96 : vector<8x8x128xf32> to vector<64x128xf32>
    %98 = arith.truncf %97 : vector<64x128xf32> to vector<64x128xbf16>
    %c2_91 = arith.constant 2 : index
    %c1_92 = arith.constant 1 : index
    %c0_93 = arith.constant 0 : index
    %99 = tpu.strided_load %arg15[%c2_91, %c1_92, %c0_93] {strides = array<i32: 2, 2, 1>} : memref<18x18x128xf32, #tpu.memory_space<vmem>>, vector<8x8x128xf32>
    %100 = vector.shape_cast %99 : vector<8x8x128xf32> to vector<64x128xf32>
    %101 = arith.truncf %100 : vector<64x128xf32> to vector<64x128xbf16>
    %c2_94 = arith.constant 2 : index
    %c2_95 = arith.constant 2 : index
    %c0_96 = arith.constant 0 : index
    %102 = tpu.strided_load %arg15[%c2_94, %c2_95, %c0_96] {strides = array<i32: 2, 2, 1>} : memref<18x18x128xf32, #tpu.memory_space<vmem>>, vector<8x8x128xf32>
    %103 = vector.shape_cast %102 : vector<8x8x128xf32> to vector<64x128xf32>
    %104 = arith.truncf %103 : vector<64x128xf32> to vector<64x128xbf16>
    %105 = tpu.concatenate %98, %101, %104 in 1 : vector<64x128xbf16>, vector<64x128xbf16>, vector<64x128xbf16> -> vector<64x384xbf16>
    %c2_97 = arith.constant 2 : index
    %c0_98 = arith.constant 0 : index
    %c0_99 = arith.constant 0 : index
    %106 = vector.load %arg4[%c2_97, %c0_98, %c0_99] : memref<3x384x128xbf16, #tpu.memory_space<vmem>>, vector<1x384x128xbf16>
    %107 = vector.shape_cast %106 : vector<1x384x128xbf16> to vector<384x128xbf16>
    %cst_100 = arith.constant dense<0.000000e+00> : vector<64x128xf32>
    %108 = tpu.matmul %105, %107, %cst_100 {dimension_numbers = #tpu.dot_dimension_numbers<[1], [0], [0], [1], [0, 0, 1, 1], [], []>} : vector<64x384xbf16>, vector<384x128xbf16>, vector<64x128xf32> -> vector<64x128xf32>
    %109 = arith.addf %95, %108 : vector<64x128xf32>
    %c0_101 = arith.constant 0 : index
    %c0_102 = arith.constant 0 : index
    %110 = vector.load %arg9[%c0_101, %c0_102] : memref<1x128xf32, #tpu.memory_space<vmem>>, vector<1x128xf32>
    %111 = vector.broadcast %110 : vector<1x128xf32> to vector<64x128xf32>
    %112 = arith.mulf %109, %111 : vector<64x128xf32>
    %c0_103 = arith.constant 0 : index
    %c0_104 = arith.constant 0 : index
    %113 = vector.load %arg10[%c0_103, %c0_104] : memref<1x128xf32, #tpu.memory_space<vmem>>, vector<1x128xf32>
    %114 = vector.broadcast %113 : vector<1x128xf32> to vector<64x128xf32>
    %115 = arith.addf %112, %114 : vector<64x128xf32>
    %c0_105 = arith.constant 0 : index
    %c0_106 = arith.constant 0 : index
    %c0_107 = arith.constant 0 : index
    %c0_108 = arith.constant 0 : index
    %116 = vector.load %arg2[%c0_105, %c0_106, %c0_107, %c0_108] : memref<1x8x8x128xbf16, #tpu.memory_space<vmem>>, vector<1x8x8x128xbf16>
    %117 = vector.shape_cast %116 : vector<1x8x8x128xbf16> to vector<8x8x128xbf16>
    %118 = vector.shape_cast %117 : vector<8x8x128xbf16> to vector<64x128xbf16>
    %c0_109 = arith.constant 0 : index
    %c0_110 = arith.constant 0 : index
    %119 = vector.load %arg5[%c0_109, %c0_110] : memref<128x128xbf16, #tpu.memory_space<vmem>>, vector<128x128xbf16>
    %cst_111 = arith.constant dense<0.000000e+00> : vector<64x128xf32>
    %120 = tpu.matmul %118, %119, %cst_111 {dimension_numbers = #tpu.dot_dimension_numbers<[1], [0], [0], [1], [0, 0, 1, 1], [], []>} : vector<64x128xbf16>, vector<128x128xbf16>, vector<64x128xf32> -> vector<64x128xf32>
    %c0_112 = arith.constant 0 : index
    %c0_113 = arith.constant 0 : index
    %121 = vector.load %arg11[%c0_112, %c0_113] : memref<1x128xf32, #tpu.memory_space<vmem>>, vector<1x128xf32>
    %122 = vector.broadcast %121 : vector<1x128xf32> to vector<64x128xf32>
    %123 = arith.mulf %120, %122 : vector<64x128xf32>
    %c0_114 = arith.constant 0 : index
    %c0_115 = arith.constant 0 : index
    %124 = vector.load %arg12[%c0_114, %c0_115] : memref<1x128xf32, #tpu.memory_space<vmem>>, vector<1x128xf32>
    %125 = vector.broadcast %124 : vector<1x128xf32> to vector<64x128xf32>
    %126 = arith.addf %123, %125 : vector<64x128xf32>
    %127 = arith.addf %115, %126 : vector<64x128xf32>
    %128 = vector.shape_cast %127 : vector<64x128xf32> to vector<8x8x128xf32>
    %c0_116 = arith.constant 0 : index
    %c0_117 = arith.constant 0 : index
    %c0_118 = arith.constant 0 : index
    %c0_119 = arith.constant 0 : index
    %129 = vector.load %arg13[%c0_116, %c0_117, %c0_118, %c0_119] : memref<1x8x8x128xf32, #tpu.memory_space<vmem>>, vector<1x8x8x128xf32>
    %130 = vector.shape_cast %129 : vector<1x8x8x128xf32> to vector<8x8x128xf32>
    %131 = vector.shape_cast %128 : vector<8x8x128xf32> to vector<1x8x8x128xf32>
    tpu.vector_store %arg13[%c0_116, %c0_117, %c0_118, %c0_119], %131 {strides = array<i32>} : memref<1x8x8x128xf32, #tpu.memory_space<vmem>>, vector<1x8x8x128xf32>,
    return
  }
  func.func @transform_0(%arg0: i32) -> (i32, i32, i32, i32) {
    %c0_i32 = arith.constant 0 : i32
    %c0_i32_0 = arith.constant 0 : i32
    %c0_i32_1 = arith.constant 0 : i32
    %c0_i32_2 = arith.constant 0 : i32
    return %arg0, %c0_i32, %c0_i32_0, %c0_i32_1 : i32, i32, i32, i32
  }
  func.func @transform_1(%arg0: i32) -> (i32, i32, i32, i32) {
    %c0_i32 = arith.constant 0 : i32
    %c0_i32_0 = arith.constant 0 : i32
    %c0_i32_1 = arith.constant 0 : i32
    %c0_i32_2 = arith.constant 0 : i32
    return %arg0, %c0_i32, %c0_i32_0, %c0_i32_1 : i32, i32, i32, i32
  }
  func.func @transform_2(%arg0: i32) -> (i32, i32, i32) {
    %c0_i32 = arith.constant 0 : i32
    %c0_i32_0 = arith.constant 0 : i32
    %c0_i32_1 = arith.constant 0 : i32
    %c0_i32_2 = arith.constant 0 : i32
    return %c0_i32, %c0_i32_0, %c0_i32_1 : i32, i32, i32
  }
  func.func @transform_3(%arg0: i32) -> (i32, i32, i32) {
    %c0_i32 = arith.constant 0 : i32
    %c0_i32_0 = arith.constant 0 : i32
    %c0_i32_1 = arith.constant 0 : i32
    %c0_i32_2 = arith.constant 0 : i32
    return %c0_i32, %c0_i32_0, %c0_i32_1 : i32, i32, i32
  }
  func.func @transform_4(%arg0: i32) -> (i32, i32) {
    %c0_i32 = arith.constant 0 : i32
    %c0_i32_0 = arith.constant 0 : i32
    %c0_i32_1 = arith.constant 0 : i32
    return %c0_i32, %c0_i32_0 : i32, i32
  }
  func.func @transform_5(%arg0: i32) -> (i32, i32) {
    %c0_i32 = arith.constant 0 : i32
    %c0_i32_0 = arith.constant 0 : i32
    %c0_i32_1 = arith.constant 0 : i32
    return %c0_i32, %c0_i32_0 : i32, i32
  }
  func.func @transform_6(%arg0: i32) -> (i32, i32) {
    %c0_i32 = arith.constant 0 : i32
    %c0_i32_0 = arith.constant 0 : i32
    %c0_i32_1 = arith.constant 0 : i32
    return %c0_i32, %c0_i32_0 : i32, i32
  }
  func.func @transform_7(%arg0: i32) -> (i32, i32) {
    %c0_i32 = arith.constant 0 : i32
    %c0_i32_0 = arith.constant 0 : i32
    %c0_i32_1 = arith.constant 0 : i32
    return %c0_i32, %c0_i32_0 : i32, i32
  }
  func.func @transform_8(%arg0: i32) -> (i32, i32) {
    %c0_i32 = arith.constant 0 : i32
    %c0_i32_0 = arith.constant 0 : i32
    %c0_i32_1 = arith.constant 0 : i32
    return %c0_i32, %c0_i32_0 : i32, i32
  }
  func.func @transform_9(%arg0: i32) -> (i32, i32) {
    %c0_i32 = arith.constant 0 : i32
    %c0_i32_0 = arith.constant 0 : i32
    %c0_i32_1 = arith.constant 0 : i32
    return %c0_i32, %c0_i32_0 : i32, i32
  }
  func.func @transform_10(%arg0: i32) -> (i32, i32) {
    %c0_i32 = arith.constant 0 : i32
    %c0_i32_0 = arith.constant 0 : i32
    %c0_i32_1 = arith.constant 0 : i32
    return %c0_i32, %c0_i32_0 : i32, i32
  }
  func.func @transform_11(%arg0: i32) -> (i32, i32) {
    %c0_i32 = arith.constant 0 : i32
    %c0_i32_0 = arith.constant 0 : i32
    %c0_i32_1 = arith.constant 0 : i32
    return %c0_i32, %c0_i32_0 : i32, i32
  }
  func.func @transform_12(%arg0: i32) -> (i32, i32, i32, i32) {
    %c0_i32 = arith.constant 0 : i32
    %c0_i32_0 = arith.constant 0 : i32
    %c0_i32_1 = arith.constant 0 : i32
    %c0_i32_2 = arith.constant 0 : i32
    return %arg0, %c0_i32, %c0_i32_0, %c0_i32_1 : i32, i32, i32, i32
  }
}

</mosaic_0001>

<llo_original>
// kernel: bottleneck_forward.1
$region0: #{bottleneck_forward.1}
  #allocation0 [shape = 'u32[]', space=smem, size = 0x4, offset = 0x4, fixed_abs, tag = 'smem constant byte address 0x4 - core index']
  #allocation1 [shape = 'u32[144,128]{1,0:T(1,128)}', space=vmem, size = 0x12000, scoped, tag = 'internal scratch']
  #allocation2 [shape = 'f32[18,18,128]{2,1,0:T(8,128)}', space=vmem, size = 0x36000, scoped, tag = 'scratch operand']
  #allocation3 [shape = 'f32[18,18,128]{2,1,0:T(8,128)}', space=vmem, size = 0x36000, scoped, tag = 'scratch operand']
  %s0 = inlined_call_operand.vmem [shape: bf16[2,16,16,128], index: 0, kind: input, shape index: {}]
  %s1 = inlined_call_operand.vmem [shape: bf16[2,8,8,128], index: 1, kind: input, shape index: {}]
  %s2 = inlined_call_operand.vmem [shape: bf16[3,384,128], index: 2, kind: input, shape index: {}]
  %s3 = inlined_call_operand.vmem [shape: bf16[3,384,128], index: 3, kind: input, shape index: {}]
  %s4 = inlined_call_operand.vmem [shape: bf16[128,128], index: 4, kind: input, shape index: {}]
  %s5 = inlined_call_operand.vmem [shape: f32[1,128], index: 5, kind: input, shape index: {}]
  %s6 = inlined_call_operand.vmem [shape: f32[1,128], index: 6, kind: input, shape index: {}]
  %s7 = inlined_call_operand.vmem [shape: f32[1,128], index: 7, kind: input, shape index: {}]
  %s8 = inlined_call_operand.vmem [shape: f32[1,128], index: 8, kind: input, shape index: {}]
  %s9 = inlined_call_operand.vmem [shape: f32[1,128], index: 9, kind: input, shape index: {}]
  %s10 = inlined_call_operand.vmem [shape: f32[1,128], index: 10, kind: input, shape index: {}]
  %s11 = inlined_call_operand.vmem [shape: f32[1,128], index: 11, kind: input, shape index: {}]
  %s12 = inlined_call_operand.vmem [shape: f32[2,8,8,128], index: 12, kind: output, shape index: {}]
  %s13 = sld [smem:[#allocation0]]
  $region81: #{bottleneck_forward.1} parent=0
    _
  %s15 = ssub.s32 1, %s13
  %s16 = scalar_select 0, %s15, %s13
  loop: start=0, step=1, limit=4
  $region2: #{bottleneck_forward.1} parent=0 // loop_pre_header
    _
  $region3: #{bottleneck_forward.1} parent=0 // loop_header
    %s18 = sphi 0, %s22
    %p19 = scmp.ge.s32.totalorder %s18, 4
    %s28 = sphi 0, %s30
    %s31 = sphi 0, %s28
    %s32 = sphi 0, %s31
    %s48 = sphi 0, %s32
    %s54 = sphi 0, %s56
    %s57 = sphi 0, %s54
    %s58 = sphi 0, %s57
    %s74 = sphi 0, %s58
    %s78 = sphi 0, %s78
    %s80 = sphi 0, %s78
    %s81 = sphi 0, %s80
    %s95 = sphi 0, %s81
    %s99 = sphi 0, %s99
    %s101 = sphi 0, %s99
    %s102 = sphi 0, %s101
    %s116 = sphi 0, %s102
    %s120 = sphi 0, %s120
    %s122 = sphi 0, %s120
    %s123 = sphi 0, %s122
    %s137 = sphi 0, %s123
    %s141 = sphi 0, %s141
    %s143 = sphi 0, %s141
    %s144 = sphi 0, %s143
    %s158 = sphi 0, %s144
    %s162 = sphi 0, %s162
    %s164 = sphi 0, %s162
    %s165 = sphi 0, %s164
    %s179 = sphi 0, %s165
    %s183 = sphi 0, %s183
    %s185 = sphi 0, %s183
    %s186 = sphi 0, %s185
    %s200 = sphi 0, %s186
    %s204 = sphi 0, %s204
    %s206 = sphi 0, %s204
    %s207 = sphi 0, %s206
    %s221 = sphi 0, %s207
    %s225 = sphi 0, %s225
    %s227 = sphi 0, %s225
    %s228 = sphi 0, %s227
    %s242 = sphi 0, %s228
    %s246 = sphi 0, %s246
    %s248 = sphi 0, %s246
    %s249 = sphi 0, %s248
    %s263 = sphi 0, %s249
    %s267 = sphi 0, %s267
    %s269 = sphi 0, %s267
    %s270 = sphi 0, %s269
    %s284 = sphi 0, %s270
    %s290 = sphi 0, %s292
    %s293 = sphi 0, %s290
    %s294 = sphi 0, %s293
    %s310 = sphi 0, %s294
  $region4: #{bottleneck_forward.1} parent=0 // loop_header_branch
    %21 = sbr.rel (%p19) target = $region8
  $region5: #{bottleneck_forward.1} parent=0 // loop_body
    %s23 = ssub.s32 %s18, 1
    %s24 = ssub.s32 %s18, 2
    %s25 = sadd.s32 %s18, 1
    %s26 = ssub.s32 %s18, %s25
    %p27 = scmp.eq.s32.totalorder %s26, 0
    %s29 = sadd.s32 %s28, 1
    %s30 = scalar_select %p27, %s28, %s29
    %p33 = pneg %p27
    %p34 = scmp.eq.s32.totalorder %s18, 1
    %p35 = por %p33, %p34
    %p36 = scmp.ne.s32.totalorder %s28, %s31
    %p37 = scmp.eq.s32.totalorder %s18, 0
    %p38 = por %p36, %p37
    %p39 = scmp.ne.s32.totalorder %s28, %s31
    %p40 = scmp.eq.s32.totalorder %s23, 1
    %p41 = por %p39, %p40
    %p42 = scmp.ne.s32.totalorder %s31, %s32
    %p43 = scmp.eq.s32.totalorder %s23, 0
    %p44 = por %p42, %p43
    %p45 = scmp.ne.s32.totalorder %s31, %s32
    %p46 = scmp.eq.s32.totalorder %s24, 1
    %p47 = por %p45, %p46
    %p49 = scmp.ne.s32.totalorder %s32, %s48
    %p50 = scmp.eq.s32.totalorder %s24, 0
    %p51 = por %p49, %p50
    %s52 = ssub.s32 %s18, %s25
    %p53 = scmp.eq.s32.totalorder %s52, 0
    %s55 = sadd.s32 %s54, 1
    %s56 = scalar_select %p53, %s54, %s55
    %p59 = pneg %p53
    %p60 = scmp.eq.s32.totalorder %s18, 1
    %p61 = por %p59, %p60
    %p62 = scmp.ne.s32.totalorder %s54, %s57
    %p63 = scmp.eq.s32.totalorder %s18, 0
    %p64 = por %p62, %p63
    %p65 = scmp.ne.s32.totalorder %s54, %s57
    %p66 = scmp.eq.s32.totalorder %s23, 1
    %p67 = por %p65, %p66
    %p68 = scmp.ne.s32.totalorder %s57, %s58
    %p69 = scmp.eq.s32.totalorder %s23, 0
    %p70 = por %p68, %p69
    %p71 = scmp.ne.s32.totalorder %s57, %s58
    %p72 = scmp.eq.s32.totalorder %s24, 1
    %p73 = por %p71, %p72
    %p75 = scmp.ne.s32.totalorder %s58, %s74
    %p76 = scmp.eq.s32.totalorder %s24, 0
    %p77 = por %p75, %p76
    %s79 = sadd.s32 %s78, 1
    %p82 = scmp.eq.s32.totalorder %s18, 1
    %p83 = scmp.ne.s32.totalorder %s78, %s80
    %p84 = scmp.eq.s32.totalorder %s18, 0
    %p85 = por %p83, %p84
    %p86 = scmp.ne.s32.totalorder %s78, %s80
    %p87 = scmp.eq.s32.totalorder %s23, 1
    %p88 = por %p86, %p87
    %p89 = scmp.ne.s32.totalorder %s80, %s81
    %p90 = scmp.eq.s32.totalorder %s23, 0
    %p91 = por %p89, %p90
    %p92 = scmp.ne.s32.totalorder %s80, %s81
    %p93 = scmp.eq.s32.totalorder %s24, 1
    %p94 = por %p92, %p93
    %p96 = scmp.ne.s32.totalorder %s81, %s95
    %p97 = scmp.eq.s32.totalorder %s24, 0
    %p98 = por %p96, %p97
    %s100 = sadd.s32 %s99, 1
    %p103 = scmp.eq.s32.totalorder %s18, 1
    %p104 = scmp.ne.s32.totalorder %s99, %s101
    %p105 = scmp.eq.s32.totalorder %s18, 0
    %p106 = por %p104, %p105
    %p107 = scmp.ne.s32.totalorder %s99, %s101
    %p108 = scmp.eq.s32.totalorder %s23, 1
    %p109 = por %p107, %p108
    %p110 = scmp.ne.s32.totalorder %s101, %s102
    %p111 = scmp.eq.s32.totalorder %s23, 0
    %p112 = por %p110, %p111
    %p113 = scmp.ne.s32.totalorder %s101, %s102
    %p114 = scmp.eq.s32.totalorder %s24, 1
    %p115 = por %p113, %p114
    %p117 = scmp.ne.s32.totalorder %s102, %s116
    %p118 = scmp.eq.s32.totalorder %s24, 0
    %p119 = por %p117, %p118
    %s121 = sadd.s32 %s120, 1
    %p124 = scmp.eq.s32.totalorder %s18, 1
    %p125 = scmp.ne.s32.totalorder %s120, %s122
    %p126 = scmp.eq.s32.totalorder %s18, 0
    %p127 = por %p125, %p126
    %p128 = scmp.ne.s32.totalorder %s120, %s122
    %p129 = scmp.eq.s32.totalorder %s23, 1
    %p130 = por %p128, %p129
    %p131 = scmp.ne.s32.totalorder %s122, %s123
    %p132 = scmp.eq.s32.totalorder %s23, 0
    %p133 = por %p131, %p132
    %p134 = scmp.ne.s32.totalorder %s122, %s123
    %p135 = scmp.eq.s32.totalorder %s24, 1
    %p136 = por %p134, %p135
    %p138 = scmp.ne.s32.totalorder %s123, %s137
    %p139 = scmp.eq.s32.totalorder %s24, 0
    %p140 = por %p138, %p139
    %s142 = sadd.s32 %s141, 1
    %p145 = scmp.eq.s32.totalorder %s18, 1
    %p146 = scmp.ne.s32.totalorder %s141, %s143
    %p147 = scmp.eq.s32.totalorder %s18, 0
    %p148 = por %p146, %p147
    %p149 = scmp.ne.s32.totalorder %s141, %s143
    %p150 = scmp.eq.s32.totalorder %s23, 1
    %p151 = por %p149, %p150
    %p152 = scmp.ne.s32.totalorder %s143, %s144
    %p153 = scmp.eq.s32.totalorder %s23, 0
    %p154 = por %p152, %p153
    %p155 = scmp.ne.s32.totalorder %s143, %s144
    %p156 = scmp.eq.s32.totalorder %s24, 1
    %p157 = por %p155, %p156
    %p159 = scmp.ne.s32.totalorder %s144, %s158
    %p160 = scmp.eq.s32.totalorder %s24, 0
    %p161 = por %p159, %p160
    %s163 = sadd.s32 %s162, 1
    %p166 = scmp.eq.s32.totalorder %s18, 1
    %p167 = scmp.ne.s32.totalorder %s162, %s164
    %p168 = scmp.eq.s32.totalorder %s18, 0
    %p169 = por %p167, %p168
    %p170 = scmp.ne.s32.totalorder %s162, %s164
    %p171 = scmp.eq.s32.totalorder %s23, 1
    %p172 = por %p170, %p171
    %p173 = scmp.ne.s32.totalorder %s164, %s165
    %p174 = scmp.eq.s32.totalorder %s23, 0
    %p175 = por %p173, %p174
    %p176 = scmp.ne.s32.totalorder %s164, %s165
    %p177 = scmp.eq.s32.totalorder %s24, 1
    %p178 = por %p176, %p177
    %p180 = scmp.ne.s32.totalorder %s165, %s179
    %p181 = scmp.eq.s32.totalorder %s24, 0
    %p182 = por %p180, %p181
    %s184 = sadd.s32 %s183, 1
    %p187 = scmp.eq.s32.totalorder %s18, 1
    %p188 = scmp.ne.s32.totalorder %s183, %s185
    %p189 = scmp.eq.s32.totalorder %s18, 0
    %p190 = por %p188, %p189
    %p191 = scmp.ne.s32.totalorder %s183, %s185
    %p192 = scmp.eq.s32.totalorder %s23, 1
    %p193 = por %p191, %p192
    %p194 = scmp.ne.s32.totalorder %s185, %s186
    %p195 = scmp.eq.s32.totalorder %s23, 0
    %p196 = por %p194, %p195
    %p197 = scmp.ne.s32.totalorder %s185, %s186
    %p198 = scmp.eq.s32.totalorder %s24, 1
    %p199 = por %p197, %p198
    %p201 = scmp.ne.s32.totalorder %s186, %s200
    %p202 = scmp.eq.s32.totalorder %s24, 0
    %p203 = por %p201, %p202
    %s205 = sadd.s32 %s204, 1
    %p208 = scmp.eq.s32.totalorder %s18, 1
    %p209 = scmp.ne.s32.totalorder %s204, %s206
    %p210 = scmp.eq.s32.totalorder %s18, 0
    %p211 = por %p209, %p210
    %p212 = scmp.ne.s32.totalorder %s204, %s206
    %p213 = scmp.eq.s32.totalorder %s23, 1
    %p214 = por %p212, %p213
    %p215 = scmp.ne.s32.totalorder %s206, %s207
    %p216 = scmp.eq.s32.totalorder %s23, 0
    %p217 = por %p215, %p216
    %p218 = scmp.ne.s32.totalorder %s206, %s207
    %p219 = scmp.eq.s32.totalorder %s24, 1
    %p220 = por %p218, %p219
    %p222 = scmp.ne.s32.totalorder %s207, %s221
    %p223 = scmp.eq.s32.totalorder %s24, 0
    %p224 = por %p222, %p223
    %s226 = sadd.s32 %s225, 1
    %p229 = scmp.eq.s32.totalorder %s18, 1
    %p230 = scmp.ne.s32.totalorder %s225, %s227
    %p231 = scmp.eq.s32.totalorder %s18, 0
    %p232 = por %p230, %p231
    %p233 = scmp.ne.s32.totalorder %s225, %s227
    %p234 = scmp.eq.s32.totalorder %s23, 1
    %p235 = por %p233, %p234
    %p236 = scmp.ne.s32.totalorder %s227, %s228
    %p237 = scmp.eq.s32.totalorder %s23, 0
    %p238 = por %p236, %p237
    %p239 = scmp.ne.s32.totalorder %s227, %s228
    %p240 = scmp.eq.s32.totalorder %s24, 1
    %p241 = por %p239, %p240
    %p243 = scmp.ne.s32.totalorder %s228, %s242
    %p244 = scmp.eq.s32.totalorder %s24, 0
    %p245 = por %p243, %p244
    %s247 = sadd.s32 %s246, 1
    %p250 = scmp.eq.s32.totalorder %s18, 1
    %p251 = scmp.ne.s32.totalorder %s246, %s248
    %p252 = scmp.eq.s32.totalorder %s18, 0
    %p253 = por %p251, %p252
    %p254 = scmp.ne.s32.totalorder %s246, %s248
    %p255 = scmp.eq.s32.totalorder %s23, 1
    %p256 = por %p254, %p255
    %p257 = scmp.ne.s32.totalorder %s248, %s249
    %p258 = scmp.eq.s32.totalorder %s23, 0
    %p259 = por %p257, %p258
    %p260 = scmp.ne.s32.totalorder %s248, %s249
    %p261 = scmp.eq.s32.totalorder %s24, 1
    %p262 = por %p260, %p261
    %p264 = scmp.ne.s32.totalorder %s249, %s263
    %p265 = scmp.eq.s32.totalorder %s24, 0
    %p266 = por %p264, %p265
    %s268 = sadd.s32 %s267, 1
    %p271 = scmp.eq.s32.totalorder %s18, 1
    %p272 = scmp.ne.s32.totalorder %s267, %s269
    %p273 = scmp.eq.s32.totalorder %s18, 0
    %p274 = por %p272, %p273
    %p275 = scmp.ne.s32.totalorder %s267, %s269
    %p276 = scmp.eq.s32.totalorder %s23, 1
    %p277 = por %p275, %p276
    %p278 = scmp.ne.s32.totalorder %s269, %s270
    %p279 = scmp.eq.s32.totalorder %s23, 0
    %p280 = por %p278, %p279
    %p281 = scmp.ne.s32.totalorder %s269, %s270
    %p282 = scmp.eq.s32.totalorder %s24, 1
    %p283 = por %p281, %p282
    %p285 = scmp.ne.s32.totalorder %s270, %s284
    %p286 = scmp.eq.s32.totalorder %s24, 0
    %p287 = por %p285, %p286
    %s288 = ssub.s32 %s18, %s25
    %p289 = scmp.eq.s32.totalorder %s288, 0
    %s291 = sadd.s32 %s290, 1
    %s292 = scalar_select %p289, %s290, %s291
    %p295 = pneg %p289
    %p296 = scmp.eq.s32.totalorder %s18, 1
    %p297 = por %p295, %p296
    %p298 = scmp.ne.s32.totalorder %s290, %s293
    %p299 = scmp.eq.s32.totalorder %s18, 0
    %p300 = por %p298, %p299
    %p301 = scmp.ne.s32.totalorder %s290, %s293
    %p302 = scmp.eq.s32.totalorder %s23, 1
    %p303 = por %p301, %p302
    %p304 = scmp.ne.s32.totalorder %s293, %s294
    %p305 = scmp.eq.s32.totalorder %s23, 0
    %p306 = por %p304, %p305
    %p307 = scmp.ne.s32.totalorder %s293, %s294
    %p308 = scmp.eq.s32.totalorder %s24, 1
    %p309 = por %p307, %p308
    %p311 = scmp.ne.s32.totalorder %s294, %s310
    %p312 = scmp.eq.s32.totalorder %s24, 0
    %p313 = por %p311, %p312
    %p314 = scmp.le.s32.totalorder 1, %s18
    %p315 = scmp.lt.s32.totalorder %s18, 3
    %p316 = pnand %p314, %p315
    %p317 = pneg %p316
    // Predicated region
    $region9: #{bottleneck_forward.1} parent=5 // pred_check
      _
    $region10: #{bottleneck_forward.1} parent=5 // pred_check_branch
      %319 = sbr.rel (%p316) target = $region12
    $region11: #{bottleneck_forward.1} parent=5 // pred_region
      %s320 = ssub.s32 %s18, 1
      // Predicated region
      $region13: #{bottleneck_forward.1} parent=11 // pred_check
        %p321 = pneg %p91
      $region14: #{bottleneck_forward.1} parent=11 // pred_check_branch
        %323 = sbr.rel (%p321) target = $region16
      $region15: #{bottleneck_forward.1} parent=11 // pred_region
        _
      $region16: #{bottleneck_forward.1} parent=11 // pred_fallthru
        _
      // Predicated region
      $region17: #{bottleneck_forward.1} parent=11 // pred_check
        %p324 = pneg %p112
      $region18: #{bottleneck_forward.1} parent=11 // pred_check_branch
        %326 = sbr.rel (%p324) target = $region20
      $region19: #{bottleneck_forward.1} parent=11 // pred_region
        _
      $region20: #{bottleneck_forward.1} parent=11 // pred_fallthru
        _
      // Predicated region
      $region21: #{bottleneck_forward.1} parent=11 // pred_check
        %p327 = pneg %p133
      $region22: #{bottleneck_forward.1} parent=11 // pred_check_branch
        %329 = sbr.rel (%p327) target = $region24
      $region23: #{bottleneck_forward.1} parent=11 // pred_region
        _
      $region24: #{bottleneck_forward.1} parent=11 // pred_fallthru
        _
      // Predicated region
      $region25: #{bottleneck_forward.1} parent=11 // pred_check
        %p330 = pneg %p154
      $region26: #{bottleneck_forward.1} parent=11 // pred_check_branch
        %332 = sbr.rel (%p330) target = $region28
      $region27: #{bottleneck_forward.1} parent=11 // pred_region
        _
      $region28: #{bottleneck_forward.1} parent=11 // pred_fallthru
        _
      // Predicated region
      $region29: #{bottleneck_forward.1} parent=11 // pred_check
        %p333 = pneg %p175
      $region30: #{bottleneck_forward.1} parent=11 // pred_check_branch
        %335 = sbr.rel (%p333) target = $region32
      $region31: #{bottleneck_forward.1} parent=11 // pred_region
        _
      $region32: #{bottleneck_forward.1} parent=11 // pred_fallthru
        _
      // Predicated region
      $region33: #{bottleneck_forward.1} parent=11 // pred_check
        %p336 = pneg %p196
      $region34: #{bottleneck_forward.1} parent=11 // pred_check_branch
        %338 = sbr.rel (%p336) target = $region36
      $region35: #{bottleneck_forward.1} parent=11 // pred_region
        _
      $region36: #{bottleneck_forward.1} parent=11 // pred_fallthru
        _
      // Predicated region
      $region37: #{bottleneck_forward.1} parent=11 // pred_check
        %p339 = pneg %p217
      $region38: #{bottleneck_forward.1} parent=11 // pred_check_branch
        %341 = sbr.rel (%p339) target = $region40
      $region39: #{bottleneck_forward.1} parent=11 // pred_region
        _
      $region40: #{bottleneck_forward.1} parent=11 // pred_fallthru
        _
      // Predicated region
      $region41: #{bottleneck_forward.1} parent=11 // pred_check
        %p342 = pneg %p238
      $region42: #{bottleneck_forward.1} parent=11 // pred_check_branch
        %344 = sbr.rel (%p342) target = $region44
      $region43: #{bottleneck_forward.1} parent=11 // pred_region
        _
      $region44: #{bottleneck_forward.1} parent=11 // pred_fallthru
        _
      // Predicated region
      $region45: #{bottleneck_forward.1} parent=11 // pred_check
        %p345 = pneg %p259
      $region46: #{bottleneck_forward.1} parent=11 // pred_check_branch
        %347 = sbr.rel (%p345) target = $region48
      $region47: #{bottleneck_forward.1} parent=11 // pred_region
        _
      $region48: #{bottleneck_forward.1} parent=11 // pred_fallthru
        _
      // Predicated region
      $region49: #{bottleneck_forward.1} parent=11 // pred_check
        %p348 = pneg %p280
      $region50: #{bottleneck_forward.1} parent=11 // pred_check_branch
        %350 = sbr.rel (%p348) target = $region52
      $region51: #{bottleneck_forward.1} parent=11 // pred_region
        _
      $region52: #{bottleneck_forward.1} parent=11 // pred_fallthru
        _
    $region12: #{bottleneck_forward.1} parent=5 // pred_fallthru
      _
    %p351 = scmp.lt.s32.totalorder %s18, 2
    // Predicated region
    $region53: #{bottleneck_forward.1} parent=5 // pred_check
      %p352 = pneg %p351
    $region54: #{bottleneck_forward.1} parent=5 // pred_check_branch
      %354 = sbr.rel (%p352) target = $region56
    $region55: #{bottleneck_forward.1} parent=5 // pred_region
      // Predicated region
      $region57: #{bottleneck_forward.1} parent=55 // pred_check
        %p355 = pneg %p38
      $region58: #{bottleneck_forward.1} parent=55 // pred_check_branch
        %357 = sbr.rel (%p355) target = $region60
      $region59: #{bottleneck_forward.1} parent=55 // pred_region
        %p358 = scmp.lt.s32.totalorder %s18, 1
        %s359 = scalar_select %p358, %s18, 1
        %s360 = smul.addr %s359, 32
        %s361 = smul.addr %s360, 4
        %s362 = scalar_lea.vmem %s0, %s361
      $region60: #{bottleneck_forward.1} parent=55 // pred_fallthru
        _
      // Predicated region
      $region61: #{bottleneck_forward.1} parent=55 // pred_check
        %p363 = pneg %p64
      $region62: #{bottleneck_forward.1} parent=55 // pred_check_branch
        %365 = sbr.rel (%p363) target = $region64
      $region63: #{bottleneck_forward.1} parent=55 // pred_region
        %p366 = scmp.lt.s32.totalorder %s18, 1
        %s367 = scalar_select %p366, %s18, 1
        %s368 = smul.addr %s367, 8
        %s369 = smul.addr %s368, 4
        %s370 = scalar_lea.vmem %s1, %s369
      $region64: #{bottleneck_forward.1} parent=55 // pred_fallthru
        _
    $region56: #{bottleneck_forward.1} parent=5 // pred_fallthru
      _
    %p371 = scmp.le.s32.totalorder 1, %s18
    %p372 = scmp.lt.s32.totalorder %s18, 3
    %p373 = pnand %p371, %p372
    %p374 = pneg %p373
    // Predicated region
    $region65: #{bottleneck_forward.1} parent=5 // pred_check
      _
    $region66: #{bottleneck_forward.1} parent=5 // pred_check_branch
      %376 = sbr.rel (%p373) target = $region68
    $region67: #{bottleneck_forward.1} parent=5 // pred_region
      %s377 = ssub.s32 %s18, 1
      %p378 = scmp.lt.s32.totalorder %s23, 1
      %s379 = scalar_select %p378, %s23, 1
      %s380 = smul.addr %s379, 32
      %s381 = smul.addr %s380, 4
      %s382 = scalar_lea.vmem %s0, %s381
      %p383 = pneg %p44
      %p384 = pneg %p41
      %p385 = scmp.lt.s32.totalorder %s23, 1
      %s386 = scalar_select %p385, %s23, 1
      %s387 = smul.addr %s386, 8
      %s388 = smul.addr %s387, 4
      %s389 = scalar_lea.vmem %s1, %s388
      %p390 = pneg %p70
      %p391 = pneg %p67
      %p392 = pneg %p91
      %p393 = pneg %p88
      %p394 = pneg %p112
      %p395 = pneg %p109
      %p396 = pneg %p133
      %p397 = pneg %p130
      %p398 = pneg %p154
      %p399 = pneg %p151
      %p400 = pneg %p175
      %p401 = pneg %p172
      %p402 = pneg %p196
      %p403 = pneg %p193
      %p404 = pneg %p217
      %p405 = pneg %p214
      %p406 = pneg %p238
      %p407 = pneg %p235
      %p408 = pneg %p259
      %p409 = pneg %p256
      %p410 = pneg %p280
      %p411 = pneg %p277
      %p412 = pneg %p306
      %p413 = pneg %p303
      %p414 = scmp.lt.s32.totalorder %s23, 1
      %s415 = scalar_select %p414, %s23, 1
      %s416 = smul.addr %s415, 8
      %s417 = smul.addr %s416, 8
      %s418 = scalar_lea.vmem %s12, %s417
      %p419 = scmp.lt.s32.totalorder %s23, 1
      %s420 = scalar_select %p419, %s23, 1
      %s421 = smul.addr %s420, 32
      %s422 = smul.addr %s421, 4
      %s423 = scalar_lea.vmem %s0, %s422
      %p424 = scmp.lt.s32.totalorder %s23, 1
      %s425 = scalar_select %p424, %s23, 1
      %s426 = smul.addr %s425, 8
      %s427 = smul.addr %s426, 4
      %s428 = scalar_lea.vmem %s1, %s427
      %p429 = scmp.lt.s32.totalorder %s23, 1
      %s430 = scalar_select %p429, %s23, 1
      %s431 = smul.addr %s430, 8
      %s432 = smul.addr %s431, 8
      %s433 = scalar_lea.vmem %s12, %s432
      %v435 = vld [vmem:[%s423] sm:$0xf]
      %v436 = vld [vmem:[%s423 + $0x4] sm:$0xf]
      %v437 = vld [vmem:[%s423 + $0x8] sm:$0xf]
      %v438 = vld [vmem:[%s423 + $0xc] sm:$0xf]
      %v439 = vld [vmem:[%s423 + $0x10] sm:$0xf]
      %v440 = vld [vmem:[%s423 + $0x14] sm:$0xf]
      %v441 = vld [vmem:[%s423 + $0x18] sm:$0xf]
      %v442 = vld [vmem:[%s423 + $0x1c] sm:$0xf]
      %v443 = vld [vmem:[%s423 + $0x20] sm:$0xf]
      %v444 = vld [vmem:[%s423 + $0x24] sm:$0xf]
      %v445 = vld [vmem:[%s423 + $0x28] sm:$0xf]
      %v446 = vld [vmem:[%s423 + $0x2c] sm:$0xf]
      %v447 = vld [vmem:[%s423 + $0x30] sm:$0xf]
      %v448 = vld [vmem:[%s423 + $0x34] sm:$0xf]
      %v449 = vld [vmem:[%s423 + $0x38] sm:$0xf]
      %v450 = vld [vmem:[%s423 + $0x3c] sm:$0xf]
      %v451 = vld [vmem:[%s423 + $0x40] sm:$0xf]
      %v452 = vld [vmem:[%s423 + $0x44] sm:$0xf]
      %v453 = vld [vmem:[%s423 + $0x48] sm:$0xf]
      %v454 = vld [vmem:[%s423 + $0x4c] sm:$0xf]
      %v455 = vld [vmem:[%s423 + $0x50] sm:$0xf]
      %v456 = vld [vmem:[%s423 + $0x54] sm:$0xf]
      %v457 = vld [vmem:[%s423 + $0x58] sm:$0xf]
      %v458 = vld [vmem:[%s423 + $0x5c] sm:$0xf]
      %v459 = vld [vmem:[%s423 + $0x60] sm:$0xf]
      %v460 = vld [vmem:[%s423 + $0x64] sm:$0xf]
      %v461 = vld [vmem:[%s423 + $0x68] sm:$0xf]
      %v462 = vld [vmem:[%s423 + $0x6c] sm:$0xf]
      %v463 = vld [vmem:[%s423 + $0x70] sm:$0xf]
      %v464 = vld [vmem:[%s423 + $0x74] sm:$0xf]
      %v465 = vld [vmem:[%s423 + $0x78] sm:$0xf]
      %v466 = vld [vmem:[%s423 + $0x7c] sm:$0xf]
      %v467 = vunpack.c.l.bf16 %v435
      %v468 = vunpack.c.l.bf16 %v436
      %v469 = vunpack.c.l.bf16 %v437
      %v470 = vunpack.c.l.bf16 %v438
      %v471 = vunpack.c.l.bf16 %v439
      %v472 = vunpack.c.l.bf16 %v440
      %v473 = vunpack.c.l.bf16 %v441
      %v474 = vunpack.c.l.bf16 %v442
      %v475 = vunpack.c.l.bf16 %v443
      %v476 = vunpack.c.l.bf16 %v444
      %v477 = vunpack.c.l.bf16 %v445
      %v478 = vunpack.c.l.bf16 %v446
      %v479 = vunpack.c.l.bf16 %v447
      %v480 = vunpack.c.l.bf16 %v448
      %v481 = vunpack.c.l.bf16 %v449
      %v482 = vunpack.c.l.bf16 %v450
      %v483 = vunpack.c.l.bf16 %v451
      %v484 = vunpack.c.l.bf16 %v452
      %v485 = vunpack.c.l.bf16 %v453
      %v486 = vunpack.c.l.bf16 %v454
      %v487 = vunpack.c.l.bf16 %v455
      %v488 = vunpack.c.l.bf16 %v456
      %v489 = vunpack.c.l.bf16 %v457
      %v490 = vunpack.c.l.bf16 %v458
      %v491 = vunpack.c.l.bf16 %v459
      %v492 = vunpack.c.l.bf16 %v460
      %v493 = vunpack.c.l.bf16 %v461
      %v494 = vunpack.c.l.bf16 %v462
      %v495 = vunpack.c.l.bf16 %v463
      %v496 = vunpack.c.l.bf16 %v464
      %v497 = vunpack.c.l.bf16 %v465
      %v498 = vunpack.c.l.bf16 %v466
      %v499 = vld [vmem:[%s5] sm:$0x1]
      %v501 = vlaneseq
      %v502 = vshrl.u32 %v501, 7
      %v503 = vsub.s32 0, %v502
      %v504 = vrot.slane %v499, %v503
      %v506 = vmul.f32 %v467, %v504
      %v507 = vmul.f32 %v468, %v504
      %v508 = vmul.f32 %v469, %v504
      %v509 = vmul.f32 %v470, %v504
      %v510 = vmul.f32 %v471, %v504
      %v511 = vmul.f32 %v472, %v504
      %v512 = vmul.f32 %v473, %v504
      %v513 = vmul.f32 %v474, %v504
      %v514 = vmul.f32 %v475, %v504
      %v515 = vmul.f32 %v476, %v504
      %v516 = vmul.f32 %v477, %v504
      %v517 = vmul.f32 %v478, %v504
      %v518 = vmul.f32 %v479, %v504
      %v519 = vmul.f32 %v480, %v504
      %v520 = vmul.f32 %v481, %v504
      %v521 = vmul.f32 %v482, %v504
      %v522 = vmul.f32 %v483, %v504
      %v523 = vmul.f32 %v484, %v504
      %v524 = vmul.f32 %v485, %v504
      %v525 = vmul.f32 %v486, %v504
      %v526 = vmul.f32 %v487, %v504
      %v527 = vmul.f32 %v488, %v504
      %v528 = vmul.f32 %v489, %v504
      %v529 = vmul.f32 %v490, %v504
      %v530 = vmul.f32 %v491, %v504
      %v531 = vmul.f32 %v492, %v504
      %v532 = vmul.f32 %v493, %v504
      %v533 = vmul.f32 %v494, %v504
      %v534 = vmul.f32 %v495, %v504
      %v535 = vmul.f32 %v496, %v504
      %v536 = vmul.f32 %v497, %v504
      %v537 = vmul.f32 %v498, %v504
      %v538 = vld [vmem:[%s6] sm:$0x1]
      %v540 = vlaneseq
      %v541 = vshrl.u32 %v540, 7
      %v542 = vsub.s32 0, %v541
      %v543 = vrot.slane %v538, %v542
      %v545 = vadd.f32 %v506, %v543
      %v546 = vadd.f32 %v507, %v543
      %v547 = vadd.f32 %v508, %v543
      %v548 = vadd.f32 %v509, %v543
      %v549 = vadd.f32 %v510, %v543
      %v550 = vadd.f32 %v511, %v543
      %v551 = vadd.f32 %v512, %v543
      %v552 = vadd.f32 %v513, %v543
      %v553 = vadd.f32 %v514, %v543
      %v554 = vadd.f32 %v515, %v543
      %v555 = vadd.f32 %v516, %v543
      %v556 = vadd.f32 %v517, %v543
      %v557 = vadd.f32 %v518, %v543
      %v558 = vadd.f32 %v519, %v543
      %v559 = vadd.f32 %v520, %v543
      %v560 = vadd.f32 %v521, %v543
      %v561 = vadd.f32 %v522, %v543
      %v562 = vadd.f32 %v523, %v543
      %v563 = vadd.f32 %v524, %v543
      %v564 = vadd.f32 %v525, %v543
      %v565 = vadd.f32 %v526, %v543
      %v566 = vadd.f32 %v527, %v543
      %v567 = vadd.f32 %v528, %v543
      %v568 = vadd.f32 %v529, %v543
      %v569 = vadd.f32 %v530, %v543
      %v570 = vadd.f32 %v531, %v543
      %v571 = vadd.f32 %v532, %v543
      %v572 = vadd.f32 %v533, %v543
      %v573 = vadd.f32 %v534, %v543
      %v574 = vadd.f32 %v535, %v543
      %v575 = vadd.f32 %v536, %v543
      %v576 = vadd.f32 %v537, %v543
      %577 = vst [vmem:[#allocation2] sm:$0xff] 0.0
      %578 = vst [vmem:[#allocation2 + $0x8] sm:$0xff] 0.0
      %579 = vst [vmem:[#allocation2 + $0x10] sm:$0x3] 0.0
      %580 = vst [vmem:[#allocation2 + $0x18] sm:$0xff] 0.0
      %581 = vst [vmem:[#allocation2 + $0x20] sm:$0xff] 0.0
      %582 = vst [vmem:[#allocation2 + $0x28] sm:$0x3] 0.0
      %583 = vst [vmem:[#allocation2 + $0x30] sm:$0xff] 0.0
      %584 = vst [vmem:[#allocation2 + $0x38] sm:$0xff] 0.0
      %585 = vst [vmem:[#allocation2 + $0x40] sm:$0x3] 0.0
      %586 = vst [vmem:[#allocation2 + $0x48] sm:$0xff] 0.0
      %587 = vst [vmem:[#allocation2 + $0x50] sm:$0xff] 0.0
      %588 = vst [vmem:[#allocation2 + $0x58] sm:$0x3] 0.0
      %589 = vst [vmem:[#allocation2 + $0x60] sm:$0xff] 0.0
      %590 = vst [vmem:[#allocation2 + $0x68] sm:$0xff] 0.0
      %591 = vst [vmem:[#allocation2 + $0x70] sm:$0x3] 0.0
      %592 = vst [vmem:[#allocation2 + $0x78] sm:$0xff] 0.0
      %593 = vst [vmem:[#allocation2 + $0x80] sm:$0xff] 0.0
      %594 = vst [vmem:[#allocation2 + $0x88] sm:$0x3] 0.0
      %595 = vst [vmem:[#allocation2 + $0x90] sm:$0xff] 0.0
      %596 = vst [vmem:[#allocation2 + $0x98] sm:$0xff] 0.0
      %597 = vst [vmem:[#allocation2 + $0xa0] sm:$0x3] 0.0
      %598 = vst [vmem:[#allocation2 + $0xa8] sm:$0xff] 0.0
      %599 = vst [vmem:[#allocation2 + $0xb0] sm:$0xff] 0.0
      %600 = vst [vmem:[#allocation2 + $0xb8] sm:$0x3] 0.0
      %601 = vst [vmem:[#allocation2 + $0xc0] sm:$0xff] 0.0
      %602 = vst [vmem:[#allocation2 + $0xc8] sm:$0xff] 0.0
      %603 = vst [vmem:[#allocation2 + $0xd0] sm:$0x3] 0.0
      %604 = vst [vmem:[#allocation2 + $0xd8] sm:$0xff] 0.0
      %605 = vst [vmem:[#allocation2 + $0xe0] sm:$0xff] 0.0
      %606 = vst [vmem:[#allocation2 + $0xe8] sm:$0x3] 0.0
      %607 = vst [vmem:[#allocation2 + $0xf0] sm:$0xff] 0.0
      %608 = vst [vmem:[#allocation2 + $0xf8] sm:$0xff] 0.0
      %609 = vst [vmem:[#allocation2 + $0x100] sm:$0x3] 0.0
      %610 = vst [vmem:[#allocation2 + $0x108] sm:$0xff] 0.0
      %611 = vst [vmem:[#allocation2 + $0x110] sm:$0xff] 0.0
      %612 = vst [vmem:[#allocation2 + $0x118] sm:$0x3] 0.0
      %613 = vst [vmem:[#allocation2 + $0x120] sm:$0xff] 0.0
      %614 = vst [vmem:[#allocation2 + $0x128] sm:$0xff] 0.0
      %615 = vst [vmem:[#allocation2 + $0x130] sm:$0x3] 0.0
      %616 = vst [vmem:[#allocation2 + $0x138] sm:$0xff] 0.0
      %617 = vst [vmem:[#allocation2 + $0x140] sm:$0xff] 0.0
      %618 = vst [vmem:[#allocation2 + $0x148] sm:$0x3] 0.0
      %619 = vst [vmem:[#allocation2 + $0x150] sm:$0xff] 0.0
      %620 = vst [vmem:[#allocation2 + $0x158] sm:$0xff] 0.0
      %621 = vst [vmem:[#allocation2 + $0x160] sm:$0x3] 0.0
      %622 = vst [vmem:[#allocation2 + $0x168] sm:$0xff] 0.0
      %623 = vst [vmem:[#allocation2 + $0x170] sm:$0xff] 0.0
      %624 = vst [vmem:[#allocation2 + $0x178] sm:$0x3] 0.0
      %625 = vst [vmem:[#allocation2 + $0x180] sm:$0xff] 0.0
      %626 = vst [vmem:[#allocation2 + $0x188] sm:$0xff] 0.0
      %627 = vst [vmem:[#allocation2 + $0x190] sm:$0x3] 0.0
      %628 = vst [vmem:[#allocation2 + $0x198] sm:$0xff] 0.0
      %629 = vst [vmem:[#allocation2 + $0x1a0] sm:$0xff] 0.0
      %630 = vst [vmem:[#allocation2 + $0x1a8] sm:$0x3] 0.0
      %s631 = scalar_lea.vmem [#allocation2], 24
      %632 = vst [vmem:[%s631 + $0x1] sm:$0xff] %v545
      %633 = vst [vmem:[%s631 + $0x9] sm:$0xff] %v546
      %634 = vst [vmem:[%s631 + $0x19] sm:$0xff] %v547
      %635 = vst [vmem:[%s631 + $0x21] sm:$0xff] %v548
      %636 = vst [vmem:[%s631 + $0x31] sm:$0xff] %v549
      %637 = vst [vmem:[%s631 + $0x39] sm:$0xff] %v550
      %638 = vst [vmem:[%s631 + $0x49] sm:$0xff] %v551
      %639 = vst [vmem:[%s631 + $0x51] sm:$0xff] %v552
      %640 = vst [vmem:[%s631 + $0x61] sm:$0xff] %v553
      %641 = vst [vmem:[%s631 + $0x69] sm:$0xff] %v554
      %642 = vst [vmem:[%s631 + $0x79] sm:$0xff] %v555
      %643 = vst [vmem:[%s631 + $0x81] sm:$0xff] %v556
      %644 = vst [vmem:[%s631 + $0x91] sm:$0xff] %v557
      %645 = vst [vmem:[%s631 + $0x99] sm:$0xff] %v558
      %646 = vst [vmem:[%s631 + $0xa9] sm:$0xff] %v559
      %647 = vst [vmem:[%s631 + $0xb1] sm:$0xff] %v560
      %648 = vst [vmem:[%s631 + $0xc1] sm:$0xff] %v561
      %649 = vst [vmem:[%s631 + $0xc9] sm:$0xff] %v562
      %650 = vst [vmem:[%s631 + $0xd9] sm:$0xff] %v563
      %651 = vst [vmem:[%s631 + $0xe1] sm:$0xff] %v564
      %652 = vst [vmem:[%s631 + $0xf1] sm:$0xff] %v565
      %653 = vst [vmem:[%s631 + $0xf9] sm:$0xff] %v566
      %654 = vst [vmem:[%s631 + $0x109] sm:$0xff] %v567
      %655 = vst [vmem:[%s631 + $0x111] sm:$0xff] %v568
      %656 = vst [vmem:[%s631 + $0x121] sm:$0xff] %v569
      %657 = vst [vmem:[%s631 + $0x129] sm:$0xff] %v570
      %658 = vst [vmem:[%s631 + $0x139] sm:$0xff] %v571
      %659 = vst [vmem:[%s631 + $0x141] sm:$0xff] %v572
      %660 = vst [vmem:[%s631 + $0x151] sm:$0xff] %v573
      %661 = vst [vmem:[%s631 + $0x159] sm:$0xff] %v574
      %662 = vst [vmem:[%s631 + $0x169] sm:$0xff] %v575
      %663 = vst [vmem:[%s631 + $0x171] sm:$0xff] %v576
      %v664 = vld [vmem:[#allocation2] sm:$0xff]
      %v665 = vld [vmem:[#allocation2 + $0x8] sm:$0xff]
      %v666 = vld [vmem:[#allocation2 + $0x18] sm:$0xff]
      %v667 = vld [vmem:[#allocation2 + $0x20] sm:$0xff]
      %v668 = vld [vmem:[#allocation2 + $0x30] sm:$0xff]
      %v669 = vld [vmem:[#allocation2 + $0x38] sm:$0xff]
      %v670 = vld [vmem:[#allocation2 + $0x48] sm:$0xff]
      %v671 = vld [vmem:[#allocation2 + $0x50] sm:$0xff]
      %v672 = vld [vmem:[#allocation2 + $0x60] sm:$0xff]
      %v673 = vld [vmem:[#allocation2 + $0x68] sm:$0xff]
      %v674 = vld [vmem:[#allocation2 + $0x78] sm:$0xff]
      %v675 = vld [vmem:[#allocation2 + $0x80] sm:$0xff]
      %v676 = vld [vmem:[#allocation2 + $0x90] sm:$0xff]
      %v677 = vld [vmem:[#allocation2 + $0x98] sm:$0xff]
      %v678 = vld [vmem:[#allocation2 + $0xa8] sm:$0xff]
      %v679 = vld [vmem:[#allocation2 + $0xb0] sm:$0xff]
      %v680 = vld [vmem:[#allocation2 + $0xc0] sm:$0xff]
      %v681 = vld [vmem:[#allocation2 + $0xc8] sm:$0xff]
      %v682 = vld [vmem:[#allocation2 + $0xd8] sm:$0xff]
      %v683 = vld [vmem:[#allocation2 + $0xe0] sm:$0xff]
      %v684 = vld [vmem:[#allocation2 + $0xf0] sm:$0xff]
      %v685 = vld [vmem:[#allocation2 + $0xf8] sm:$0xff]
      %v686 = vld [vmem:[#allocation2 + $0x108] sm:$0xff]
      %v687 = vld [vmem:[#allocation2 + $0x110] sm:$0xff]
      %v688 = vld [vmem:[#allocation2 + $0x120] sm:$0xff]
      %v689 = vld [vmem:[#allocation2 + $0x128] sm:$0xff]
      %v690 = vld [vmem:[#allocation2 + $0x138] sm:$0xff]
      %v691 = vld [vmem:[#allocation2 + $0x140] sm:$0xff]
      %v692 = vld [vmem:[#allocation2 + $0x150] sm:$0xff]
      %v693 = vld [vmem:[#allocation2 + $0x158] sm:$0xff]
      %v694 = vld [vmem:[#allocation2 + $0x168] sm:$0xff]
      %v695 = vld [vmem:[#allocation2 + $0x170] sm:$0xff]
      %v696 = vpack.c.bf16 %v665, %v664
      %v697 = vpack.c.bf16 %v667, %v666
      %v698 = vpack.c.bf16 %v669, %v668
      %v699 = vpack.c.bf16 %v671, %v670
      %v700 = vpack.c.bf16 %v673, %v672
      %v701 = vpack.c.bf16 %v675, %v674
      %v702 = vpack.c.bf16 %v677, %v676
      %v703 = vpack.c.bf16 %v679, %v678
      %v704 = vpack.c.bf16 %v681, %v680
      %v705 = vpack.c.bf16 %v683, %v682
      %v706 = vpack.c.bf16 %v685, %v684
      %v707 = vpack.c.bf16 %v687, %v686
      %v708 = vpack.c.bf16 %v689, %v688
      %v709 = vpack.c.bf16 %v691, %v690
      %v710 = vpack.c.bf16 %v693, %v692
      %v711 = vpack.c.bf16 %v695, %v694
      %v712 = vld [vmem:[#allocation2 + $0x1] sm:$0xff]
      %v713 = vld [vmem:[#allocation2 + $0x9] sm:$0xff]
      %v714 = vld [vmem:[#allocation2 + $0x19] sm:$0xff]
      %v715 = vld [vmem:[#allocation2 + $0x21] sm:$0xff]
      %v716 = vld [vmem:[#allocation2 + $0x31] sm:$0xff]
      %v717 = vld [vmem:[#allocation2 + $0x39] sm:$0xff]
      %v718 = vld [vmem:[#allocation2 + $0x49] sm:$0xff]
      %v719 = vld [vmem:[#allocation2 + $0x51] sm:$0xff]
      %v720 = vld [vmem:[#allocation2 + $0x61] sm:$0xff]
      %v721 = vld [vmem:[#allocation2 + $0x69] sm:$0xff]
      %v722 = vld [vmem:[#allocation2 + $0x79] sm:$0xff]
      %v723 = vld [vmem:[#allocation2 + $0x81] sm:$0xff]
      %v724 = vld [vmem:[#allocation2 + $0x91] sm:$0xff]
      %v725 = vld [vmem:[#allocation2 + $0x99] sm:$0xff]
      %v726 = vld [vmem:[#allocation2 + $0xa9] sm:$0xff]
      %v727 = vld [vmem:[#allocation2 + $0xb1] sm:$0xff]
      %v728 = vld [vmem:[#allocation2 + $0xc1] sm:$0xff]
      %v729 = vld [vmem:[#allocation2 + $0xc9] sm:$0xff]
      %v730 = vld [vmem:[#allocation2 + $0xd9] sm:$0xff]
      %v731 = vld [vmem:[#allocation2 + $0xe1] sm:$0xff]
      %v732 = vld [vmem:[#allocation2 + $0xf1] sm:$0xff]
      %v733 = vld [vmem:[#allocation2 + $0xf9] sm:$0xff]
      %v734 = vld [vmem:[#allocation2 + $0x109] sm:$0xff]
      %v735 = vld [vmem:[#allocation2 + $0x111] sm:$0xff]
      %v736 = vld [vmem:[#allocation2 + $0x121] sm:$0xff]
      %v737 = vld [vmem:[#allocation2 + $0x129] sm:$0xff]
      %v738 = vld [vmem:[#allocation2 + $0x139] sm:$0xff]
      %v739 = vld [vmem:[#allocation2 + $0x141] sm:$0xff]
      %v740 = vld [vmem:[#allocation2 + $0x151] sm:$0xff]
      %v741 = vld [vmem:[#allocation2 + $0x159] sm:$0xff]
      %v742 = vld [vmem:[#allocation2 + $0x169] sm:$0xff]
      %v743 = vld [vmem:[#allocation2 + $0x171] sm:$0xff]
      %v744 = vpack.c.bf16 %v713, %v712
      %v745 = vpack.c.bf16 %v715, %v714
      %v746 = vpack.c.bf16 %v717, %v716
      %v747 = vpack.c.bf16 %v719, %v718
      %v748 = vpack.c.bf16 %v721, %v720
      %v749 = vpack.c.bf16 %v723, %v722
      %v750 = vpack.c.bf16 %v725, %v724
      %v751 = vpack.c.bf16 %v727, %v726
      %v752 = vpack.c.bf16 %v729, %v728
      %v753 = vpack.c.bf16 %v731, %v730
      %v754 = vpack.c.bf16 %v733, %v732
      %v755 = vpack.c.bf16 %v735, %v734
      %v756 = vpack.c.bf16 %v737, %v736
      %v757 = vpack.c.bf16 %v739, %v738
      %v758 = vpack.c.bf16 %v741, %v740
      %v759 = vpack.c.bf16 %v743, %v742
      %v760 = vld [vmem:[#allocation2 + $0x2] sm:$0xff]
      %v761 = vld [vmem:[#allocation2 + $0xa] sm:$0xff]
      %v762 = vld [vmem:[#allocation2 + $0x1a] sm:$0xff]
      %v763 = vld [vmem:[#allocation2 + $0x22] sm:$0xff]
      %v764 = vld [vmem:[#allocation2 + $0x32] sm:$0xff]
      %v765 = vld [vmem:[#allocation2 + $0x3a] sm:$0xff]
      %v766 = vld [vmem:[#allocation2 + $0x4a] sm:$0xff]
      %v767 = vld [vmem:[#allocation2 + $0x52] sm:$0xff]
      %v768 = vld [vmem:[#allocation2 + $0x62] sm:$0xff]
      %v769 = vld [vmem:[#allocation2 + $0x6a] sm:$0xff]
      %v770 = vld [vmem:[#allocation2 + $0x7a] sm:$0xff]
      %v771 = vld [vmem:[#allocation2 + $0x82] sm:$0xff]
      %v772 = vld [vmem:[#allocation2 + $0x92] sm:$0xff]
      %v773 = vld [vmem:[#allocation2 + $0x9a] sm:$0xff]
      %v774 = vld [vmem:[#allocation2 + $0xaa] sm:$0xff]
      %v775 = vld [vmem:[#allocation2 + $0xb2] sm:$0xff]
      %v776 = vld [vmem:[#allocation2 + $0xc2] sm:$0xff]
      %v777 = vld [vmem:[#allocation2 + $0xca] sm:$0xff]
      %v778 = vld [vmem:[#allocation2 + $0xda] sm:$0xff]
      %v779 = vld [vmem:[#allocation2 + $0xe2] sm:$0xff]
      %v780 = vld [vmem:[#allocation2 + $0xf2] sm:$0xff]
      %v781 = vld [vmem:[#allocation2 + $0xfa] sm:$0xff]
      %v782 = vld [vmem:[#allocation2 + $0x10a] sm:$0xff]
      %v783 = vld [vmem:[#allocation2 + $0x112] sm:$0xff]
      %v784 = vld [vmem:[#allocation2 + $0x122] sm:$0xff]
      %v785 = vld [vmem:[#allocation2 + $0x12a] sm:$0xff]
      %v786 = vld [vmem:[#allocation2 + $0x13a] sm:$0xff]
      %v787 = vld [vmem:[#allocation2 + $0x142] sm:$0xff]
      %v788 = vld [vmem:[#allocation2 + $0x152] sm:$0xff]
      %v789 = vld [vmem:[#allocation2 + $0x15a] sm:$0xff]
      %v790 = vld [vmem:[#allocation2 + $0x16a] sm:$0xff]
      %v791 = vld [vmem:[#allocation2 + $0x172] sm:$0xff]
      %v792 = vpack.c.bf16 %v761, %v760
      %v793 = vpack.c.bf16 %v763, %v762
      %v794 = vpack.c.bf16 %v765, %v764
      %v795 = vpack.c.bf16 %v767, %v766
      %v796 = vpack.c.bf16 %v769, %v768
      %v797 = vpack.c.bf16 %v771, %v770
      %v798 = vpack.c.bf16 %v773, %v772
      %v799 = vpack.c.bf16 %v775, %v774
      %v800 = vpack.c.bf16 %v777, %v776
      %v801 = vpack.c.bf16 %v779, %v778
      %v802 = vpack.c.bf16 %v781, %v780
      %v803 = vpack.c.bf16 %v783, %v782
      %v804 = vpack.c.bf16 %v785, %v784
      %v805 = vpack.c.bf16 %v787, %v786
      %v806 = vpack.c.bf16 %v789, %v788
      %v807 = vpack.c.bf16 %v791, %v790
      %v808 = vld [vmem:[%s2] sm:$0xf]
      %v809 = vld [vmem:[%s2 + $0x4] sm:$0xf]
      %v810 = vld [vmem:[%s2 + $0x8] sm:$0xf]
      %v811 = vld [vmem:[%s2 + $0xc] sm:$0xf]
      %v812 = vld [vmem:[%s2 + $0x10] sm:$0xf]
      %v813 = vld [vmem:[%s2 + $0x14] sm:$0xf]
      %v814 = vld [vmem:[%s2 + $0x18] sm:$0xf]
      %v815 = vld [vmem:[%s2 + $0x1c] sm:$0xf]
      %v816 = vld [vmem:[%s2 + $0x20] sm:$0xf]
      %v817 = vld [vmem:[%s2 + $0x24] sm:$0xf]
      %v818 = vld [vmem:[%s2 + $0x28] sm:$0xf]
      %v819 = vld [vmem:[%s2 + $0x2c] sm:$0xf]
      %v820 = vld [vmem:[%s2 + $0x30] sm:$0xf]
      %v821 = vld [vmem:[%s2 + $0x34] sm:$0xf]
      %v822 = vld [vmem:[%s2 + $0x38] sm:$0xf]
      %v823 = vld [vmem:[%s2 + $0x3c] sm:$0xf]
      %v824 = vld [vmem:[%s2 + $0x40] sm:$0xf]
      %v825 = vld [vmem:[%s2 + $0x44] sm:$0xf]
      %v826 = vld [vmem:[%s2 + $0x48] sm:$0xf]
      %v827 = vld [vmem:[%s2 + $0x4c] sm:$0xf]
      %v828 = vld [vmem:[%s2 + $0x50] sm:$0xf]
      %v829 = vld [vmem:[%s2 + $0x54] sm:$0xf]
      %v830 = vld [vmem:[%s2 + $0x58] sm:$0xf]
      %v831 = vld [vmem:[%s2 + $0x5c] sm:$0xf]
      %v832 = vld [vmem:[%s2 + $0x60] sm:$0xf]
      %v833 = vld [vmem:[%s2 + $0x64] sm:$0xf]
      %v834 = vld [vmem:[%s2 + $0x68] sm:$0xf]
      %v835 = vld [vmem:[%s2 + $0x6c] sm:$0xf]
      %v836 = vld [vmem:[%s2 + $0x70] sm:$0xf]
      %v837 = vld [vmem:[%s2 + $0x74] sm:$0xf]
      %v838 = vld [vmem:[%s2 + $0x78] sm:$0xf]
      %v839 = vld [vmem:[%s2 + $0x7c] sm:$0xf]
      %v840 = vld [vmem:[%s2 + $0x80] sm:$0xf]
      %v841 = vld [vmem:[%s2 + $0x84] sm:$0xf]
      %v842 = vld [vmem:[%s2 + $0x88] sm:$0xf]
      %v843 = vld [vmem:[%s2 + $0x8c] sm:$0xf]
      %v844 = vld [vmem:[%s2 + $0x90] sm:$0xf]
      %v845 = vld [vmem:[%s2 + $0x94] sm:$0xf]
      %v846 = vld [vmem:[%s2 + $0x98] sm:$0xf]
      %v847 = vld [vmem:[%s2 + $0x9c] sm:$0xf]
      %v848 = vld [vmem:[%s2 + $0xa0] sm:$0xf]
      %v849 = vld [vmem:[%s2 + $0xa4] sm:$0xf]
      %v850 = vld [vmem:[%s2 + $0xa8] sm:$0xf]
      %v851 = vld [vmem:[%s2 + $0xac] sm:$0xf]
      %v852 = vld [vmem:[%s2 + $0xb0] sm:$0xf]
      %v853 = vld [vmem:[%s2 + $0xb4] sm:$0xf]
      %v854 = vld [vmem:[%s2 + $0xb8] sm:$0xf]
      %v855 = vld [vmem:[%s2 + $0xbc] sm:$0xf]
      %v856 = vld [vmem:[%s631] sm:$0xff]
      %v857 = vld [vmem:[%s631 + $0x8] sm:$0xff]
      %v858 = vld [vmem:[%s631 + $0x18] sm:$0xff]
      %v859 = vld [vmem:[%s631 + $0x20] sm:$0xff]
      %v860 = vld [vmem:[%s631 + $0x30] sm:$0xff]
      %v861 = vld [vmem:[%s631 + $0x38] sm:$0xff]
      %v862 = vld [vmem:[%s631 + $0x48] sm:$0xff]
      %v863 = vld [vmem:[%s631 + $0x50] sm:$0xff]
      %v864 = vld [vmem:[%s631 + $0x60] sm:$0xff]
      %v865 = vld [vmem:[%s631 + $0x68] sm:$0xff]
      %v866 = vld [vmem:[%s631 + $0x78] sm:$0xff]
      %v867 = vld [vmem:[%s631 + $0x80] sm:$0xff]
      %v868 = vld [vmem:[%s631 + $0x90] sm:$0xff]
      %v869 = vld [vmem:[%s631 + $0x98] sm:$0xff]
      %v870 = vld [vmem:[%s631 + $0xa8] sm:$0xff]
      %v871 = vld [vmem:[%s631 + $0xb0] sm:$0xff]
      %v872 = vld [vmem:[%s631 + $0xc0] sm:$0xff]
      %v873 = vld [vmem:[%s631 + $0xc8] sm:$0xff]
      %v874 = vld [vmem:[%s631 + $0xd8] sm:$0xff]
      %v875 = vld [vmem:[%s631 + $0xe0] sm:$0xff]
      %v876 = vld [vmem:[%s631 + $0xf0] sm:$0xff]
      %v877 = vld [vmem:[%s631 + $0xf8] sm:$0xff]
      %v878 = vld [vmem:[%s631 + $0x108] sm:$0xff]
      %v879 = vld [vmem:[%s631 + $0x110] sm:$0xff]
      %v880 = vld [vmem:[%s631 + $0x120] sm:$0xff]
      %v881 = vld [vmem:[%s631 + $0x128] sm:$0xff]
      %v882 = vld [vmem:[%s631 + $0x138] sm:$0xff]
      %v883 = vld [vmem:[%s631 + $0x140] sm:$0xff]
      %v884 = vld [vmem:[%s631 + $0x150] sm:$0xff]
      %v885 = vld [vmem:[%s631 + $0x158] sm:$0xff]
      %v886 = vld [vmem:[%s631 + $0x168] sm:$0xff]
      %v887 = vld [vmem:[%s631 + $0x170] sm:$0xff]
      %v888 = vpack.c.bf16 %v857, %v856
      %v889 = vpack.c.bf16 %v859, %v858
      %v890 = vpack.c.bf16 %v861, %v860
      %v891 = vpack.c.bf16 %v863, %v862
      %v892 = vpack.c.bf16 %v865, %v864
      %v893 = vpack.c.bf16 %v867, %v866
      %v894 = vpack.c.bf16 %v869, %v868
      %v895 = vpack.c.bf16 %v871, %v870
      %v896 = vpack.c.bf16 %v873, %v872
      %v897 = vpack.c.bf16 %v875, %v874
      %v898 = vpack.c.bf16 %v877, %v876
      %v899 = vpack.c.bf16 %v879, %v878
      %v900 = vpack.c.bf16 %v881, %v880
      %v901 = vpack.c.bf16 %v883, %v882
      %v902 = vpack.c.bf16 %v885, %v884
      %v903 = vpack.c.bf16 %v887, %v886
      %v904 = vld [vmem:[%s631 + $0x1] sm:$0xff]
      %v905 = vld [vmem:[%s631 + $0x9] sm:$0xff]
      %v906 = vld [vmem:[%s631 + $0x19] sm:$0xff]
      %v907 = vld [vmem:[%s631 + $0x21] sm:$0xff]
      %v908 = vld [vmem:[%s631 + $0x31] sm:$0xff]
      %v909 = vld [vmem:[%s631 + $0x39] sm:$0xff]
      %v910 = vld [vmem:[%s631 + $0x49] sm:$0xff]
      %v911 = vld [vmem:[%s631 + $0x51] sm:$0xff]
      %v912 = vld [vmem:[%s631 + $0x61] sm:$0xff]
      %v913 = vld [vmem:[%s631 + $0x69] sm:$0xff]
      %v914 = vld [vmem:[%s631 + $0x79] sm:$0xff]
      %v915 = vld [vmem:[%s631 + $0x81] sm:$0xff]
      %v916 = vld [vmem:[%s631 + $0x91] sm:$0xff]
      %v917 = vld [vmem:[%s631 + $0x99] sm:$0xff]
      %v918 = vld [vmem:[%s631 + $0xa9] sm:$0xff]
      %v919 = vld [vmem:[%s631 + $0xb1] sm:$0xff]
      %v920 = vld [vmem:[%s631 + $0xc1] sm:$0xff]
      %v921 = vld [vmem:[%s631 + $0xc9] sm:$0xff]
      %v922 = vld [vmem:[%s631 + $0xd9] sm:$0xff]
      %v923 = vld [vmem:[%s631 + $0xe1] sm:$0xff]
      %v924 = vld [vmem:[%s631 + $0xf1] sm:$0xff]
      %v925 = vld [vmem:[%s631 + $0xf9] sm:$0xff]
      %v926 = vld [vmem:[%s631 + $0x109] sm:$0xff]
      %v927 = vld [vmem:[%s631 + $0x111] sm:$0xff]
      %v928 = vld [vmem:[%s631 + $0x121] sm:$0xff]
      %v929 = vld [vmem:[%s631 + $0x129] sm:$0xff]
      %v930 = vld [vmem:[%s631 + $0x139] sm:$0xff]
      %v931 = vld [vmem:[%s631 + $0x141] sm:$0xff]
      %v932 = vld [vmem:[%s631 + $0x151] sm:$0xff]
      %v933 = vld [vmem:[%s631 + $0x159] sm:$0xff]
      %v934 = vld [vmem:[%s631 + $0x169] sm:$0xff]
      %v935 = vld [vmem:[%s631 + $0x171] sm:$0xff]
      %v936 = vpack.c.bf16 %v905, %v904
      %v937 = vpack.c.bf16 %v907, %v906
      %v938 = vpack.c.bf16 %v909, %v908
      %v939 = vpack.c.bf16 %v911, %v910
      %v940 = vpack.c.bf16 %v913, %v912
      %v941 = vpack.c.bf16 %v915, %v914
      %v942 = vpack.c.bf16 %v917, %v916
      %v943 = vpack.c.bf16 %v919, %v918
      %v944 = vpack.c.bf16 %v921, %v920
      %v945 = vpack.c.bf16 %v923, %v922
      %v946 = vpack.c.bf16 %v925, %v924
      %v947 = vpack.c.bf16 %v927, %v926
      %v948 = vpack.c.bf16 %v929, %v928
      %v949 = vpack.c.bf16 %v931, %v930
      %v950 = vpack.c.bf16 %v933, %v932
      %v951 = vpack.c.bf16 %v935, %v934
      %v952 = vld [vmem:[%s631 + $0x2] sm:$0xff]
      %v953 = vld [vmem:[%s631 + $0xa] sm:$0xff]
      %v954 = vld [vmem:[%s631 + $0x1a] sm:$0xff]
      %v955 = vld [vmem:[%s631 + $0x22] sm:$0xff]
      %v956 = vld [vmem:[%s631 + $0x32] sm:$0xff]
      %v957 = vld [vmem:[%s631 + $0x3a] sm:$0xff]
      %v958 = vld [vmem:[%s631 + $0x4a] sm:$0xff]
      %v959 = vld [vmem:[%s631 + $0x52] sm:$0xff]
      %v960 = vld [vmem:[%s631 + $0x62] sm:$0xff]
      %v961 = vld [vmem:[%s631 + $0x6a] sm:$0xff]
      %v962 = vld [vmem:[%s631 + $0x7a] sm:$0xff]
      %v963 = vld [vmem:[%s631 + $0x82] sm:$0xff]
      %v964 = vld [vmem:[%s631 + $0x92] sm:$0xff]
      %v965 = vld [vmem:[%s631 + $0x9a] sm:$0xff]
      %v966 = vld [vmem:[%s631 + $0xaa] sm:$0xff]
      %v967 = vld [vmem:[%s631 + $0xb2] sm:$0xff]
      %v968 = vld [vmem:[%s631 + $0xc2] sm:$0xff]
      %v969 = vld [vmem:[%s631 + $0xca] sm:$0xff]
      %v970 = vld [vmem:[%s631 + $0xda] sm:$0xff]
      %v971 = vld [vmem:[%s631 + $0xe2] sm:$0xff]
      %v972 = vld [vmem:[%s631 + $0xf2] sm:$0xff]
      %v973 = vld [vmem:[%s631 + $0xfa] sm:$0xff]
      %v974 = vld [vmem:[%s631 + $0x10a] sm:$0xff]
      %v975 = vld [vmem:[%s631 + $0x112] sm:$0xff]
      %v976 = vld [vmem:[%s631 + $0x122] sm:$0xff]
      %v977 = vld [vmem:[%s631 + $0x12a] sm:$0xff]
      %v978 = vld [vmem:[%s631 + $0x13a] sm:$0xff]
      %v979 = vld [vmem:[%s631 + $0x142] sm:$0xff]
      %v980 = vld [vmem:[%s631 + $0x152] sm:$0xff]
      %v981 = vld [vmem:[%s631 + $0x15a] sm:$0xff]
      %v982 = vld [vmem:[%s631 + $0x16a] sm:$0xff]
      %v983 = vld [vmem:[%s631 + $0x172] sm:$0xff]
      %v984 = vpack.c.bf16 %v953, %v952
      %v985 = vpack.c.bf16 %v955, %v954
      %v986 = vpack.c.bf16 %v957, %v956
      %v987 = vpack.c.bf16 %v959, %v958
      %v988 = vpack.c.bf16 %v961, %v960
      %v989 = vpack.c.bf16 %v963, %v962
      %v990 = vpack.c.bf16 %v965, %v964
      %v991 = vpack.c.bf16 %v967, %v966
      %v992 = vpack.c.bf16 %v969, %v968
      %v993 = vpack.c.bf16 %v971, %v970
      %v994 = vpack.c.bf16 %v973, %v972
      %v995 = vpack.c.bf16 %v975, %v974
      %v996 = vpack.c.bf16 %v977, %v976
      %v997 = vpack.c.bf16 %v979, %v978
      %v998 = vpack.c.bf16 %v981, %v980
      %v999 = vpack.c.bf16 %v983, %v982
      %s1000 = scalar_lea.vmem %s2, 192
      %v1001 = vld [vmem:[%s1000] sm:$0xf]
      %v1002 = vld [vmem:[%s1000 + $0x4] sm:$0xf]
      %v1003 = vld [vmem:[%s1000 + $0x8] sm:$0xf]
      %v1004 = vld [vmem:[%s1000 + $0xc] sm:$0xf]
      %v1005 = vld [vmem:[%s1000 + $0x10] sm:$0xf]
      %v1006 = vld [vmem:[%s1000 + $0x14] sm:$0xf]
      %v1007 = vld [vmem:[%s1000 + $0x18] sm:$0xf]
      %v1008 = vld [vmem:[%s1000 + $0x1c] sm:$0xf]
      %v1009 = vld [vmem:[%s1000 + $0x20] sm:$0xf]
      %v1010 = vld [vmem:[%s1000 + $0x24] sm:$0xf]
      %v1011 = vld [vmem:[%s1000 + $0x28] sm:$0xf]
      %v1012 = vld [vmem:[%s1000 + $0x2c] sm:$0xf]
      %v1013 = vld [vmem:[%s1000 + $0x30] sm:$0xf]
      %v1014 = vld [vmem:[%s1000 + $0x34] sm:$0xf]
      %v1015 = vld [vmem:[%s1000 + $0x38] sm:$0xf]
      %v1016 = vld [vmem:[%s1000 + $0x3c] sm:$0xf]
      %v1017 = vld [vmem:[%s1000 + $0x40] sm:$0xf]
      %v1018 = vld [vmem:[%s1000 + $0x44] sm:$0xf]
      %v1019 = vld [vmem:[%s1000 + $0x48] sm:$0xf]
      %v1020 = vld [vmem:[%s1000 + $0x4c] sm:$0xf]
      %v1021 = vld [vmem:[%s1000 + $0x50] sm:$0xf]
      %v1022 = vld [vmem:[%s1000 + $0x54] sm:$0xf]
      %v1023 = vld [vmem:[%s1000 + $0x58] sm:$0xf]
      %v1024 = vld [vmem:[%s1000 + $0x5c] sm:$0xf]
      %v1025 = vld [vmem:[%s1000 + $0x60] sm:$0xf]
      %v1026 = vld [vmem:[%s1000 + $0x64] sm:$0xf]
      %v1027 = vld [vmem:[%s1000 + $0x68] sm:$0xf]
      %v1028 = vld [vmem:[%s1000 + $0x6c] sm:$0xf]
      %v1029 = vld [vmem:[%s1000 + $0x70] sm:$0xf]
      %v1030 = vld [vmem:[%s1000 + $0x74] sm:$0xf]
      %v1031 = vld [vmem:[%s1000 + $0x78] sm:$0xf]
      %v1032 = vld [vmem:[%s1000 + $0x7c] sm:$0xf]
      %v1033 = vld [vmem:[%s1000 + $0x80] sm:$0xf]
      %v1034 = vld [vmem:[%s1000 + $0x84] sm:$0xf]
      %v1035 = vld [vmem:[%s1000 + $0x88] sm:$0xf]
      %v1036 = vld [vmem:[%s1000 + $0x8c] sm:$0xf]
      %v1037 = vld [vmem:[%s1000 + $0x90] sm:$0xf]
      %v1038 = vld [vmem:[%s1000 + $0x94] sm:$0xf]
      %v1039 = vld [vmem:[%s1000 + $0x98] sm:$0xf]
      %v1040 = vld [vmem:[%s1000 + $0x9c] sm:$0xf]
      %v1041 = vld [vmem:[%s1000 + $0xa0] sm:$0xf]
      %v1042 = vld [vmem:[%s1000 + $0xa4] sm:$0xf]
      %v1043 = vld [vmem:[%s1000 + $0xa8] sm:$0xf]
      %v1044 = vld [vmem:[%s1000 + $0xac] sm:$0xf]
      %v1045 = vld [vmem:[%s1000 + $0xb0] sm:$0xf]
      %v1046 = vld [vmem:[%s1000 + $0xb4] sm:$0xf]
      %v1047 = vld [vmem:[%s1000 + $0xb8] sm:$0xf]
      %v1048 = vld [vmem:[%s1000 + $0xbc] sm:$0xf]
      %v1097 = vunpack.c.l.b16 %v1001
      %v1098 = vunpack.c.l.b16 %v1002
      %v1099 = vunpack.c.l.b16 %v1003
      %v1100 = vunpack.c.l.b16 %v1004
      %v1101 = vunpack.c.l.b16 %v1005
      %v1102 = vunpack.c.l.b16 %v1006
      %v1103 = vunpack.c.l.b16 %v1007
      %v1104 = vunpack.c.l.b16 %v1008
      %v1105 = vunpack.c.l.b16 %v1009
      %v1106 = vunpack.c.l.b16 %v1010
      %v1107 = vunpack.c.l.b16 %v1011
      %v1108 = vunpack.c.l.b16 %v1012
      %v1109 = vunpack.c.l.b16 %v1013
      %v1110 = vunpack.c.l.b16 %v1014
      %v1111 = vunpack.c.l.b16 %v1015
      %v1112 = vunpack.c.l.b16 %v1016
      %v1113 = vunpack.c.l.b16 %v1017
      %v1114 = vunpack.c.l.b16 %v1018
      %v1115 = vunpack.c.l.b16 %v1019
      %v1116 = vunpack.c.l.b16 %v1020
      %v1117 = vunpack.c.l.b16 %v1021
      %v1118 = vunpack.c.l.b16 %v1022
      %v1119 = vunpack.c.l.b16 %v1023
      %v1120 = vunpack.c.l.b16 %v1024
      %v1121 = vunpack.c.l.b16 %v1025
      %v1122 = vunpack.c.l.b16 %v1026
      %v1123 = vunpack.c.l.b16 %v1027
      %v1124 = vunpack.c.l.b16 %v1028
      %v1125 = vunpack.c.l.b16 %v1029
      %v1126 = vunpack.c.l.b16 %v1030
      %v1127 = vunpack.c.l.b16 %v1031
      %v1128 = vunpack.c.l.b16 %v1032
      %v1129 = vunpack.c.l.b16 %v1033
      %v1130 = vunpack.c.l.b16 %v1034
      %v1131 = vunpack.c.l.b16 %v1035
      %v1132 = vunpack.c.l.b16 %v1036
      %v1133 = vunpack.c.l.b16 %v1037
      %v1134 = vunpack.c.l.b16 %v1038
      %v1135 = vunpack.c.l.b16 %v1039
      %v1136 = vunpack.c.l.b16 %v1040
      %v1137 = vunpack.c.l.b16 %v1041
      %v1138 = vunpack.c.l.b16 %v1042
      %v1139 = vunpack.c.l.b16 %v1043
      %v1140 = vunpack.c.l.b16 %v1044
      %v1141 = vunpack.c.l.b16 %v1045
      %v1142 = vunpack.c.l.b16 %v1046
      %v1143 = vunpack.c.l.b16 %v1047
      %v1144 = vunpack.c.l.b16 %v1048
      %v1145 = vpack.c.b16 %v1098, %v1097
      %v1146 = vpack.c.b16 %v1100, %v1099
      %v1147 = vpack.c.b16 %v1102, %v1101
      %v1148 = vpack.c.b16 %v1104, %v1103
      %v1149 = vpack.c.b16 %v1106, %v1105
      %v1150 = vpack.c.b16 %v1108, %v1107
      %v1151 = vpack.c.b16 %v1110, %v1109
      %v1152 = vpack.c.b16 %v1112, %v1111
      %v1153 = vpack.c.b16 %v1114, %v1113
      %v1154 = vpack.c.b16 %v1116, %v1115
      %v1155 = vpack.c.b16 %v1118, %v1117
      %v1156 = vpack.c.b16 %v1120, %v1119
      %v1157 = vpack.c.b16 %v1122, %v1121
      %v1158 = vpack.c.b16 %v1124, %v1123
      %v1159 = vpack.c.b16 %v1126, %v1125
      %v1160 = vpack.c.b16 %v1128, %v1127
      %v1161 = vpack.c.b16 %v1130, %v1129
      %v1162 = vpack.c.b16 %v1132, %v1131
      %v1163 = vpack.c.b16 %v1134, %v1133
      %v1164 = vpack.c.b16 %v1136, %v1135
      %v1165 = vpack.c.b16 %v1138, %v1137
      %v1166 = vpack.c.b16 %v1140, %v1139
      %v1167 = vpack.c.b16 %v1142, %v1141
      %v1168 = vpack.c.b16 %v1144, %v1143
      %1193 = vmatprep.subr.bf16.mxu0 0
      %1194 = vmatpush1.bf16.msra.mxu0 %v1145
      %1195 = vmatprep.subr.bf16.mxu0 0
      %1196 = vmatpush1.bf16.msra.mxu0 %v1146
      %1197 = vmatprep.subr.bf16.mxu0 0
      %1198 = vmatpush1.bf16.msra.mxu0 %v1147
      %1199 = vmatprep.subr.bf16.mxu0 0
      %1200 = vmatpush1.bf16.msra.mxu0 %v1148
      %1201 = vmatprep.subr.bf16.mxu0 0
      %1202 = vmatpush1.bf16.msra.mxu0 %v1149
      %1203 = vmatprep.subr.bf16.mxu0 0
      %1204 = vmatpush1.bf16.msra.mxu0 %v1150
      %1205 = vmatprep.subr.bf16.mxu0 0
      %1206 = vmatpush1.bf16.msra.mxu0 %v1151
      %1207 = vmatprep.subr.bf16.mxu0 0
      %1208 = vmatpush1.bf16.msra.mxu0 %v1152
      %1209 = vmatprep.subr.bf16.mxu0 0
      %1210 = vmatpush1.bf16.msra.mxu0 %v1153
      %1211 = vmatprep.subr.bf16.mxu0 0
      %1212 = vmatpush1.bf16.msra.mxu0 %v1154
      %1213 = vmatprep.subr.bf16.mxu0 0
      %1214 = vmatpush1.bf16.msra.mxu0 %v1155
      %1215 = vmatprep.subr.bf16.mxu0 0
      %1216 = vmatpush1.bf16.msra.mxu0 %v1156
      %1217 = vmatprep.subr.bf16.mxu0 0
      %1218 = vmatpush1.bf16.msra.mxu0 %v1157
      %1219 = vmatprep.subr.bf16.mxu0 0
      %1220 = vmatpush1.bf16.msra.mxu0 %v1158
      %1221 = vmatprep.subr.bf16.mxu0 0
      %1222 = vmatpush1.bf16.msra.mxu0 %v1159
      %1223 = vmatprep.subr.bf16.mxu0 0
      %1224 = vmatpush1.bf16.msra.mxu0 %v1160
      %1225 = vmatprep.mubr.bf16.mxu0 %v936
      %1226 = vmatmul.mubr.bf16.gmra.mrb[0].mxu0 %v888
      %v1227 = vpop.f32.mrb[0].mxu0
      %v1228 = vadd.f32 0.0, %v1227
      %v1229 = vpop.f32.mrb[0].mxu0
      %v1230 = vpop.f32.mrb[0].mxu0
      %v1231 = vadd.f32 0.0, %v1230
      %v1232 = vpop.f32.mrb[0].mxu0
      %1233 = vmatprep.mubr.bf16.mxu0 %v937
      %1234 = vmatmul.mubr.bf16.gmra.mrb[0].mxu0 %v889
      %v1235 = vpop.f32.mrb[0].mxu0
      %v1236 = vadd.f32 0.0, %v1235
      %v1237 = vpop.f32.mrb[0].mxu0
      %v1238 = vpop.f32.mrb[0].mxu0
      %v1239 = vadd.f32 0.0, %v1238
      %v1240 = vpop.f32.mrb[0].mxu0
      %1241 = vmatprep.mubr.bf16.mxu0 %v938
      %1242 = vmatmul.mubr.bf16.gmra.mrb[0].mxu0 %v890
      %v1243 = vpop.f32.mrb[0].mxu0
      %v1244 = vadd.f32 0.0, %v1243
      %v1245 = vpop.f32.mrb[0].mxu0
      %v1246 = vpop.f32.mrb[0].mxu0
      %v1247 = vadd.f32 0.0, %v1246
      %v1248 = vpop.f32.mrb[0].mxu0
      %1249 = vmatprep.mubr.bf16.mxu0 %v939
      %1250 = vmatmul.mubr.bf16.gmra.mrb[0].mxu0 %v891
      %v1251 = vpop.f32.mrb[0].mxu0
      %v1252 = vadd.f32 0.0, %v1251
      %v1253 = vpop.f32.mrb[0].mxu0
      %v1254 = vpop.f32.mrb[0].mxu0
      %v1255 = vadd.f32 0.0, %v1254
      %v1256 = vpop.f32.mrb[0].mxu0
      %1257 = vmatprep.mubr.bf16.mxu0 %v940
      %1258 = vmatmul.mubr.bf16.gmra.mrb[0].mxu0 %v892
      %v1259 = vpop.f32.mrb[0].mxu0
      %v1260 = vadd.f32 0.0, %v1259
      %v1261 = vpop.f32.mrb[0].mxu0
      %v1262 = vpop.f32.mrb[0].mxu0
      %v1263 = vadd.f32 0.0, %v1262
      %v1264 = vpop.f32.mrb[0].mxu0
      %1265 = vmatprep.mubr.bf16.mxu0 %v941
      %1266 = vmatmul.mubr.bf16.gmra.mrb[0].mxu0 %v893
      %v1267 = vpop.f32.mrb[0].mxu0
      %v1268 = vadd.f32 0.0, %v1267
      %v1269 = vpop.f32.mrb[0].mxu0
      %v1270 = vpop.f32.mrb[0].mxu0
      %v1271 = vadd.f32 0.0, %v1270
      %v1272 = vpop.f32.mrb[0].mxu0
      %1273 = vmatprep.mubr.bf16.mxu0 %v942
      %1274 = vmatmul.mubr.bf16.gmra.mrb[0].mxu0 %v894
      %v1275 = vpop.f32.mrb[0].mxu0
      %v1276 = vadd.f32 0.0, %v1275
      %v1277 = vpop.f32.mrb[0].mxu0
      %v1278 = vpop.f32.mrb[0].mxu0
      %v1279 = vadd.f32 0.0, %v1278
      %v1280 = vpop.f32.mrb[0].mxu0
      %1281 = vmatprep.mubr.bf16.mxu0 %v943
      %1282 = vmatmul.mubr.bf16.gmra.mrb[0].mxu0 %v895
      %v1283 = vpop.f32.mrb[0].mxu0
      %v1284 = vadd.f32 0.0, %v1283
      %v1285 = vpop.f32.mrb[0].mxu0
      %v1286 = vpop.f32.mrb[0].mxu0
      %v1287 = vadd.f32 0.0, %v1286
      %v1288 = vpop.f32.mrb[0].mxu0
      %1289 = vmatprep.mubr.bf16.mxu0 %v944
      %1290 = vmatmul.mubr.bf16.gmra.mrb[0].mxu0 %v896
      %v1291 = vpop.f32.mrb[0].mxu0
      %v1292 = vadd.f32 0.0, %v1291
      %v1293 = vpop.f32.mrb[0].mxu0
      %v1294 = vpop.f32.mrb[0].mxu0
      %v1295 = vadd.f32 0.0, %v1294
      %v1296 = vpop.f32.mrb[0].mxu0
      %1297 = vmatprep.mubr.bf16.mxu0 %v945
      %1298 = vmatmul.mubr.bf16.gmra.mrb[0].mxu0 %v897
      %v1299 = vpop.f32.mrb[0].mxu0
      %v1300 = vadd.f32 0.0, %v1299
      %v1301 = vpop.f32.mrb[0].mxu0
      %v1302 = vpop.f32.mrb[0].mxu0
      %v1303 = vadd.f32 0.0, %v1302
      %v1304 = vpop.f32.mrb[0].mxu0
      %1305 = vmatprep.mubr.bf16.mxu0 %v946
      %1306 = vmatmul.mubr.bf16.gmra.mrb[0].mxu0 %v898
      %v1307 = vpop.f32.mrb[0].mxu0
      %v1308 = vadd.f32 0.0, %v1307
      %v1309 = vpop.f32.mrb[0].mxu0
      %v1310 = vpop.f32.mrb[0].mxu0
      %v1311 = vadd.f32 0.0, %v1310
      %v1312 = vpop.f32.mrb[0].mxu0
      %1313 = vmatprep.mubr.bf16.mxu0 %v947
      %1314 = vmatmul.mubr.bf16.gmra.mrb[0].mxu0 %v899
      %v1315 = vpop.f32.mrb[0].mxu0
      %v1316 = vadd.f32 0.0, %v1315
      %v1317 = vpop.f32.mrb[0].mxu0
      %v1318 = vpop.f32.mrb[0].mxu0
      %v1319 = vadd.f32 0.0, %v1318
      %v1320 = vpop.f32.mrb[0].mxu0
      %1321 = vmatprep.mubr.bf16.mxu0 %v948
      %1322 = vmatmul.mubr.bf16.gmra.mrb[0].mxu0 %v900
      %v1323 = vpop.f32.mrb[0].mxu0
      %v1324 = vadd.f32 0.0, %v1323
      %v1325 = vpop.f32.mrb[0].mxu0
      %v1326 = vpop.f32.mrb[0].mxu0
      %v1327 = vadd.f32 0.0, %v1326
      %v1328 = vpop.f32.mrb[0].mxu0
      %1329 = vmatprep.mubr.bf16.mxu0 %v949
      %1330 = vmatmul.mubr.bf16.gmra.mrb[0].mxu0 %v901
      %v1331 = vpop.f32.mrb[0].mxu0
      %v1332 = vadd.f32 0.0, %v1331
      %v1333 = vpop.f32.mrb[0].mxu0
      %v1334 = vpop.f32.mrb[0].mxu0
      %v1335 = vadd.f32 0.0, %v1334
      %v1336 = vpop.f32.mrb[0].mxu0
      %1337 = vmatprep.mubr.bf16.mxu0 %v950
      %1338 = vmatmul.mubr.bf16.gmra.mrb[0].mxu0 %v902
      %v1339 = vpop.f32.mrb[0].mxu0
      %v1340 = vadd.f32 0.0, %v1339
      %v1341 = vpop.f32.mrb[0].mxu0
      %v1342 = vpop.f32.mrb[0].mxu0
      %v1343 = vadd.f32 0.0, %v1342
      %v1344 = vpop.f32.mrb[0].mxu0
      %1345 = vmatprep.mubr.bf16.mxu0 %v951
      %1346 = vmatmul.mubr.bf16.gmra.mrb[0].mxu0 %v903
      %v1347 = vpop.f32.mrb[0].mxu0
      %v1348 = vadd.f32 0.0, %v1347
      %v1349 = vpop.f32.mrb[0].mxu0
      %v1350 = vpop.f32.mrb[0].mxu0
      %v1351 = vadd.f32 0.0, %v1350
      %v1352 = vpop.f32.mrb[0].mxu0
      %1353 = vdwg.mxu0
      %1354 = vmatprep.subr.bf16.mxu0 0
      %1355 = vmatpush1.bf16.msra.mxu0 %v1161
      %1356 = vmatprep.subr.bf16.mxu0 0
      %1357 = vmatpush1.bf16.msra.mxu0 %v1162
      %1358 = vmatprep.subr.bf16.mxu0 0
      %1359 = vmatpush1.bf16.msra.mxu0 %v1163
      %1360 = vmatprep.subr.bf16.mxu0 0
      %1361 = vmatpush1.bf16.msra.mxu0 %v1164
      %1362 = vmatprep.subr.bf16.mxu0 0
      %1363 = vmatpush1.bf16.msra.mxu0 %v1165
      %1364 = vmatprep.subr.bf16.mxu0 0
      %1365 = vmatpush1.bf16.msra.mxu0 %v1166
      %1366 = vmatprep.subr.bf16.mxu0 0
      %1367 = vmatpush1.bf16.msra.mxu0 %v1167
      %1368 = vmatprep.subr.bf16.mxu0 0
      %1369 = vmatpush1.bf16.msra.mxu0 %v1168
      %1370 = vmatprep.subr.bf16.mxu0 0
      %1371 = vmatpush1.bf16.msra.mxu0 0
      %1372 = vmatprep.subr.bf16.mxu0 0
      %1373 = vmatpush1.bf16.msra.mxu0 0
      %1374 = vmatprep.subr.bf16.mxu0 0
      %1375 = vmatpush1.bf16.msra.mxu0 0
      %1376 = vmatprep.subr.bf16.mxu0 0
      %1377 = vmatpush1.bf16.msra.mxu0 0
      %1378 = vmatprep.subr.bf16.mxu0 0
      %1379 = vmatpush1.bf16.msra.mxu0 0
      %1380 = vmatprep.subr.bf16.mxu0 0
      %1381 = vmatpush1.bf16.msra.mxu0 0
      %1382 = vmatprep.subr.bf16.mxu0 0
      %1383 = vmatpush1.bf16.msra.mxu0 0
      %1384 = vmatprep.subr.bf16.mxu0 0
      %1385 = vmatpush1.bf16.msra.mxu0 0
      %1386 = vmatprep.mubr.bf16.mxu0 0
      %1387 = vmatmul.mubr.bf16.gmra.mrb[0].mxu0 %v984
      %v1388 = vpop.f32.mrb[0].mxu0
      %v1389 = vadd.f32 %v1228, %v1388
      %v1390 = vpop.f32.mrb[0].mxu0
      %v1391 = vpop.f32.mrb[0].mxu0
      %v1392 = vadd.f32 %v1231, %v1391
      %v1393 = vpop.f32.mrb[0].mxu0
      %1394 = vmatprep.mubr.bf16.mxu0 0
      %1395 = vmatmul.mubr.bf16.gmra.mrb[0].mxu0 %v985
      %v1396 = vpop.f32.mrb[0].mxu0
      %v1397 = vadd.f32 %v1236, %v1396
      %v1398 = vpop.f32.mrb[0].mxu0
      %v1399 = vpop.f32.mrb[0].mxu0
      %v1400 = vadd.f32 %v1239, %v1399
      %v1401 = vpop.f32.mrb[0].mxu0
      %1402 = vmatprep.mubr.bf16.mxu0 0
      %1403 = vmatmul.mubr.bf16.gmra.mrb[0].mxu0 %v986
      %v1404 = vpop.f32.mrb[0].mxu0
      %v1405 = vadd.f32 %v1244, %v1404
      %v1406 = vpop.f32.mrb[0].mxu0
      %v1407 = vpop.f32.mrb[0].mxu0
      %v1408 = vadd.f32 %v1247, %v1407
      %v1409 = vpop.f32.mrb[0].mxu0
      %1410 = vmatprep.mubr.bf16.mxu0 0
      %1411 = vmatmul.mubr.bf16.gmra.mrb[0].mxu0 %v987
      %v1412 = vpop.f32.mrb[0].mxu0
      %v1413 = vadd.f32 %v1252, %v1412
      %v1414 = vpop.f32.mrb[0].mxu0
      %v1415 = vpop.f32.mrb[0].mxu0
      %v1416 = vadd.f32 %v1255, %v1415
      %v1417 = vpop.f32.mrb[0].mxu0
      %1418 = vmatprep.mubr.bf16.mxu0 0
      %1419 = vmatmul.mubr.bf16.gmra.mrb[0].mxu0 %v988
      %v1420 = vpop.f32.mrb[0].mxu0
      %v1421 = vadd.f32 %v1260, %v1420
      %v1422 = vpop.f32.mrb[0].mxu0
      %v1423 = vpop.f32.mrb[0].mxu0
      %v1424 = vadd.f32 %v1263, %v1423
      %v1425 = vpop.f32.mrb[0].mxu0
      %1426 = vmatprep.mubr.bf16.mxu0 0
      %1427 = vmatmul.mubr.bf16.gmra.mrb[0].mxu0 %v989
      %v1428 = vpop.f32.mrb[0].mxu0
      %v1429 = vadd.f32 %v1268, %v1428
      %v1430 = vpop.f32.mrb[0].mxu0
      %v1431 = vpop.f32.mrb[0].mxu0
      %v1432 = vadd.f32 %v1271, %v1431
      %v1433 = vpop.f32.mrb[0].mxu0
      %1434 = vmatprep.mubr.bf16.mxu0 0
      %1435 = vmatmul.mubr.bf16.gmra.mrb[0].mxu0 %v990
      %v1436 = vpop.f32.mrb[0].mxu0
      %v1437 = vadd.f32 %v1276, %v1436
      %v1438 = vpop.f32.mrb[0].mxu0
      %v1439 = vpop.f32.mrb[0].mxu0
      %v1440 = vadd.f32 %v1279, %v1439
      %v1441 = vpop.f32.mrb[0].mxu0
      %1442 = vmatprep.mubr.bf16.mxu0 0
      %1443 = vmatmul.mubr.bf16.gmra.mrb[0].mxu0 %v991
      %v1444 = vpop.f32.mrb[0].mxu0
      %v1445 = vadd.f32 %v1284, %v1444
      %v1446 = vpop.f32.mrb[0].mxu0
      %v1447 = vpop.f32.mrb[0].mxu0
      %v1448 = vadd.f32 %v1287, %v1447
      %v1449 = vpop.f32.mrb[0].mxu0
      %1450 = vmatprep.mubr.bf16.mxu0 0
      %1451 = vmatmul.mubr.bf16.gmra.mrb[0].mxu0 %v992
      %v1452 = vpop.f32.mrb[0].mxu0
      %v1453 = vadd.f32 %v1292, %v1452
      %v1454 = vpop.f32.mrb[0].mxu0
      %v1455 = vpop.f32.mrb[0].mxu0
      %v1456 = vadd.f32 %v1295, %v1455
      %v1457 = vpop.f32.mrb[0].mxu0
      %1458 = vmatprep.mubr.bf16.mxu0 0
      %1459 = vmatmul.mubr.bf16.gmra.mrb[0].mxu0 %v993
      %v1460 = vpop.f32.mrb[0].mxu0
      %v1461 = vadd.f32 %v1300, %v1460
      %v1462 = vpop.f32.mrb[0].mxu0
      %v1463 = vpop.f32.mrb[0].mxu0
      %v1464 = vadd.f32 %v1303, %v1463
      %v1465 = vpop.f32.mrb[0].mxu0
      %1466 = vmatprep.mubr.bf16.mxu0 0
      %1467 = vmatmul.mubr.bf16.gmra.mrb[0].mxu0 %v994
      %v1468 = vpop.f32.mrb[0].mxu0
      %v1469 = vadd.f32 %v1308, %v1468
      %v1470 = vpop.f32.mrb[0].mxu0
      %v1471 = vpop.f32.mrb[0].mxu0
      %v1472 = vadd.f32 %v1311, %v1471
      %v1473 = vpop.f32.mrb[0].mxu0
      %1474 = vmatprep.mubr.bf16.mxu0 0
      %1475 = vmatmul.mubr.bf16.gmra.mrb[0].mxu0 %v995
      %v1476 = vpop.f32.mrb[0].mxu0
      %v1477 = vadd.f32 %v1316, %v1476
      %v1478 = vpop.f32.mrb[0].mxu0
      %v1479 = vpop.f32.mrb[0].mxu0
      %v1480 = vadd.f32 %v1319, %v1479
      %v1481 = vpop.f32.mrb[0].mxu0
      %1482 = vmatprep.mubr.bf16.mxu0 0
      %1483 = vmatmul.mubr.bf16.gmra.mrb[0].mxu0 %v996
      %v1484 = vpop.f32.mrb[0].mxu0
      %v1485 = vadd.f32 %v1324, %v1484
      %v1486 = vpop.f32.mrb[0].mxu0
      %v1487 = vpop.f32.mrb[0].mxu0
      %v1488 = vadd.f32 %v1327, %v1487
      %v1489 = vpop.f32.mrb[0].mxu0
      %1490 = vmatprep.mubr.bf16.mxu0 0
      %1491 = vmatmul.mubr.bf16.gmra.mrb[0].mxu0 %v997
      %v1492 = vpop.f32.mrb[0].mxu0
      %v1493 = vadd.f32 %v1332, %v1492
      %v1494 = vpop.f32.mrb[0].mxu0
      %v1495 = vpop.f32.mrb[0].mxu0
      %v1496 = vadd.f32 %v1335, %v1495
      %v1497 = vpop.f32.mrb[0].mxu0
      %1498 = vmatprep.mubr.bf16.mxu0 0
      %1499 = vmatmul.mubr.bf16.gmra.mrb[0].mxu0 %v998
      %v1500 = vpop.f32.mrb[0].mxu0
      %v1501 = vadd.f32 %v1340, %v1500
      %v1502 = vpop.f32.mrb[0].mxu0
      %v1503 = vpop.f32.mrb[0].mxu0
      %v1504 = vadd.f32 %v1343, %v1503
      %v1505 = vpop.f32.mrb[0].mxu0
      %1506 = vmatprep.mubr.bf16.mxu0 0
      %1507 = vmatmul.mubr.bf16.gmra.mrb[0].mxu0 %v999
      %v1508 = vpop.f32.mrb[0].mxu0
      %v1509 = vadd.f32 %v1348, %v1508
      %v1510 = vpop.f32.mrb[0].mxu0
      %v1511 = vpop.f32.mrb[0].mxu0
      %v1512 = vadd.f32 %v1351, %v1511
      %v1513 = vpop.f32.mrb[0].mxu0
      %1514 = vdwg.mxu0
      %v1563 = vunpack.c.l.b16 %v808
      %v1564 = vunpack.c.l.b16 %v809
      %v1565 = vunpack.c.l.b16 %v810
      %v1566 = vunpack.c.l.b16 %v811
      %v1567 = vunpack.c.l.b16 %v812
      %v1568 = vunpack.c.l.b16 %v813
      %v1569 = vunpack.c.l.b16 %v814
      %v1570 = vunpack.c.l.b16 %v815
      %v1571 = vunpack.c.l.b16 %v816
      %v1572 = vunpack.c.l.b16 %v817
      %v1573 = vunpack.c.l.b16 %v818
      %v1574 = vunpack.c.l.b16 %v819
      %v1575 = vunpack.c.l.b16 %v820
      %v1576 = vunpack.c.l.b16 %v821
      %v1577 = vunpack.c.l.b16 %v822
      %v1578 = vunpack.c.l.b16 %v823
      %v1579 = vunpack.c.l.b16 %v824
      %v1580 = vunpack.c.l.b16 %v825
      %v1581 = vunpack.c.l.b16 %v826
      %v1582 = vunpack.c.l.b16 %v827
      %v1583 = vunpack.c.l.b16 %v828
      %v1584 = vunpack.c.l.b16 %v829
      %v1585 = vunpack.c.l.b16 %v830
      %v1586 = vunpack.c.l.b16 %v831
      %v1587 = vunpack.c.l.b16 %v832
      %v1588 = vunpack.c.l.b16 %v833
      %v1589 = vunpack.c.l.b16 %v834
      %v1590 = vunpack.c.l.b16 %v835
      %v1591 = vunpack.c.l.b16 %v836
      %v1592 = vunpack.c.l.b16 %v837
      %v1593 = vunpack.c.l.b16 %v838
      %v1594 = vunpack.c.l.b16 %v839
      %v1595 = vunpack.c.l.b16 %v840
      %v1596 = vunpack.c.l.b16 %v841
      %v1597 = vunpack.c.l.b16 %v842
      %v1598 = vunpack.c.l.b16 %v843
      %v1599 = vunpack.c.l.b16 %v844
      %v1600 = vunpack.c.l.b16 %v845
      %v1601 = vunpack.c.l.b16 %v846
      %v1602 = vunpack.c.l.b16 %v847
      %v1603 = vunpack.c.l.b16 %v848
      %v1604 = vunpack.c.l.b16 %v849
      %v1605 = vunpack.c.l.b16 %v850
      %v1606 = vunpack.c.l.b16 %v851
      %v1607 = vunpack.c.l.b16 %v852
      %v1608 = vunpack.c.l.b16 %v853
      %v1609 = vunpack.c.l.b16 %v854
      %v1610 = vunpack.c.l.b16 %v855
      %v1611 = vpack.c.b16 %v1564, %v1563
      %v1612 = vpack.c.b16 %v1566, %v1565
      %v1613 = vpack.c.b16 %v1568, %v1567
      %v1614 = vpack.c.b16 %v1570, %v1569
      %v1615 = vpack.c.b16 %v1572, %v1571
      %v1616 = vpack.c.b16 %v1574, %v1573
      %v1617 = vpack.c.b16 %v1576, %v1575
      %v1618 = vpack.c.b16 %v1578, %v1577
      %v1619 = vpack.c.b16 %v1580, %v1579
      %v1620 = vpack.c.b16 %v1582, %v1581
      %v1621 = vpack.c.b16 %v1584, %v1583
      %v1622 = vpack.c.b16 %v1586, %v1585
      %v1623 = vpack.c.b16 %v1588, %v1587
      %v1624 = vpack.c.b16 %v1590, %v1589
      %v1625 = vpack.c.b16 %v1592, %v1591
      %v1626 = vpack.c.b16 %v1594, %v1593
      %v1627 = vpack.c.b16 %v1596, %v1595
      %v1628 = vpack.c.b16 %v1598, %v1597
      %v1629 = vpack.c.b16 %v1600, %v1599
      %v1630 = vpack.c.b16 %v1602, %v1601
      %v1631 = vpack.c.b16 %v1604, %v1603
      %v1632 = vpack.c.b16 %v1606, %v1605
      %v1633 = vpack.c.b16 %v1608, %v1607
      %v1634 = vpack.c.b16 %v1610, %v1609
      %1659 = vmatprep.subr.bf16.mxu0 0
      %1660 = vmatpush1.bf16.msra.mxu0 %v1611
      %1661 = vmatprep.subr.bf16.mxu0 0
      %1662 = vmatpush1.bf16.msra.mxu0 %v1612
      %1663 = vmatprep.subr.bf16.mxu0 0
      %1664 = vmatpush1.bf16.msra.mxu0 %v1613
      %1665 = vmatprep.subr.bf16.mxu0 0
      %1666 = vmatpush1.bf16.msra.mxu0 %v1614
      %1667 = vmatprep.subr.bf16.mxu0 0
      %1668 = vmatpush1.bf16.msra.mxu0 %v1615
      %1669 = vmatprep.subr.bf16.mxu0 0
      %1670 = vmatpush1.bf16.msra.mxu0 %v1616
      %1671 = vmatprep.subr.bf16.mxu0 0
      %1672 = vmatpush1.bf16.msra.mxu0 %v1617
      %1673 = vmatprep.subr.bf16.mxu0 0
      %1674 = vmatpush1.bf16.msra.mxu0 %v1618
      %1675 = vmatprep.subr.bf16.mxu0 0
      %1676 = vmatpush1.bf16.msra.mxu0 %v1619
      %1677 = vmatprep.subr.bf16.mxu0 0
      %1678 = vmatpush1.bf16.msra.mxu0 %v1620
      %1679 = vmatprep.subr.bf16.mxu0 0
      %1680 = vmatpush1.bf16.msra.mxu0 %v1621
      %1681 = vmatprep.subr.bf16.mxu0 0
      %1682 = vmatpush1.bf16.msra.mxu0 %v1622
      %1683 = vmatprep.subr.bf16.mxu0 0
      %1684 = vmatpush1.bf16.msra.mxu0 %v1623
      %1685 = vmatprep.subr.bf16.mxu0 0
      %1686 = vmatpush1.bf16.msra.mxu0 %v1624
      %1687 = vmatprep.subr.bf16.mxu0 0
      %1688 = vmatpush1.bf16.msra.mxu0 %v1625
      %1689 = vmatprep.subr.bf16.mxu0 0
      %1690 = vmatpush1.bf16.msra.mxu0 %v1626
      %1691 = vmatprep.mubr.bf16.mxu0 %v744
      %1692 = vmatmul.mubr.bf16.gmra.mrb[0].mxu0 %v696
      %v1693 = vpop.f32.mrb[0].mxu0
      %v1694 = vadd.f32 %v1389, %v1693
      %v1695 = vpop.f32.mrb[0].mxu0
      %v1696 = vpop.f32.mrb[0].mxu0
      %v1697 = vadd.f32 %v1392, %v1696
      %v1698 = vpop.f32.mrb[0].mxu0
      %1699 = vmatprep.mubr.bf16.mxu0 %v745
      %1700 = vmatmul.mubr.bf16.gmra.mrb[0].mxu0 %v697
      %v1701 = vpop.f32.mrb[0].mxu0
      %v1702 = vadd.f32 %v1397, %v1701
      %v1703 = vpop.f32.mrb[0].mxu0
      %v1704 = vpop.f32.mrb[0].mxu0
      %v1705 = vadd.f32 %v1400, %v1704
      %v1706 = vpop.f32.mrb[0].mxu0
      %1707 = vmatprep.mubr.bf16.mxu0 %v746
      %1708 = vmatmul.mubr.bf16.gmra.mrb[0].mxu0 %v698
      %v1709 = vpop.f32.mrb[0].mxu0
      %v1710 = vadd.f32 %v1405, %v1709
      %v1711 = vpop.f32.mrb[0].mxu0
      %v1712 = vpop.f32.mrb[0].mxu0
      %v1713 = vadd.f32 %v1408, %v1712
      %v1714 = vpop.f32.mrb[0].mxu0
      %1715 = vmatprep.mubr.bf16.mxu0 %v747
      %1716 = vmatmul.mubr.bf16.gmra.mrb[0].mxu0 %v699
      %v1717 = vpop.f32.mrb[0].mxu0
      %v1718 = vadd.f32 %v1413, %v1717
      %v1719 = vpop.f32.mrb[0].mxu0
      %v1720 = vpop.f32.mrb[0].mxu0
      %v1721 = vadd.f32 %v1416, %v1720
      %v1722 = vpop.f32.mrb[0].mxu0
      %1723 = vmatprep.mubr.bf16.mxu0 %v748
      %1724 = vmatmul.mubr.bf16.gmra.mrb[0].mxu0 %v700
      %v1725 = vpop.f32.mrb[0].mxu0
      %v1726 = vadd.f32 %v1421, %v1725
      %v1727 = vpop.f32.mrb[0].mxu0
      %v1728 = vpop.f32.mrb[0].mxu0
      %v1729 = vadd.f32 %v1424, %v1728
      %v1730 = vpop.f32.mrb[0].mxu0
      %1731 = vmatprep.mubr.bf16.mxu0 %v749
      %1732 = vmatmul.mubr.bf16.gmra.mrb[0].mxu0 %v701
      %v1733 = vpop.f32.mrb[0].mxu0
      %v1734 = vadd.f32 %v1429, %v1733
      %v1735 = vpop.f32.mrb[0].mxu0
      %v1736 = vpop.f32.mrb[0].mxu0
      %v1737 = vadd.f32 %v1432, %v1736
      %v1738 = vpop.f32.mrb[0].mxu0
      %1739 = vmatprep.mubr.bf16.mxu0 %v750
      %1740 = vmatmul.mubr.bf16.gmra.mrb[0].mxu0 %v702
      %v1741 = vpop.f32.mrb[0].mxu0
      %v1742 = vadd.f32 %v1437, %v1741
      %v1743 = vpop.f32.mrb[0].mxu0
      %v1744 = vpop.f32.mrb[0].mxu0
      %v1745 = vadd.f32 %v1440, %v1744
      %v1746 = vpop.f32.mrb[0].mxu0
      %1747 = vmatprep.mubr.bf16.mxu0 %v751
      %1748 = vmatmul.mubr.bf16.gmra.mrb[0].mxu0 %v703
      %v1749 = vpop.f32.mrb[0].mxu0
      %v1750 = vadd.f32 %v1445, %v1749
      %v1751 = vpop.f32.mrb[0].mxu0
      %v1752 = vpop.f32.mrb[0].mxu0
      %v1753 = vadd.f32 %v1448, %v1752
      %v1754 = vpop.f32.mrb[0].mxu0
      %1755 = vmatprep.mubr.bf16.mxu0 %v752
      %1756 = vmatmul.mubr.bf16.gmra.mrb[0].mxu0 %v704
      %v1757 = vpop.f32.mrb[0].mxu0
      %v1758 = vadd.f32 %v1453, %v1757
      %v1759 = vpop.f32.mrb[0].mxu0
      %v1760 = vpop.f32.mrb[0].mxu0
      %v1761 = vadd.f32 %v1456, %v1760
      %v1762 = vpop.f32.mrb[0].mxu0
      %1763 = vmatprep.mubr.bf16.mxu0 %v753
      %1764 = vmatmul.mubr.bf16.gmra.mrb[0].mxu0 %v705
      %v1765 = vpop.f32.mrb[0].mxu0
      %v1766 = vadd.f32 %v1461, %v1765
      %v1767 = vpop.f32.mrb[0].mxu0
      %v1768 = vpop.f32.mrb[0].mxu0
      %v1769 = vadd.f32 %v1464, %v1768
      %v1770 = vpop.f32.mrb[0].mxu0
      %1771 = vmatprep.mubr.bf16.mxu0 %v754
      %1772 = vmatmul.mubr.bf16.gmra.mrb[0].mxu0 %v706
      %v1773 = vpop.f32.mrb[0].mxu0
      %v1774 = vadd.f32 %v1469, %v1773
      %v1775 = vpop.f32.mrb[0].mxu0
      %v1776 = vpop.f32.mrb[0].mxu0
      %v1777 = vadd.f32 %v1472, %v1776
      %v1778 = vpop.f32.mrb[0].mxu0
      %1779 = vmatprep.mubr.bf16.mxu0 %v755
      %1780 = vmatmul.mubr.bf16.gmra.mrb[0].mxu0 %v707
      %v1781 = vpop.f32.mrb[0].mxu0
      %v1782 = vadd.f32 %v1477, %v1781
      %v1783 = vpop.f32.mrb[0].mxu0
      %v1784 = vpop.f32.mrb[0].mxu0
      %v1785 = vadd.f32 %v1480, %v1784
      %v1786 = vpop.f32.mrb[0].mxu0
      %1787 = vmatprep.mubr.bf16.mxu0 %v756
      %1788 = vmatmul.mubr.bf16.gmra.mrb[0].mxu0 %v708
      %v1789 = vpop.f32.mrb[0].mxu0
      %v1790 = vadd.f32 %v1485, %v1789
      %v1791 = vpop.f32.mrb[0].mxu0
      %v1792 = vpop.f32.mrb[0].mxu0
      %v1793 = vadd.f32 %v1488, %v1792
      %v1794 = vpop.f32.mrb[0].mxu0
      %1795 = vmatprep.mubr.bf16.mxu0 %v757
      %1796 = vmatmul.mubr.bf16.gmra.mrb[0].mxu0 %v709
      %v1797 = vpop.f32.mrb[0].mxu0
      %v1798 = vadd.f32 %v1493, %v1797
      %v1799 = vpop.f32.mrb[0].mxu0
      %v1800 = vpop.f32.mrb[0].mxu0
      %v1801 = vadd.f32 %v1496, %v1800
      %v1802 = vpop.f32.mrb[0].mxu0
      %1803 = vmatprep.mubr.bf16.mxu0 %v758
      %1804 = vmatmul.mubr.bf16.gmra.mrb[0].mxu0 %v710
      %v1805 = vpop.f32.mrb[0].mxu0
      %v1806 = vadd.f32 %v1501, %v1805
      %v1807 = vpop.f32.mrb[0].mxu0
      %v1808 = vpop.f32.mrb[0].mxu0
      %v1809 = vadd.f32 %v1504, %v1808
      %v1810 = vpop.f32.mrb[0].mxu0
      %1811 = vmatprep.mubr.bf16.mxu0 %v759
      %1812 = vmatmul.mubr.bf16.gmra.mrb[0].mxu0 %v711
      %v1813 = vpop.f32.mrb[0].mxu0
      %v1814 = vadd.f32 %v1509, %v1813
      %v1815 = vpop.f32.mrb[0].mxu0
      %v1816 = vpop.f32.mrb[0].mxu0
      %v1817 = vadd.f32 %v1512, %v1816
      %v1818 = vpop.f32.mrb[0].mxu0
      %1819 = vdwg.mxu0
      %1820 = vmatprep.subr.bf16.mxu0 0
      %1821 = vmatpush1.bf16.msra.mxu0 %v1627
      %1822 = vmatprep.subr.bf16.mxu0 0
      %1823 = vmatpush1.bf16.msra.mxu0 %v1628
      %1824 = vmatprep.subr.bf16.mxu0 0
      %1825 = vmatpush1.bf16.msra.mxu0 %v1629
      %1826 = vmatprep.subr.bf16.mxu0 0
      %1827 = vmatpush1.bf16.msra.mxu0 %v1630
      %1828 = vmatprep.subr.bf16.mxu0 0
      %1829 = vmatpush1.bf16.msra.mxu0 %v1631
      %1830 = vmatprep.subr.bf16.mxu0 0
      %1831 = vmatpush1.bf16.msra.mxu0 %v1632
      %1832 = vmatprep.subr.bf16.mxu0 0
      %1833 = vmatpush1.bf16.msra.mxu0 %v1633
      %1834 = vmatprep.subr.bf16.mxu0 0
      %1835 = vmatpush1.bf16.msra.mxu0 %v1634
      %1836 = vmatprep.subr.bf16.mxu0 0
      %1837 = vmatpush1.bf16.msra.mxu0 0
      %1838 = vmatprep.subr.bf16.mxu0 0
      %1839 = vmatpush1.bf16.msra.mxu0 0
      %1840 = vmatprep.subr.bf16.mxu0 0
      %1841 = vmatpush1.bf16.msra.mxu0 0
      %1842 = vmatprep.subr.bf16.mxu0 0
      %1843 = vmatpush1.bf16.msra.mxu0 0
      %1844 = vmatprep.subr.bf16.mxu0 0
      %1845 = vmatpush1.bf16.msra.mxu0 0
      %1846 = vmatprep.subr.bf16.mxu0 0
      %1847 = vmatpush1.bf16.msra.mxu0 0
      %1848 = vmatprep.subr.bf16.mxu0 0
      %1849 = vmatpush1.bf16.msra.mxu0 0
      %1850 = vmatprep.subr.bf16.mxu0 0
      %1851 = vmatpush1.bf16.msra.mxu0 0
      %1852 = vmatprep.mubr.bf16.mxu0 0
      %1853 = vmatmul.mubr.bf16.gmra.mrb[0].mxu0 %v792
      %v1854 = vpop.f32.mrb[0].mxu0
      %v1855 = vadd.f32 %v1694, %v1854
      %v1856 = vpop.f32.mrb[0].mxu0
      %v1857 = vpop.f32.mrb[0].mxu0
      %v1858 = vadd.f32 %v1697, %v1857
      %v1859 = vpop.f32.mrb[0].mxu0
      %1860 = vmatprep.mubr.bf16.mxu0 0
      %1861 = vmatmul.mubr.bf16.gmra.mrb[0].mxu0 %v793
      %v1862 = vpop.f32.mrb[0].mxu0
      %v1863 = vadd.f32 %v1702, %v1862
      %v1864 = vpop.f32.mrb[0].mxu0
      %v1865 = vpop.f32.mrb[0].mxu0
      %v1866 = vadd.f32 %v1705, %v1865
      %v1867 = vpop.f32.mrb[0].mxu0
      %1868 = vmatprep.mubr.bf16.mxu0 0
      %1869 = vmatmul.mubr.bf16.gmra.mrb[0].mxu0 %v794
      %v1870 = vpop.f32.mrb[0].mxu0
      %v1871 = vadd.f32 %v1710, %v1870
      %v1872 = vpop.f32.mrb[0].mxu0
      %v1873 = vpop.f32.mrb[0].mxu0
      %v1874 = vadd.f32 %v1713, %v1873
      %v1875 = vpop.f32.mrb[0].mxu0
      %1876 = vmatprep.mubr.bf16.mxu0 0
      %1877 = vmatmul.mubr.bf16.gmra.mrb[0].mxu0 %v795
      %v1878 = vpop.f32.mrb[0].mxu0
      %v1879 = vadd.f32 %v1718, %v1878
      %v1880 = vpop.f32.mrb[0].mxu0
      %v1881 = vpop.f32.mrb[0].mxu0
      %v1882 = vadd.f32 %v1721, %v1881
      %v1883 = vpop.f32.mrb[0].mxu0
      %1884 = vmatprep.mubr.bf16.mxu0 0
      %1885 = vmatmul.mubr.bf16.gmra.mrb[0].mxu0 %v796
      %v1886 = vpop.f32.mrb[0].mxu0
      %v1887 = vadd.f32 %v1726, %v1886
      %v1888 = vpop.f32.mrb[0].mxu0
      %v1889 = vpop.f32.mrb[0].mxu0
      %v1890 = vadd.f32 %v1729, %v1889
      %v1891 = vpop.f32.mrb[0].mxu0
      %1892 = vmatprep.mubr.bf16.mxu0 0
      %1893 = vmatmul.mubr.bf16.gmra.mrb[0].mxu0 %v797
      %v1894 = vpop.f32.mrb[0].mxu0
      %v1895 = vadd.f32 %v1734, %v1894
      %v1896 = vpop.f32.mrb[0].mxu0
      %v1897 = vpop.f32.mrb[0].mxu0
      %v1898 = vadd.f32 %v1737, %v1897
      %v1899 = vpop.f32.mrb[0].mxu0
      %1900 = vmatprep.mubr.bf16.mxu0 0
      %1901 = vmatmul.mubr.bf16.gmra.mrb[0].mxu0 %v798
      %v1902 = vpop.f32.mrb[0].mxu0
      %v1903 = vadd.f32 %v1742, %v1902
      %v1904 = vpop.f32.mrb[0].mxu0
      %v1905 = vpop.f32.mrb[0].mxu0
      %v1906 = vadd.f32 %v1745, %v1905
      %v1907 = vpop.f32.mrb[0].mxu0
      %1908 = vmatprep.mubr.bf16.mxu0 0
      %1909 = vmatmul.mubr.bf16.gmra.mrb[0].mxu0 %v799
      %v1910 = vpop.f32.mrb[0].mxu0
      %v1911 = vadd.f32 %v1750, %v1910
      %v1912 = vpop.f32.mrb[0].mxu0
      %v1913 = vpop.f32.mrb[0].mxu0
      %v1914 = vadd.f32 %v1753, %v1913
      %v1915 = vpop.f32.mrb[0].mxu0
      %1916 = vmatprep.mubr.bf16.mxu0 0
      %1917 = vmatmul.mubr.bf16.gmra.mrb[0].mxu0 %v800
      %v1918 = vpop.f32.mrb[0].mxu0
      %v1919 = vadd.f32 %v1758, %v1918
      %v1920 = vpop.f32.mrb[0].mxu0
      %v1921 = vpop.f32.mrb[0].mxu0
      %v1922 = vadd.f32 %v1761, %v1921
      %v1923 = vpop.f32.mrb[0].mxu0
      %1924 = vmatprep.mubr.bf16.mxu0 0
      %1925 = vmatmul.mubr.bf16.gmra.mrb[0].mxu0 %v801
      %v1926 = vpop.f32.mrb[0].mxu0
      %v1927 = vadd.f32 %v1766, %v1926
      %v1928 = vpop.f32.mrb[0].mxu0
      %v1929 = vpop.f32.mrb[0].mxu0
      %v1930 = vadd.f32 %v1769, %v1929
      %v1931 = vpop.f32.mrb[0].mxu0
      %1932 = vmatprep.mubr.bf16.mxu0 0
      %1933 = vmatmul.mubr.bf16.gmra.mrb[0].mxu0 %v802
      %v1934 = vpop.f32.mrb[0].mxu0
      %v1935 = vadd.f32 %v1774, %v1934
      %v1936 = vpop.f32.mrb[0].mxu0
      %v1937 = vpop.f32.mrb[0].mxu0
      %v1938 = vadd.f32 %v1777, %v1937
      %v1939 = vpop.f32.mrb[0].mxu0
      %1940 = vmatprep.mubr.bf16.mxu0 0
      %1941 = vmatmul.mubr.bf16.gmra.mrb[0].mxu0 %v803
      %v1942 = vpop.f32.mrb[0].mxu0
      %v1943 = vadd.f32 %v1782, %v1942
      %v1944 = vpop.f32.mrb[0].mxu0
      %v1945 = vpop.f32.mrb[0].mxu0
      %v1946 = vadd.f32 %v1785, %v1945
      %v1947 = vpop.f32.mrb[0].mxu0
      %1948 = vmatprep.mubr.bf16.mxu0 0
      %1949 = vmatmul.mubr.bf16.gmra.mrb[0].mxu0 %v804
      %v1950 = vpop.f32.mrb[0].mxu0
      %v1951 = vadd.f32 %v1790, %v1950
      %v1952 = vpop.f32.mrb[0].mxu0
      %v1953 = vpop.f32.mrb[0].mxu0
      %v1954 = vadd.f32 %v1793, %v1953
      %v1955 = vpop.f32.mrb[0].mxu0
      %1956 = vmatprep.mubr.bf16.mxu0 0
      %1957 = vmatmul.mubr.bf16.gmra.mrb[0].mxu0 %v805
      %v1958 = vpop.f32.mrb[0].mxu0
      %v1959 = vadd.f32 %v1798, %v1958
      %v1960 = vpop.f32.mrb[0].mxu0
      %v1961 = vpop.f32.mrb[0].mxu0
      %v1962 = vadd.f32 %v1801, %v1961
      %v1963 = vpop.f32.mrb[0].mxu0
      %1964 = vmatprep.mubr.bf16.mxu0 0
      %1965 = vmatmul.mubr.bf16.gmra.mrb[0].mxu0 %v806
      %v1966 = vpop.f32.mrb[0].mxu0
      %v1967 = vadd.f32 %v1806, %v1966
      %v1968 = vpop.f32.mrb[0].mxu0
      %v1969 = vpop.f32.mrb[0].mxu0
      %v1970 = vadd.f32 %v1809, %v1969
      %v1971 = vpop.f32.mrb[0].mxu0
      %1972 = vmatprep.mubr.bf16.mxu0 0
      %1973 = vmatmul.mubr.bf16.gmra.mrb[0].mxu0 %v807
      %v1974 = vpop.f32.mrb[0].mxu0
      %v1975 = vadd.f32 %v1814, %v1974
      %v1976 = vpop.f32.mrb[0].mxu0
      %v1977 = vpop.f32.mrb[0].mxu0
      %v1978 = vadd.f32 %v1817, %v1977
      %v1979 = vpop.f32.mrb[0].mxu0
      %1980 = vdwg.mxu0
      %s1981 = scalar_lea.vmem [#allocation2], 48
      %v1982 = vld [vmem:[%s1981] sm:$0xff]
      %v1983 = vld [vmem:[%s1981 + $0x8] sm:$0xff]
      %v1984 = vld [vmem:[%s1981 + $0x18] sm:$0xff]
      %v1985 = vld [vmem:[%s1981 + $0x20] sm:$0xff]
      %v1986 = vld [vmem:[%s1981 + $0x30] sm:$0xff]
      %v1987 = vld [vmem:[%s1981 + $0x38] sm:$0xff]
      %v1988 = vld [vmem:[%s1981 + $0x48] sm:$0xff]
      %v1989 = vld [vmem:[%s1981 + $0x50] sm:$0xff]
      %v1990 = vld [vmem:[%s1981 + $0x60] sm:$0xff]
      %v1991 = vld [vmem:[%s1981 + $0x68] sm:$0xff]
      %v1992 = vld [vmem:[%s1981 + $0x78] sm:$0xff]
      %v1993 = vld [vmem:[%s1981 + $0x80] sm:$0xff]
      %v1994 = vld [vmem:[%s1981 + $0x90] sm:$0xff]
      %v1995 = vld [vmem:[%s1981 + $0x98] sm:$0xff]
      %v1996 = vld [vmem:[%s1981 + $0xa8] sm:$0xff]
      %v1997 = vld [vmem:[%s1981 + $0xb0] sm:$0xff]
      %v1998 = vld [vmem:[%s1981 + $0xc0] sm:$0xff]
      %v1999 = vld [vmem:[%s1981 + $0xc8] sm:$0xff]
      %v2000 = vld [vmem:[%s1981 + $0xd8] sm:$0xff]
      %v2001 = vld [vmem:[%s1981 + $0xe0] sm:$0xff]
      %v2002 = vld [vmem:[%s1981 + $0xf0] sm:$0xff]
      %v2003 = vld [vmem:[%s1981 + $0xf8] sm:$0xff]
      %v2004 = vld [vmem:[%s1981 + $0x108] sm:$0xff]
      %v2005 = vld [vmem:[%s1981 + $0x110] sm:$0xff]
      %v2006 = vld [vmem:[%s1981 + $0x120] sm:$0xff]
      %v2007 = vld [vmem:[%s1981 + $0x128] sm:$0xff]
      %v2008 = vld [vmem:[%s1981 + $0x138] sm:$0xff]
      %v2009 = vld [vmem:[%s1981 + $0x140] sm:$0xff]
      %v2010 = vld [vmem:[%s1981 + $0x150] sm:$0xff]
      %v2011 = vld [vmem:[%s1981 + $0x158] sm:$0xff]
      %v2012 = vld [vmem:[%s1981 + $0x168] sm:$0xff]
      %v2013 = vld [vmem:[%s1981 + $0x170] sm:$0xff]
      %v2014 = vpack.c.bf16 %v1983, %v1982
      %v2015 = vpack.c.bf16 %v1985, %v1984
      %v2016 = vpack.c.bf16 %v1987, %v1986
      %v2017 = vpack.c.bf16 %v1989, %v1988
      %v2018 = vpack.c.bf16 %v1991, %v1990
      %v2019 = vpack.c.bf16 %v1993, %v1992
      %v2020 = vpack.c.bf16 %v1995, %v1994
      %v2021 = vpack.c.bf16 %v1997, %v1996
      %v2022 = vpack.c.bf16 %v1999, %v1998
      %v2023 = vpack.c.bf16 %v2001, %v2000
      %v2024 = vpack.c.bf16 %v2003, %v2002
      %v2025 = vpack.c.bf16 %v2005, %v2004
      %v2026 = vpack.c.bf16 %v2007, %v2006
      %v2027 = vpack.c.bf16 %v2009, %v2008
      %v2028 = vpack.c.bf16 %v2011, %v2010
      %v2029 = vpack.c.bf16 %v2013, %v2012
      %v2030 = vld [vmem:[%s1981 + $0x1] sm:$0xff]
      %v2031 = vld [vmem:[%s1981 + $0x9] sm:$0xff]
      %v2032 = vld [vmem:[%s1981 + $0x19] sm:$0xff]
      %v2033 = vld [vmem:[%s1981 + $0x21] sm:$0xff]
      %v2034 = vld [vmem:[%s1981 + $0x31] sm:$0xff]
      %v2035 = vld [vmem:[%s1981 + $0x39] sm:$0xff]
      %v2036 = vld [vmem:[%s1981 + $0x49] sm:$0xff]
      %v2037 = vld [vmem:[%s1981 + $0x51] sm:$0xff]
      %v2038 = vld [vmem:[%s1981 + $0x61] sm:$0xff]
      %v2039 = vld [vmem:[%s1981 + $0x69] sm:$0xff]
      %v2040 = vld [vmem:[%s1981 + $0x79] sm:$0xff]
      %v2041 = vld [vmem:[%s1981 + $0x81] sm:$0xff]
      %v2042 = vld [vmem:[%s1981 + $0x91] sm:$0xff]
      %v2043 = vld [vmem:[%s1981 + $0x99] sm:$0xff]
      %v2044 = vld [vmem:[%s1981 + $0xa9] sm:$0xff]
      %v2045 = vld [vmem:[%s1981 + $0xb1] sm:$0xff]
      %v2046 = vld [vmem:[%s1981 + $0xc1] sm:$0xff]
      %v2047 = vld [vmem:[%s1981 + $0xc9] sm:$0xff]
      %v2048 = vld [vmem:[%s1981 + $0xd9] sm:$0xff]
      %v2049 = vld [vmem:[%s1981 + $0xe1] sm:$0xff]
      %v2050 = vld [vmem:[%s1981 + $0xf1] sm:$0xff]
      %v2051 = vld [vmem:[%s1981 + $0xf9] sm:$0xff]
      %v2052 = vld [vmem:[%s1981 + $0x109] sm:$0xff]
      %v2053 = vld [vmem:[%s1981 + $0x111] sm:$0xff]
      %v2054 = vld [vmem:[%s1981 + $0x121] sm:$0xff]
      %v2055 = vld [vmem:[%s1981 + $0x129] sm:$0xff]
      %v2056 = vld [vmem:[%s1981 + $0x139] sm:$0xff]
      %v2057 = vld [vmem:[%s1981 + $0x141] sm:$0xff]
      %v2058 = vld [vmem:[%s1981 + $0x151] sm:$0xff]
      %v2059 = vld [vmem:[%s1981 + $0x159] sm:$0xff]
      %v2060 = vld [vmem:[%s1981 + $0x169] sm:$0xff]
      %v2061 = vld [vmem:[%s1981 + $0x171] sm:$0xff]
      %v2062 = vpack.c.bf16 %v2031, %v2030
      %v2063 = vpack.c.bf16 %v2033, %v2032
      %v2064 = vpack.c.bf16 %v2035, %v2034
      %v2065 = vpack.c.bf16 %v2037, %v2036
      %v2066 = vpack.c.bf16 %v2039, %v2038
      %v2067 = vpack.c.bf16 %v2041, %v2040
      %v2068 = vpack.c.bf16 %v2043, %v2042
      %v2069 = vpack.c.bf16 %v2045, %v2044
      %v2070 = vpack.c.bf16 %v2047, %v2046
      %v2071 = vpack.c.bf16 %v2049, %v2048
      %v2072 = vpack.c.bf16 %v2051, %v2050
      %v2073 = vpack.c.bf16 %v2053, %v2052
      %v2074 = vpack.c.bf16 %v2055, %v2054
      %v2075 = vpack.c.bf16 %v2057, %v2056
      %v2076 = vpack.c.bf16 %v2059, %v2058
      %v2077 = vpack.c.bf16 %v2061, %v2060
      %v2078 = vld [vmem:[%s1981 + $0x2] sm:$0xff]
      %v2079 = vld [vmem:[%s1981 + $0xa] sm:$0xff]
      %v2080 = vld [vmem:[%s1981 + $0x1a] sm:$0xff]
      %v2081 = vld [vmem:[%s1981 + $0x22] sm:$0xff]
      %v2082 = vld [vmem:[%s1981 + $0x32] sm:$0xff]
      %v2083 = vld [vmem:[%s1981 + $0x3a] sm:$0xff]
      %v2084 = vld [vmem:[%s1981 + $0x4a] sm:$0xff]
      %v2085 = vld [vmem:[%s1981 + $0x52] sm:$0xff]
      %v2086 = vld [vmem:[%s1981 + $0x62] sm:$0xff]
      %v2087 = vld [vmem:[%s1981 + $0x6a] sm:$0xff]
      %v2088 = vld [vmem:[%s1981 + $0x7a] sm:$0xff]
      %v2089 = vld [vmem:[%s1981 + $0x82] sm:$0xff]
      %v2090 = vld [vmem:[%s1981 + $0x92] sm:$0xff]
      %v2091 = vld [vmem:[%s1981 + $0x9a] sm:$0xff]
      %v2092 = vld [vmem:[%s1981 + $0xaa] sm:$0xff]
      %v2093 = vld [vmem:[%s1981 + $0xb2] sm:$0xff]
      %v2094 = vld [vmem:[%s1981 + $0xc2] sm:$0xff]
      %v2095 = vld [vmem:[%s1981 + $0xca] sm:$0xff]
      %v2096 = vld [vmem:[%s1981 + $0xda] sm:$0xff]
      %v2097 = vld [vmem:[%s1981 + $0xe2] sm:$0xff]
      %v2098 = vld [vmem:[%s1981 + $0xf2] sm:$0xff]
      %v2099 = vld [vmem:[%s1981 + $0xfa] sm:$0xff]
      %v2100 = vld [vmem:[%s1981 + $0x10a] sm:$0xff]
      %v2101 = vld [vmem:[%s1981 + $0x112] sm:$0xff]
      %v2102 = vld [vmem:[%s1981 + $0x122] sm:$0xff]
      %v2103 = vld [vmem:[%s1981 + $0x12a] sm:$0xff]
      %v2104 = vld [vmem:[%s1981 + $0x13a] sm:$0xff]
      %v2105 = vld [vmem:[%s1981 + $0x142] sm:$0xff]
      %v2106 = vld [vmem:[%s1981 + $0x152] sm:$0xff]
      %v2107 = vld [vmem:[%s1981 + $0x15a] sm:$0xff]
      %v2108 = vld [vmem:[%s1981 + $0x16a] sm:$0xff]
      %v2109 = vld [vmem:[%s1981 + $0x172] sm:$0xff]
      %v2110 = vpack.c.bf16 %v2079, %v2078
      %v2111 = vpack.c.bf16 %v2081, %v2080
      %v2112 = vpack.c.bf16 %v2083, %v2082
      %v2113 = vpack.c.bf16 %v2085, %v2084
      %v2114 = vpack.c.bf16 %v2087, %v2086
      %v2115 = vpack.c.bf16 %v2089, %v2088
      %v2116 = vpack.c.bf16 %v2091, %v2090
      %v2117 = vpack.c.bf16 %v2093, %v2092
      %v2118 = vpack.c.bf16 %v2095, %v2094
      %v2119 = vpack.c.bf16 %v2097, %v2096
      %v2120 = vpack.c.bf16 %v2099, %v2098
      %v2121 = vpack.c.bf16 %v2101, %v2100
      %v2122 = vpack.c.bf16 %v2103, %v2102
      %v2123 = vpack.c.bf16 %v2105, %v2104
      %v2124 = vpack.c.bf16 %v2107, %v2106
      %v2125 = vpack.c.bf16 %v2109, %v2108
      %s2126 = scalar_lea.vmem %s2, 384
      %v2127 = vld [vmem:[%s2126] sm:$0xf]
      %v2128 = vld [vmem:[%s2126 + $0x4] sm:$0xf]
      %v2129 = vld [vmem:[%s2126 + $0x8] sm:$0xf]
      %v2130 = vld [vmem:[%s2126 + $0xc] sm:$0xf]
      %v2131 = vld [vmem:[%s2126 + $0x10] sm:$0xf]
      %v2132 = vld [vmem:[%s2126 + $0x14] sm:$0xf]
      %v2133 = vld [vmem:[%s2126 + $0x18] sm:$0xf]
      %v2134 = vld [vmem:[%s2126 + $0x1c] sm:$0xf]
      %v2135 = vld [vmem:[%s2126 + $0x20] sm:$0xf]
      %v2136 = vld [vmem:[%s2126 + $0x24] sm:$0xf]
      %v2137 = vld [vmem:[%s2126 + $0x28] sm:$0xf]
      %v2138 = vld [vmem:[%s2126 + $0x2c] sm:$0xf]
      %v2139 = vld [vmem:[%s2126 + $0x30] sm:$0xf]
      %v2140 = vld [vmem:[%s2126 + $0x34] sm:$0xf]
      %v2141 = vld [vmem:[%s2126 + $0x38] sm:$0xf]
      %v2142 = vld [vmem:[%s2126 + $0x3c] sm:$0xf]
      %v2143 = vld [vmem:[%s2126 + $0x40] sm:$0xf]
      %v2144 = vld [vmem:[%s2126 + $0x44] sm:$0xf]
      %v2145 = vld [vmem:[%s2126 + $0x48] sm:$0xf]
      %v2146 = vld [vmem:[%s2126 + $0x4c] sm:$0xf]
      %v2147 = vld [vmem:[%s2126 + $0x50] sm:$0xf]
      %v2148 = vld [vmem:[%s2126 + $0x54] sm:$0xf]
      %v2149 = vld [vmem:[%s2126 + $0x58] sm:$0xf]
      %v2150 = vld [vmem:[%s2126 + $0x5c] sm:$0xf]
      %v2151 = vld [vmem:[%s2126 + $0x60] sm:$0xf]
      %v2152 = vld [vmem:[%s2126 + $0x64] sm:$0xf]
      %v2153 = vld [vmem:[%s2126 + $0x68] sm:$0xf]
      %v2154 = vld [vmem:[%s2126 + $0x6c] sm:$0xf]
      %v2155 = vld [vmem:[%s2126 + $0x70] sm:$0xf]
      %v2156 = vld [vmem:[%s2126 + $0x74] sm:$0xf]
      %v2157 = vld [vmem:[%s2126 + $0x78] sm:$0xf]
      %v2158 = vld [vmem:[%s2126 + $0x7c] sm:$0xf]
      %v2159 = vld [vmem:[%s2126 + $0x80] sm:$0xf]
      %v2160 = vld [vmem:[%s2126 + $0x84] sm:$0xf]
      %v2161 = vld [vmem:[%s2126 + $0x88] sm:$0xf]
      %v2162 = vld [vmem:[%s2126 + $0x8c] sm:$0xf]
      %v2163 = vld [vmem:[%s2126 + $0x90] sm:$0xf]
      %v2164 = vld [vmem:[%s2126 + $0x94] sm:$0xf]
      %v2165 = vld [vmem:[%s2126 + $0x98] sm:$0xf]
      %v2166 = vld [vmem:[%s2126 + $0x9c] sm:$0xf]
      %v2167 = vld [vmem:[%s2126 + $0xa0] sm:$0xf]
      %v2168 = vld [vmem:[%s2126 + $0xa4] sm:$0xf]
      %v2169 = vld [vmem:[%s2126 + $0xa8] sm:$0xf]
      %v2170 = vld [vmem:[%s2126 + $0xac] sm:$0xf]
      %v2171 = vld [vmem:[%s2126 + $0xb0] sm:$0xf]
      %v2172 = vld [vmem:[%s2126 + $0xb4] sm:$0xf]
      %v2173 = vld [vmem:[%s2126 + $0xb8] sm:$0xf]
      %v2174 = vld [vmem:[%s2126 + $0xbc] sm:$0xf]
      %v2223 = vunpack.c.l.b16 %v2127
      %v2224 = vunpack.c.l.b16 %v2128
      %v2225 = vunpack.c.l.b16 %v2129
      %v2226 = vunpack.c.l.b16 %v2130
      %v2227 = vunpack.c.l.b16 %v2131
      %v2228 = vunpack.c.l.b16 %v2132
      %v2229 = vunpack.c.l.b16 %v2133
      %v2230 = vunpack.c.l.b16 %v2134
      %v2231 = vunpack.c.l.b16 %v2135
      %v2232 = vunpack.c.l.b16 %v2136
      %v2233 = vunpack.c.l.b16 %v2137
      %v2234 = vunpack.c.l.b16 %v2138
      %v2235 = vunpack.c.l.b16 %v2139
      %v2236 = vunpack.c.l.b16 %v2140
      %v2237 = vunpack.c.l.b16 %v2141
      %v2238 = vunpack.c.l.b16 %v2142
      %v2239 = vunpack.c.l.b16 %v2143
      %v2240 = vunpack.c.l.b16 %v2144
      %v2241 = vunpack.c.l.b16 %v2145
      %v2242 = vunpack.c.l.b16 %v2146
      %v2243 = vunpack.c.l.b16 %v2147
      %v2244 = vunpack.c.l.b16 %v2148
      %v2245 = vunpack.c.l.b16 %v2149
      %v2246 = vunpack.c.l.b16 %v2150
      %v2247 = vunpack.c.l.b16 %v2151
      %v2248 = vunpack.c.l.b16 %v2152
      %v2249 = vunpack.c.l.b16 %v2153
      %v2250 = vunpack.c.l.b16 %v2154
      %v2251 = vunpack.c.l.b16 %v2155
      %v2252 = vunpack.c.l.b16 %v2156
      %v2253 = vunpack.c.l.b16 %v2157
      %v2254 = vunpack.c.l.b16 %v2158
      %v2255 = vunpack.c.l.b16 %v2159
      %v2256 = vunpack.c.l.b16 %v2160
      %v2257 = vunpack.c.l.b16 %v2161
      %v2258 = vunpack.c.l.b16 %v2162
      %v2259 = vunpack.c.l.b16 %v2163
      %v2260 = vunpack.c.l.b16 %v2164
      %v2261 = vunpack.c.l.b16 %v2165
      %v2262 = vunpack.c.l.b16 %v2166
      %v2263 = vunpack.c.l.b16 %v2167
      %v2264 = vunpack.c.l.b16 %v2168
      %v2265 = vunpack.c.l.b16 %v2169
      %v2266 = vunpack.c.l.b16 %v2170
      %v2267 = vunpack.c.l.b16 %v2171
      %v2268 = vunpack.c.l.b16 %v2172
      %v2269 = vunpack.c.l.b16 %v2173
      %v2270 = vunpack.c.l.b16 %v2174
      %v2271 = vpack.c.b16 %v2224, %v2223
      %v2272 = vpack.c.b16 %v2226, %v2225
      %v2273 = vpack.c.b16 %v2228, %v2227
      %v2274 = vpack.c.b16 %v2230, %v2229
      %v2275 = vpack.c.b16 %v2232, %v2231
      %v2276 = vpack.c.b16 %v2234, %v2233
      %v2277 = vpack.c.b16 %v2236, %v2235
      %v2278 = vpack.c.b16 %v2238, %v2237
      %v2279 = vpack.c.b16 %v2240, %v2239
      %v2280 = vpack.c.b16 %v2242, %v2241
      %v2281 = vpack.c.b16 %v2244, %v2243
      %v2282 = vpack.c.b16 %v2246, %v2245
      %v2283 = vpack.c.b16 %v2248, %v2247
      %v2284 = vpack.c.b16 %v2250, %v2249
      %v2285 = vpack.c.b16 %v2252, %v2251
      %v2286 = vpack.c.b16 %v2254, %v2253
      %v2287 = vpack.c.b16 %v2256, %v2255
      %v2288 = vpack.c.b16 %v2258, %v2257
      %v2289 = vpack.c.b16 %v2260, %v2259
      %v2290 = vpack.c.b16 %v2262, %v2261
      %v2291 = vpack.c.b16 %v2264, %v2263
      %v2292 = vpack.c.b16 %v2266, %v2265
      %v2293 = vpack.c.b16 %v2268, %v2267
      %v2294 = vpack.c.b16 %v2270, %v2269
      %2319 = vmatprep.subr.bf16.mxu0 0
      %2320 = vmatpush1.bf16.msra.mxu0 %v2271
      %2321 = vmatprep.subr.bf16.mxu0 0
      %2322 = vmatpush1.bf16.msra.mxu0 %v2272
      %2323 = vmatprep.subr.bf16.mxu0 0
      %2324 = vmatpush1.bf16.msra.mxu0 %v2273
      %2325 = vmatprep.subr.bf16.mxu0 0
      %2326 = vmatpush1.bf16.msra.mxu0 %v2274
      %2327 = vmatprep.subr.bf16.mxu0 0
      %2328 = vmatpush1.bf16.msra.mxu0 %v2275
      %2329 = vmatprep.subr.bf16.mxu0 0
      %2330 = vmatpush1.bf16.msra.mxu0 %v2276
      %2331 = vmatprep.subr.bf16.mxu0 0
      %2332 = vmatpush1.bf16.msra.mxu0 %v2277
      %2333 = vmatprep.subr.bf16.mxu0 0
      %2334 = vmatpush1.bf16.msra.mxu0 %v2278
      %2335 = vmatprep.subr.bf16.mxu0 0
      %2336 = vmatpush1.bf16.msra.mxu0 %v2279
      %2337 = vmatprep.subr.bf16.mxu0 0
      %2338 = vmatpush1.bf16.msra.mxu0 %v2280
      %2339 = vmatprep.subr.bf16.mxu0 0
      %2340 = vmatpush1.bf16.msra.mxu0 %v2281
      %2341 = vmatprep.subr.bf16.mxu0 0
      %2342 = vmatpush1.bf16.msra.mxu0 %v2282
      %2343 = vmatprep.subr.bf16.mxu0 0
      %2344 = vmatpush1.bf16.msra.mxu0 %v2283
      %2345 = vmatprep.subr.bf16.mxu0 0
      %2346 = vmatpush1.bf16.msra.mxu0 %v2284
      %2347 = vmatprep.subr.bf16.mxu0 0
      %2348 = vmatpush1.bf16.msra.mxu0 %v2285
      %2349 = vmatprep.subr.bf16.mxu0 0
      %2350 = vmatpush1.bf16.msra.mxu0 %v2286
      %2351 = vmatprep.mubr.bf16.mxu0 %v2062
      %2352 = vmatmul.mubr.bf16.gmra.mrb[0].mxu0 %v2014
      %v2353 = vpop.f32.mrb[0].mxu0
      %v2354 = vadd.f32 0.0, %v2353
      %v2355 = vpop.f32.mrb[0].mxu0
      %v2356 = vpop.f32.mrb[0].mxu0
      %v2357 = vadd.f32 0.0, %v2356
      %v2358 = vpop.f32.mrb[0].mxu0
      %2359 = vmatprep.mubr.bf16.mxu0 %v2063
      %2360 = vmatmul.mubr.bf16.gmra.mrb[0].mxu0 %v2015
      %v2361 = vpop.f32.mrb[0].mxu0
      %v2362 = vadd.f32 0.0, %v2361
      %v2363 = vpop.f32.mrb[0].mxu0
      %v2364 = vpop.f32.mrb[0].mxu0
      %v2365 = vadd.f32 0.0, %v2364
      %v2366 = vpop.f32.mrb[0].mxu0
      %2367 = vmatprep.mubr.bf16.mxu0 %v2064
      %2368 = vmatmul.mubr.bf16.gmra.mrb[0].mxu0 %v2016
      %v2369 = vpop.f32.mrb[0].mxu0
      %v2370 = vadd.f32 0.0, %v2369
      %v2371 = vpop.f32.mrb[0].mxu0
      %v2372 = vpop.f32.mrb[0].mxu0
      %v2373 = vadd.f32 0.0, %v2372
      %v2374 = vpop.f32.mrb[0].mxu0
      %2375 = vmatprep.mubr.bf16.mxu0 %v2065
      %2376 = vmatmul.mubr.bf16.gmra.mrb[0].mxu0 %v2017
      %v2377 = vpop.f32.mrb[0].mxu0
      %v2378 = vadd.f32 0.0, %v2377
      %v2379 = vpop.f32.mrb[0].mxu0
      %v2380 = vpop.f32.mrb[0].mxu0
      %v2381 = vadd.f32 0.0, %v2380
      %v2382 = vpop.f32.mrb[0].mxu0
      %2383 = vmatprep.mubr.bf16.mxu0 %v2066
      %2384 = vmatmul.mubr.bf16.gmra.mrb[0].mxu0 %v2018
      %v2385 = vpop.f32.mrb[0].mxu0
      %v2386 = vadd.f32 0.0, %v2385
      %v2387 = vpop.f32.mrb[0].mxu0
      %v2388 = vpop.f32.mrb[0].mxu0
      %v2389 = vadd.f32 0.0, %v2388
      %v2390 = vpop.f32.mrb[0].mxu0
      %2391 = vmatprep.mubr.bf16.mxu0 %v2067
      %2392 = vmatmul.mubr.bf16.gmra.mrb[0].mxu0 %v2019
      %v2393 = vpop.f32.mrb[0].mxu0
      %v2394 = vadd.f32 0.0, %v2393
      %v2395 = vpop.f32.mrb[0].mxu0
      %v2396 = vpop.f32.mrb[0].mxu0
      %v2397 = vadd.f32 0.0, %v2396
      %v2398 = vpop.f32.mrb[0].mxu0
      %2399 = vmatprep.mubr.bf16.mxu0 %v2068
      %2400 = vmatmul.mubr.bf16.gmra.mrb[0].mxu0 %v2020
      %v2401 = vpop.f32.mrb[0].mxu0
      %v2402 = vadd.f32 0.0, %v2401
      %v2403 = vpop.f32.mrb[0].mxu0
      %v2404 = vpop.f32.mrb[0].mxu0
      %v2405 = vadd.f32 0.0, %v2404
      %v2406 = vpop.f32.mrb[0].mxu0
      %2407 = vmatprep.mubr.bf16.mxu0 %v2069
      %2408 = vmatmul.mubr.bf16.gmra.mrb[0].mxu0 %v2021
      %v2409 = vpop.f32.mrb[0].mxu0
      %v2410 = vadd.f32 0.0, %v2409
      %v2411 = vpop.f32.mrb[0].mxu0
      %v2412 = vpop.f32.mrb[0].mxu0
      %v2413 = vadd.f32 0.0, %v2412
      %v2414 = vpop.f32.mrb[0].mxu0
      %2415 = vmatprep.mubr.bf16.mxu0 %v2070
      %2416 = vmatmul.mubr.bf16.gmra.mrb[0].mxu0 %v2022
      %v2417 = vpop.f32.mrb[0].mxu0
      %v2418 = vadd.f32 0.0, %v2417
      %v2419 = vpop.f32.mrb[0].mxu0
      %v2420 = vpop.f32.mrb[0].mxu0
      %v2421 = vadd.f32 0.0, %v2420
      %v2422 = vpop.f32.mrb[0].mxu0
      %2423 = vmatprep.mubr.bf16.mxu0 %v2071
      %2424 = vmatmul.mubr.bf16.gmra.mrb[0].mxu0 %v2023
      %v2425 = vpop.f32.mrb[0].mxu0
      %v2426 = vadd.f32 0.0, %v2425
      %v2427 = vpop.f32.mrb[0].mxu0
      %v2428 = vpop.f32.mrb[0].mxu0
      %v2429 = vadd.f32 0.0, %v2428
      %v2430 = vpop.f32.mrb[0].mxu0
      %2431 = vmatprep.mubr.bf16.mxu0 %v2072
      %2432 = vmatmul.mubr.bf16.gmra.mrb[0].mxu0 %v2024
      %v2433 = vpop.f32.mrb[0].mxu0
      %v2434 = vadd.f32 0.0, %v2433
      %v2435 = vpop.f32.mrb[0].mxu0
      %v2436 = vpop.f32.mrb[0].mxu0
      %v2437 = vadd.f32 0.0, %v2436
      %v2438 = vpop.f32.mrb[0].mxu0
      %2439 = vmatprep.mubr.bf16.mxu0 %v2073
      %2440 = vmatmul.mubr.bf16.gmra.mrb[0].mxu0 %v2025
      %v2441 = vpop.f32.mrb[0].mxu0
      %v2442 = vadd.f32 0.0, %v2441
      %v2443 = vpop.f32.mrb[0].mxu0
      %v2444 = vpop.f32.mrb[0].mxu0
      %v2445 = vadd.f32 0.0, %v2444
      %v2446 = vpop.f32.mrb[0].mxu0
      %2447 = vmatprep.mubr.bf16.mxu0 %v2074
      %2448 = vmatmul.mubr.bf16.gmra.mrb[0].mxu0 %v2026
      %v2449 = vpop.f32.mrb[0].mxu0
      %v2450 = vadd.f32 0.0, %v2449
      %v2451 = vpop.f32.mrb[0].mxu0
      %v2452 = vpop.f32.mrb[0].mxu0
      %v2453 = vadd.f32 0.0, %v2452
      %v2454 = vpop.f32.mrb[0].mxu0
      %2455 = vmatprep.mubr.bf16.mxu0 %v2075
      %2456 = vmatmul.mubr.bf16.gmra.mrb[0].mxu0 %v2027
      %v2457 = vpop.f32.mrb[0].mxu0
      %v2458 = vadd.f32 0.0, %v2457
      %v2459 = vpop.f32.mrb[0].mxu0
      %v2460 = vpop.f32.mrb[0].mxu0
      %v2461 = vadd.f32 0.0, %v2460
      %v2462 = vpop.f32.mrb[0].mxu0
      %2463 = vmatprep.mubr.bf16.mxu0 %v2076
      %2464 = vmatmul.mubr.bf16.gmra.mrb[0].mxu0 %v2028
      %v2465 = vpop.f32.mrb[0].mxu0
      %v2466 = vadd.f32 0.0, %v2465
      %v2467 = vpop.f32.mrb[0].mxu0
      %v2468 = vpop.f32.mrb[0].mxu0
      %v2469 = vadd.f32 0.0, %v2468
      %v2470 = vpop.f32.mrb[0].mxu0
      %2471 = vmatprep.mubr.bf16.mxu0 %v2077
      %2472 = vmatmul.mubr.bf16.gmra.mrb[0].mxu0 %v2029
      %v2473 = vpop.f32.mrb[0].mxu0
      %v2474 = vadd.f32 0.0, %v2473
      %v2475 = vpop.f32.mrb[0].mxu0
      %v2476 = vpop.f32.mrb[0].mxu0
      %v2477 = vadd.f32 0.0, %v2476
      %v2478 = vpop.f32.mrb[0].mxu0
      %2479 = vdwg.mxu0
      %2480 = vmatprep.subr.bf16.mxu0 0
      %2481 = vmatpush1.bf16.msra.mxu0 %v2287
      %2482 = vmatprep.subr.bf16.mxu0 0
      %2483 = vmatpush1.bf16.msra.mxu0 %v2288
      %2484 = vmatprep.subr.bf16.mxu0 0
      %2485 = vmatpush1.bf16.msra.mxu0 %v2289
      %2486 = vmatprep.subr.bf16.mxu0 0
      %2487 = vmatpush1.bf16.msra.mxu0 %v2290
      %2488 = vmatprep.subr.bf16.mxu0 0
      %2489 = vmatpush1.bf16.msra.mxu0 %v2291
      %2490 = vmatprep.subr.bf16.mxu0 0
      %2491 = vmatpush1.bf16.msra.mxu0 %v2292
      %2492 = vmatprep.subr.bf16.mxu0 0
      %2493 = vmatpush1.bf16.msra.mxu0 %v2293
      %2494 = vmatprep.subr.bf16.mxu0 0
      %2495 = vmatpush1.bf16.msra.mxu0 %v2294
      %2496 = vmatprep.subr.bf16.mxu0 0
      %2497 = vmatpush1.bf16.msra.mxu0 0
      %2498 = vmatprep.subr.bf16.mxu0 0
      %2499 = vmatpush1.bf16.msra.mxu0 0
      %2500 = vmatprep.subr.bf16.mxu0 0
      %2501 = vmatpush1.bf16.msra.mxu0 0
      %2502 = vmatprep.subr.bf16.mxu0 0
      %2503 = vmatpush1.bf16.msra.mxu0 0
      %2504 = vmatprep.subr.bf16.mxu0 0
      %2505 = vmatpush1.bf16.msra.mxu0 0
      %2506 = vmatprep.subr.bf16.mxu0 0
      %2507 = vmatpush1.bf16.msra.mxu0 0
      %2508 = vmatprep.subr.bf16.mxu0 0
      %2509 = vmatpush1.bf16.msra.mxu0 0
      %2510 = vmatprep.subr.bf16.mxu0 0
      %2511 = vmatpush1.bf16.msra.mxu0 0
      %2512 = vmatprep.mubr.bf16.mxu0 0
      %2513 = vmatmul.mubr.bf16.gmra.mrb[0].mxu0 %v2110
      %v2514 = vpop.f32.mrb[0].mxu0
      %v2515 = vadd.f32 %v2354, %v2514
      %v2516 = vpop.f32.mrb[0].mxu0
      %v2517 = vpop.f32.mrb[0].mxu0
      %v2518 = vadd.f32 %v2357, %v2517
      %v2519 = vpop.f32.mrb[0].mxu0
      %2520 = vmatprep.mubr.bf16.mxu0 0
      %2521 = vmatmul.mubr.bf16.gmra.mrb[0].mxu0 %v2111
      %v2522 = vpop.f32.mrb[0].mxu0
      %v2523 = vadd.f32 %v2362, %v2522
      %v2524 = vpop.f32.mrb[0].mxu0
      %v2525 = vpop.f32.mrb[0].mxu0
      %v2526 = vadd.f32 %v2365, %v2525
      %v2527 = vpop.f32.mrb[0].mxu0
      %2528 = vmatprep.mubr.bf16.mxu0 0
      %2529 = vmatmul.mubr.bf16.gmra.mrb[0].mxu0 %v2112
      %v2530 = vpop.f32.mrb[0].mxu0
      %v2531 = vadd.f32 %v2370, %v2530
      %v2532 = vpop.f32.mrb[0].mxu0
      %v2533 = vpop.f32.mrb[0].mxu0
      %v2534 = vadd.f32 %v2373, %v2533
      %v2535 = vpop.f32.mrb[0].mxu0
      %2536 = vmatprep.mubr.bf16.mxu0 0
      %2537 = vmatmul.mubr.bf16.gmra.mrb[0].mxu0 %v2113
      %v2538 = vpop.f32.mrb[0].mxu0
      %v2539 = vadd.f32 %v2378, %v2538
      %v2540 = vpop.f32.mrb[0].mxu0
      %v2541 = vpop.f32.mrb[0].mxu0
      %v2542 = vadd.f32 %v2381, %v2541
      %v2543 = vpop.f32.mrb[0].mxu0
      %2544 = vmatprep.mubr.bf16.mxu0 0
      %2545 = vmatmul.mubr.bf16.gmra.mrb[0].mxu0 %v2114
      %v2546 = vpop.f32.mrb[0].mxu0
      %v2547 = vadd.f32 %v2386, %v2546
      %v2548 = vpop.f32.mrb[0].mxu0
      %v2549 = vpop.f32.mrb[0].mxu0
      %v2550 = vadd.f32 %v2389, %v2549
      %v2551 = vpop.f32.mrb[0].mxu0
      %2552 = vmatprep.mubr.bf16.mxu0 0
      %2553 = vmatmul.mubr.bf16.gmra.mrb[0].mxu0 %v2115
      %v2554 = vpop.f32.mrb[0].mxu0
      %v2555 = vadd.f32 %v2394, %v2554
      %v2556 = vpop.f32.mrb[0].mxu0
      %v2557 = vpop.f32.mrb[0].mxu0
      %v2558 = vadd.f32 %v2397, %v2557
      %v2559 = vpop.f32.mrb[0].mxu0
      %2560 = vmatprep.mubr.bf16.mxu0 0
      %2561 = vmatmul.mubr.bf16.gmra.mrb[0].mxu0 %v2116
      %v2562 = vpop.f32.mrb[0].mxu0
      %v2563 = vadd.f32 %v2402, %v2562
      %v2564 = vpop.f32.mrb[0].mxu0
      %v2565 = vpop.f32.mrb[0].mxu0
      %v2566 = vadd.f32 %v2405, %v2565
      %v2567 = vpop.f32.mrb[0].mxu0
      %2568 = vmatprep.mubr.bf16.mxu0 0
      %2569 = vmatmul.mubr.bf16.gmra.mrb[0].mxu0 %v2117
      %v2570 = vpop.f32.mrb[0].mxu0
      %v2571 = vadd.f32 %v2410, %v2570
      %v2572 = vpop.f32.mrb[0].mxu0
      %v2573 = vpop.f32.mrb[0].mxu0
      %v2574 = vadd.f32 %v2413, %v2573
      %v2575 = vpop.f32.mrb[0].mxu0
      %2576 = vmatprep.mubr.bf16.mxu0 0
      %2577 = vmatmul.mubr.bf16.gmra.mrb[0].mxu0 %v2118
      %v2578 = vpop.f32.mrb[0].mxu0
      %v2579 = vadd.f32 %v2418, %v2578
      %v2580 = vpop.f32.mrb[0].mxu0
      %v2581 = vpop.f32.mrb[0].mxu0
      %v2582 = vadd.f32 %v2421, %v2581
      %v2583 = vpop.f32.mrb[0].mxu0
      %2584 = vmatprep.mubr.bf16.mxu0 0
      %2585 = vmatmul.mubr.bf16.gmra.mrb[0].mxu0 %v2119
      %v2586 = vpop.f32.mrb[0].mxu0
      %v2587 = vadd.f32 %v2426, %v2586
      %v2588 = vpop.f32.mrb[0].mxu0
      %v2589 = vpop.f32.mrb[0].mxu0
      %v2590 = vadd.f32 %v2429, %v2589
      %v2591 = vpop.f32.mrb[0].mxu0
      %2592 = vmatprep.mubr.bf16.mxu0 0
      %2593 = vmatmul.mubr.bf16.gmra.mrb[0].mxu0 %v2120
      %v2594 = vpop.f32.mrb[0].mxu0
      %v2595 = vadd.f32 %v2434, %v2594
      %v2596 = vpop.f32.mrb[0].mxu0
      %v2597 = vpop.f32.mrb[0].mxu0
      %v2598 = vadd.f32 %v2437, %v2597
      %v2599 = vpop.f32.mrb[0].mxu0
      %2600 = vmatprep.mubr.bf16.mxu0 0
      %2601 = vmatmul.mubr.bf16.gmra.mrb[0].mxu0 %v2121
      %v2602 = vpop.f32.mrb[0].mxu0
      %v2603 = vadd.f32 %v2442, %v2602
      %v2604 = vpop.f32.mrb[0].mxu0
      %v2605 = vpop.f32.mrb[0].mxu0
      %v2606 = vadd.f32 %v2445, %v2605
      %v2607 = vpop.f32.mrb[0].mxu0
      %2608 = vmatprep.mubr.bf16.mxu0 0
      %2609 = vmatmul.mubr.bf16.gmra.mrb[0].mxu0 %v2122
      %v2610 = vpop.f32.mrb[0].mxu0
      %v2611 = vadd.f32 %v2450, %v2610
      %v2612 = vpop.f32.mrb[0].mxu0
      %v2613 = vpop.f32.mrb[0].mxu0
      %v2614 = vadd.f32 %v2453, %v2613
      %v2615 = vpop.f32.mrb[0].mxu0
      %2616 = vmatprep.mubr.bf16.mxu0 0
      %2617 = vmatmul.mubr.bf16.gmra.mrb[0].mxu0 %v2123
      %v2618 = vpop.f32.mrb[0].mxu0
      %v2619 = vadd.f32 %v2458, %v2618
      %v2620 = vpop.f32.mrb[0].mxu0
      %v2621 = vpop.f32.mrb[0].mxu0
      %v2622 = vadd.f32 %v2461, %v2621
      %v2623 = vpop.f32.mrb[0].mxu0
      %2624 = vmatprep.mubr.bf16.mxu0 0
      %2625 = vmatmul.mubr.bf16.gmra.mrb[0].mxu0 %v2124
      %v2626 = vpop.f32.mrb[0].mxu0
      %v2627 = vadd.f32 %v2466, %v2626
      %v2628 = vpop.f32.mrb[0].mxu0
      %v2629 = vpop.f32.mrb[0].mxu0
      %v2630 = vadd.f32 %v2469, %v2629
      %v2631 = vpop.f32.mrb[0].mxu0
      %2632 = vmatprep.mubr.bf16.mxu0 0
      %2633 = vmatmul.mubr.bf16.gmra.mrb[0].mxu0 %v2125
      %v2634 = vpop.f32.mrb[0].mxu0
      %v2635 = vadd.f32 %v2474, %v2634
      %v2636 = vpop.f32.mrb[0].mxu0
      %v2637 = vpop.f32.mrb[0].mxu0
      %v2638 = vadd.f32 %v2477, %v2637
      %v2639 = vpop.f32.mrb[0].mxu0
      %2640 = vdwg.mxu0
      %v2641 = vadd.f32 %v1855, %v2515
      %v2642 = vadd.f32 %v1858, %v2518
      %v2643 = vadd.f32 %v1863, %v2523
      %v2644 = vadd.f32 %v1866, %v2526
      %v2645 = vadd.f32 %v1871, %v2531
      %v2646 = vadd.f32 %v1874, %v2534
      %v2647 = vadd.f32 %v1879, %v2539
      %v2648 = vadd.f32 %v1882, %v2542
      %v2649 = vadd.f32 %v1887, %v2547
      %v2650 = vadd.f32 %v1890, %v2550
      %v2651 = vadd.f32 %v1895, %v2555
      %v2652 = vadd.f32 %v1898, %v2558
      %v2653 = vadd.f32 %v1903, %v2563
      %v2654 = vadd.f32 %v1906, %v2566
      %v2655 = vadd.f32 %v1911, %v2571
      %v2656 = vadd.f32 %v1914, %v2574
      %v2657 = vadd.f32 %v1919, %v2579
      %v2658 = vadd.f32 %v1922, %v2582
      %v2659 = vadd.f32 %v1927, %v2587
      %v2660 = vadd.f32 %v1930, %v2590
      %v2661 = vadd.f32 %v1935, %v2595
      %v2662 = vadd.f32 %v1938, %v2598
      %v2663 = vadd.f32 %v1943, %v2603
      %v2664 = vadd.f32 %v1946, %v2606
      %v2665 = vadd.f32 %v1951, %v2611
      %v2666 = vadd.f32 %v1954, %v2614
      %v2667 = vadd.f32 %v1959, %v2619
      %v2668 = vadd.f32 %v1962, %v2622
      %v2669 = vadd.f32 %v1967, %v2627
      %v2670 = vadd.f32 %v1970, %v2630
      %v2671 = vadd.f32 %v1975, %v2635
      %v2672 = vadd.f32 %v1978, %v2638
      %vm2673 = vcmp.gt.f32.partialorder %v2641, 0.0
      %vm2674 = vcmp.gt.f32.partialorder %v2642, 0.0
      %vm2675 = vcmp.gt.f32.partialorder %v2643, 0.0
      %vm2676 = vcmp.gt.f32.partialorder %v2644, 0.0
      %vm2677 = vcmp.gt.f32.partialorder %v2645, 0.0
      %vm2678 = vcmp.gt.f32.partialorder %v2646, 0.0
      %vm2679 = vcmp.gt.f32.partialorder %v2647, 0.0
      %vm2680 = vcmp.gt.f32.partialorder %v2648, 0.0
      %vm2681 = vcmp.gt.f32.partialorder %v2649, 0.0
      %vm2682 = vcmp.gt.f32.partialorder %v2650, 0.0
      %vm2683 = vcmp.gt.f32.partialorder %v2651, 0.0
      %vm2684 = vcmp.gt.f32.partialorder %v2652, 0.0
      %vm2685 = vcmp.gt.f32.partialorder %v2653, 0.0
      %vm2686 = vcmp.gt.f32.partialorder %v2654, 0.0
      %vm2687 = vcmp.gt.f32.partialorder %v2655, 0.0
      %vm2688 = vcmp.gt.f32.partialorder %v2656, 0.0
      %vm2689 = vcmp.gt.f32.partialorder %v2657, 0.0
      %vm2690 = vcmp.gt.f32.partialorder %v2658, 0.0
      %vm2691 = vcmp.gt.f32.partialorder %v2659, 0.0
      %vm2692 = vcmp.gt.f32.partialorder %v2660, 0.0
      %vm2693 = vcmp.gt.f32.partialorder %v2661, 0.0
      %vm2694 = vcmp.gt.f32.partialorder %v2662, 0.0
      %vm2695 = vcmp.gt.f32.partialorder %v2663, 0.0
      %vm2696 = vcmp.gt.f32.partialorder %v2664, 0.0
      %vm2697 = vcmp.gt.f32.partialorder %v2665, 0.0
      %vm2698 = vcmp.gt.f32.partialorder %v2666, 0.0
      %vm2699 = vcmp.gt.f32.partialorder %v2667, 0.0
      %vm2700 = vcmp.gt.f32.partialorder %v2668, 0.0
      %vm2701 = vcmp.gt.f32.partialorder %v2669, 0.0
      %vm2702 = vcmp.gt.f32.partialorder %v2670, 0.0
      %vm2703 = vcmp.gt.f32.partialorder %v2671, 0.0
      %vm2704 = vcmp.gt.f32.partialorder %v2672, 0.0
      %v2705 = vld [vmem:[%s7] sm:$0x1]
      %v2707 = vlaneseq
      %v2708 = vshrl.u32 %v2707, 7
      %v2709 = vsub.s32 0, %v2708
      %v2710 = vrot.slane %v2705, %v2709
      %v2712 = vmul.f32 %v2641, %v2710
      %v2713 = vmul.f32 %v2642, %v2710
      %v2714 = vmul.f32 %v2643, %v2710
      %v2715 = vmul.f32 %v2644, %v2710
      %v2716 = vmul.f32 %v2645, %v2710
      %v2717 = vmul.f32 %v2646, %v2710
      %v2718 = vmul.f32 %v2647, %v2710
      %v2719 = vmul.f32 %v2648, %v2710
      %v2720 = vmul.f32 %v2649, %v2710
      %v2721 = vmul.f32 %v2650, %v2710
      %v2722 = vmul.f32 %v2651, %v2710
      %v2723 = vmul.f32 %v2652, %v2710
      %v2724 = vmul.f32 %v2653, %v2710
      %v2725 = vmul.f32 %v2654, %v2710
      %v2726 = vmul.f32 %v2655, %v2710
      %v2727 = vmul.f32 %v2656, %v2710
      %v2728 = vmul.f32 %v2657, %v2710
      %v2729 = vmul.f32 %v2658, %v2710
      %v2730 = vmul.f32 %v2659, %v2710
      %v2731 = vmul.f32 %v2660, %v2710
      %v2732 = vmul.f32 %v2661, %v2710
      %v2733 = vmul.f32 %v2662, %v2710
      %v2734 = vmul.f32 %v2663, %v2710
      %v2735 = vmul.f32 %v2664, %v2710
      %v2736 = vmul.f32 %v2665, %v2710
      %v2737 = vmul.f32 %v2666, %v2710
      %v2738 = vmul.f32 %v2667, %v2710
      %v2739 = vmul.f32 %v2668, %v2710
      %v2740 = vmul.f32 %v2669, %v2710
      %v2741 = vmul.f32 %v2670, %v2710
      %v2742 = vmul.f32 %v2671, %v2710
      %v2743 = vmul.f32 %v2672, %v2710
      %v2744 = vsel %vm2673, %v2641, %v2712
      %v2745 = vsel %vm2674, %v2642, %v2713
      %v2746 = vsel %vm2675, %v2643, %v2714
      %v2747 = vsel %vm2676, %v2644, %v2715
      %v2748 = vsel %vm2677, %v2645, %v2716
      %v2749 = vsel %vm2678, %v2646, %v2717
      %v2750 = vsel %vm2679, %v2647, %v2718
      %v2751 = vsel %vm2680, %v2648, %v2719
      %v2752 = vsel %vm2681, %v2649, %v2720
      %v2753 = vsel %vm2682, %v2650, %v2721
      %v2754 = vsel %vm2683, %v2651, %v2722
      %v2755 = vsel %vm2684, %v2652, %v2723
      %v2756 = vsel %vm2685, %v2653, %v2724
      %v2757 = vsel %vm2686, %v2654, %v2725
      %v2758 = vsel %vm2687, %v2655, %v2726
      %v2759 = vsel %vm2688, %v2656, %v2727
      %v2760 = vsel %vm2689, %v2657, %v2728
      %v2761 = vsel %vm2690, %v2658, %v2729
      %v2762 = vsel %vm2691, %v2659, %v2730
      %v2763 = vsel %vm2692, %v2660, %v2731
      %v2764 = vsel %vm2693, %v2661, %v2732
      %v2765 = vsel %vm2694, %v2662, %v2733
      %v2766 = vsel %vm2695, %v2663, %v2734
      %v2767 = vsel %vm2696, %v2664, %v2735
      %v2768 = vsel %vm2697, %v2665, %v2736
      %v2769 = vsel %vm2698, %v2666, %v2737
      %v2770 = vsel %vm2699, %v2667, %v2738
      %v2771 = vsel %vm2700, %v2668, %v2739
      %v2772 = vsel %vm2701, %v2669, %v2740
      %v2773 = vsel %vm2702, %v2670, %v2741
      %v2774 = vsel %vm2703, %v2671, %v2742
      %v2775 = vsel %vm2704, %v2672, %v2743
      %2776 = vst [vmem:[#allocation3] sm:$0xff] 0.0
      %2777 = vst [vmem:[#allocation3 + $0x8] sm:$0xff] 0.0
      %2778 = vst [vmem:[#allocation3 + $0x10] sm:$0x3] 0.0
      %2779 = vst [vmem:[#allocation3 + $0x18] sm:$0xff] 0.0
      %2780 = vst [vmem:[#allocation3 + $0x20] sm:$0xff] 0.0
      %2781 = vst [vmem:[#allocation3 + $0x28] sm:$0x3] 0.0
      %2782 = vst [vmem:[#allocation3 + $0x30] sm:$0xff] 0.0
      %2783 = vst [vmem:[#allocation3 + $0x38] sm:$0xff] 0.0
      %2784 = vst [vmem:[#allocation3 + $0x40] sm:$0x3] 0.0
      %2785 = vst [vmem:[#allocation3 + $0x48] sm:$0xff] 0.0
      %2786 = vst [vmem:[#allocation3 + $0x50] sm:$0xff] 0.0
      %2787 = vst [vmem:[#allocation3 + $0x58] sm:$0x3] 0.0
      %2788 = vst [vmem:[#allocation3 + $0x60] sm:$0xff] 0.0
      %2789 = vst [vmem:[#allocation3 + $0x68] sm:$0xff] 0.0
      %2790 = vst [vmem:[#allocation3 + $0x70] sm:$0x3] 0.0
      %2791 = vst [vmem:[#allocation3 + $0x78] sm:$0xff] 0.0
      %2792 = vst [vmem:[#allocation3 + $0x80] sm:$0xff] 0.0
      %2793 = vst [vmem:[#allocation3 + $0x88] sm:$0x3] 0.0
      %2794 = vst [vmem:[#allocation3 + $0x90] sm:$0xff] 0.0
      %2795 = vst [vmem:[#allocation3 + $0x98] sm:$0xff] 0.0
      %2796 = vst [vmem:[#allocation3 + $0xa0] sm:$0x3] 0.0
      %2797 = vst [vmem:[#allocation3 + $0xa8] sm:$0xff] 0.0
      %2798 = vst [vmem:[#allocation3 + $0xb0] sm:$0xff] 0.0
      %2799 = vst [vmem:[#allocation3 + $0xb8] sm:$0x3] 0.0
      %2800 = vst [vmem:[#allocation3 + $0xc0] sm:$0xff] 0.0
      %2801 = vst [vmem:[#allocation3 + $0xc8] sm:$0xff] 0.0
      %2802 = vst [vmem:[#allocation3 + $0xd0] sm:$0x3] 0.0
      %2803 = vst [vmem:[#allocation3 + $0xd8] sm:$0xff] 0.0
      %2804 = vst [vmem:[#allocation3 + $0xe0] sm:$0xff] 0.0
      %2805 = vst [vmem:[#allocation3 + $0xe8] sm:$0x3] 0.0
      %2806 = vst [vmem:[#allocation3 + $0xf0] sm:$0xff] 0.0
      %2807 = vst [vmem:[#allocation3 + $0xf8] sm:$0xff] 0.0
      %2808 = vst [vmem:[#allocation3 + $0x100] sm:$0x3] 0.0
      %2809 = vst [vmem:[#allocation3 + $0x108] sm:$0xff] 0.0
      %2810 = vst [vmem:[#allocation3 + $0x110] sm:$0xff] 0.0
      %2811 = vst [vmem:[#allocation3 + $0x118] sm:$0x3] 0.0
      %2812 = vst [vmem:[#allocation3 + $0x120] sm:$0xff] 0.0
      %2813 = vst [vmem:[#allocation3 + $0x128] sm:$0xff] 0.0
      %2814 = vst [vmem:[#allocation3 + $0x130] sm:$0x3] 0.0
      %2815 = vst [vmem:[#allocation3 + $0x138] sm:$0xff] 0.0
      %2816 = vst [vmem:[#allocation3 + $0x140] sm:$0xff] 0.0
      %2817 = vst [vmem:[#allocation3 + $0x148] sm:$0x3] 0.0
      %2818 = vst [vmem:[#allocation3 + $0x150] sm:$0xff] 0.0
      %2819 = vst [vmem:[#allocation3 + $0x158] sm:$0xff] 0.0
      %2820 = vst [vmem:[#allocation3 + $0x160] sm:$0x3] 0.0
      %2821 = vst [vmem:[#allocation3 + $0x168] sm:$0xff] 0.0
      %2822 = vst [vmem:[#allocation3 + $0x170] sm:$0xff] 0.0
      %2823 = vst [vmem:[#allocation3 + $0x178] sm:$0x3] 0.0
      %2824 = vst [vmem:[#allocation3 + $0x180] sm:$0xff] 0.0
      %2825 = vst [vmem:[#allocation3 + $0x188] sm:$0xff] 0.0
      %2826 = vst [vmem:[#allocation3 + $0x190] sm:$0x3] 0.0
      %2827 = vst [vmem:[#allocation3 + $0x198] sm:$0xff] 0.0
      %2828 = vst [vmem:[#allocation3 + $0x1a0] sm:$0xff] 0.0
      %2829 = vst [vmem:[#allocation3 + $0x1a8] sm:$0x3] 0.0
      %s2830 = scalar_lea.vmem [#allocation3], 24
      %2831 = vst [vmem:[%s2830 + $0x1] sm:$0xff] %v2744
      %2832 = vst [vmem:[%s2830 + $0x9] sm:$0xff] %v2745
      %2833 = vst [vmem:[%s2830 + $0x19] sm:$0xff] %v2746
      %2834 = vst [vmem:[%s2830 + $0x21] sm:$0xff] %v2747
      %2835 = vst [vmem:[%s2830 + $0x31] sm:$0xff] %v2748
      %2836 = vst [vmem:[%s2830 + $0x39] sm:$0xff] %v2749
      %2837 = vst [vmem:[%s2830 + $0x49] sm:$0xff] %v2750
      %2838 = vst [vmem:[%s2830 + $0x51] sm:$0xff] %v2751
      %2839 = vst [vmem:[%s2830 + $0x61] sm:$0xff] %v2752
      %2840 = vst [vmem:[%s2830 + $0x69] sm:$0xff] %v2753
      %2841 = vst [vmem:[%s2830 + $0x79] sm:$0xff] %v2754
      %2842 = vst [vmem:[%s2830 + $0x81] sm:$0xff] %v2755
      %2843 = vst [vmem:[%s2830 + $0x91] sm:$0xff] %v2756
      %2844 = vst [vmem:[%s2830 + $0x99] sm:$0xff] %v2757
      %2845 = vst [vmem:[%s2830 + $0xa9] sm:$0xff] %v2758
      %2846 = vst [vmem:[%s2830 + $0xb1] sm:$0xff] %v2759
      %2847 = vst [vmem:[%s2830 + $0xc1] sm:$0xff] %v2760
      %2848 = vst [vmem:[%s2830 + $0xc9] sm:$0xff] %v2761
      %2849 = vst [vmem:[%s2830 + $0xd9] sm:$0xff] %v2762
      %2850 = vst [vmem:[%s2830 + $0xe1] sm:$0xff] %v2763
      %2851 = vst [vmem:[%s2830 + $0xf1] sm:$0xff] %v2764
      %2852 = vst [vmem:[%s2830 + $0xf9] sm:$0xff] %v2765
      %2853 = vst [vmem:[%s2830 + $0x109] sm:$0xff] %v2766
      %2854 = vst [vmem:[%s2830 + $0x111] sm:$0xff] %v2767
      %2855 = vst [vmem:[%s2830 + $0x121] sm:$0xff] %v2768
      %2856 = vst [vmem:[%s2830 + $0x129] sm:$0xff] %v2769
      %2857 = vst [vmem:[%s2830 + $0x139] sm:$0xff] %v2770
      %2858 = vst [vmem:[%s2830 + $0x141] sm:$0xff] %v2771
      %2859 = vst [vmem:[%s2830 + $0x151] sm:$0xff] %v2772
      %2860 = vst [vmem:[%s2830 + $0x159] sm:$0xff] %v2773
      %2861 = vst [vmem:[%s2830 + $0x169] sm:$0xff] %v2774
      %2862 = vst [vmem:[%s2830 + $0x171] sm:$0xff] %v2775
      %v2863 = vld [vmem:[#allocation3] ss:$2 sm:$0xff]
      %s2864 = scalar_lea.vmem [#allocation3], 48
      %v2865 = vld [vmem:[%s2864] ss:$2 sm:$0xff]
      %s2866 = scalar_lea.vmem [#allocation3], 96
      %v2867 = vld [vmem:[%s2866] ss:$2 sm:$0xff]
      %s2868 = scalar_lea.vmem [#allocation3], 144
      %v2869 = vld [vmem:[%s2868] ss:$2 sm:$0xff]
      %s2870 = scalar_lea.vmem [#allocation3], 192
      %v2871 = vld [vmem:[%s2870] ss:$2 sm:$0xff]
      %s2872 = scalar_lea.vmem [#allocation3], 240
      %v2873 = vld [vmem:[%s2872] ss:$2 sm:$0xff]
      %s2874 = scalar_lea.vmem [#allocation3], 288
      %v2875 = vld [vmem:[%s2874] ss:$2 sm:$0xff]
      %s2876 = scalar_lea.vmem [#allocation3], 336
      %v2877 = vld [vmem:[%s2876] ss:$2 sm:$0xff]
      %v2878 = vpack.c.bf16 %v2865, %v2863
      %v2879 = vpack.c.bf16 %v2869, %v2867
      %v2880 = vpack.c.bf16 %v2873, %v2871
      %v2881 = vpack.c.bf16 %v2877, %v2875
      %s2882 = scalar_lea.vmem [#allocation3], 1
      %v2883 = vld [vmem:[%s2882] ss:$2 sm:$0xff]
      %s2884 = scalar_lea.vmem [#allocation3], 49
      %v2885 = vld [vmem:[%s2884] ss:$2 sm:$0xff]
      %s2886 = scalar_lea.vmem [#allocation3], 97
      %v2887 = vld [vmem:[%s2886] ss:$2 sm:$0xff]
      %s2888 = scalar_lea.vmem [#allocation3], 145
      %v2889 = vld [vmem:[%s2888] ss:$2 sm:$0xff]
      %s2890 = scalar_lea.vmem [#allocation3], 193
      %v2891 = vld [vmem:[%s2890] ss:$2 sm:$0xff]
      %s2892 = scalar_lea.vmem [#allocation3], 241
      %v2893 = vld [vmem:[%s2892] ss:$2 sm:$0xff]
      %s2894 = scalar_lea.vmem [#allocation3], 289
      %v2895 = vld [vmem:[%s2894] ss:$2 sm:$0xff]
      %s2896 = scalar_lea.vmem [#allocation3], 337
      %v2897 = vld [vmem:[%s2896] ss:$2 sm:$0xff]
      %v2898 = vpack.c.bf16 %v2885, %v2883
      %v2899 = vpack.c.bf16 %v2889, %v2887
      %v2900 = vpack.c.bf16 %v2893, %v2891
      %v2901 = vpack.c.bf16 %v2897, %v2895
      %s2902 = scalar_lea.vmem [#allocation3], 2
      %v2903 = vld [vmem:[%s2902] ss:$2 sm:$0xff]
      %s2904 = scalar_lea.vmem [#allocation3], 50
      %v2905 = vld [vmem:[%s2904] ss:$2 sm:$0xff]
      %s2906 = scalar_lea.vmem [#allocation3], 98
      %v2907 = vld [vmem:[%s2906] ss:$2 sm:$0xff]
      %s2908 = scalar_lea.vmem [#allocation3], 146
      %v2909 = vld [vmem:[%s2908] ss:$2 sm:$0xff]
      %s2910 = scalar_lea.vmem [#allocation3], 194
      %v2911 = vld [vmem:[%s2910] ss:$2 sm:$0xff]
      %s2912 = scalar_lea.vmem [#allocation3], 242
      %v2913 = vld [vmem:[%s2912] ss:$2 sm:$0xff]
      %s2914 = scalar_lea.vmem [#allocation3], 290
      %v2915 = vld [vmem:[%s2914] ss:$2 sm:$0xff]
      %s2916 = scalar_lea.vmem [#allocation3], 338
      %v2917 = vld [vmem:[%s2916] ss:$2 sm:$0xff]
      %v2918 = vpack.c.bf16 %v2905, %v2903
      %v2919 = vpack.c.bf16 %v2909, %v2907
      %v2920 = vpack.c.bf16 %v2913, %v2911
      %v2921 = vpack.c.bf16 %v2917, %v2915
      %v2922 = vld [vmem:[%s3] sm:$0xf]
      %v2923 = vld [vmem:[%s3 + $0x4] sm:$0xf]
      %v2924 = vld [vmem:[%s3 + $0x8] sm:$0xf]
      %v2925 = vld [vmem:[%s3 + $0xc] sm:$0xf]
      %v2926 = vld [vmem:[%s3 + $0x10] sm:$0xf]
      %v2927 = vld [vmem:[%s3 + $0x14] sm:$0xf]
      %v2928 = vld [vmem:[%s3 + $0x18] sm:$0xf]
      %v2929 = vld [vmem:[%s3 + $0x1c] sm:$0xf]
      %v2930 = vld [vmem:[%s3 + $0x20] sm:$0xf]
      %v2931 = vld [vmem:[%s3 + $0x24] sm:$0xf]
      %v2932 = vld [vmem:[%s3 + $0x28] sm:$0xf]
      %v2933 = vld [vmem:[%s3 + $0x2c] sm:$0xf]
      %v2934 = vld [vmem:[%s3 + $0x30] sm:$0xf]
      %v2935 = vld [vmem:[%s3 + $0x34] sm:$0xf]
      %v2936 = vld [vmem:[%s3 + $0x38] sm:$0xf]
      %v2937 = vld [vmem:[%s3 + $0x3c] sm:$0xf]
      %v2938 = vld [vmem:[%s3 + $0x40] sm:$0xf]
      %v2939 = vld [vmem:[%s3 + $0x44] sm:$0xf]
      %v2940 = vld [vmem:[%s3 + $0x48] sm:$0xf]
      %v2941 = vld [vmem:[%s3 + $0x4c] sm:$0xf]
      %v2942 = vld [vmem:[%s3 + $0x50] sm:$0xf]
      %v2943 = vld [vmem:[%s3 + $0x54] sm:$0xf]
      %v2944 = vld [vmem:[%s3 + $0x58] sm:$0xf]
      %v2945 = vld [vmem:[%s3 + $0x5c] sm:$0xf]
      %v2946 = vld [vmem:[%s3 + $0x60] sm:$0xf]
      %v2947 = vld [vmem:[%s3 + $0x64] sm:$0xf]
      %v2948 = vld [vmem:[%s3 + $0x68] sm:$0xf]
      %v2949 = vld [vmem:[%s3 + $0x6c] sm:$0xf]
      %v2950 = vld [vmem:[%s3 + $0x70] sm:$0xf]
      %v2951 = vld [vmem:[%s3 + $0x74] sm:$0xf]
      %v2952 = vld [vmem:[%s3 + $0x78] sm:$0xf]
      %v2953 = vld [vmem:[%s3 + $0x7c] sm:$0xf]
      %v2954 = vld [vmem:[%s3 + $0x80] sm:$0xf]
      %v2955 = vld [vmem:[%s3 + $0x84] sm:$0xf]
      %v2956 = vld [vmem:[%s3 + $0x88] sm:$0xf]
      %v2957 = vld [vmem:[%s3 + $0x8c] sm:$0xf]
      %v2958 = vld [vmem:[%s3 + $0x90] sm:$0xf]
      %v2959 = vld [vmem:[%s3 + $0x94] sm:$0xf]
      %v2960 = vld [vmem:[%s3 + $0x98] sm:$0xf]
      %v2961 = vld [vmem:[%s3 + $0x9c] sm:$0xf]
      %v2962 = vld [vmem:[%s3 + $0xa0] sm:$0xf]
      %v2963 = vld [vmem:[%s3 + $0xa4] sm:$0xf]
      %v2964 = vld [vmem:[%s3 + $0xa8] sm:$0xf]
      %v2965 = vld [vmem:[%s3 + $0xac] sm:$0xf]
      %v2966 = vld [vmem:[%s3 + $0xb0] sm:$0xf]
      %v2967 = vld [vmem:[%s3 + $0xb4] sm:$0xf]
      %v2968 = vld [vmem:[%s3 + $0xb8] sm:$0xf]
      %v2969 = vld [vmem:[%s3 + $0xbc] sm:$0xf]
      %v2970 = vld [vmem:[%s2830] ss:$2 sm:$0xff]
      %s2971 = scalar_lea.vmem %s2830, 48 [#allocation3]
      %v2972 = vld [vmem:[%s2971] ss:$2 sm:$0xff]
      %s2973 = scalar_lea.vmem %s2830, 96 [#allocation3]
      %v2974 = vld [vmem:[%s2973] ss:$2 sm:$0xff]
      %s2975 = scalar_lea.vmem %s2830, 144 [#allocation3]
      %v2976 = vld [vmem:[%s2975] ss:$2 sm:$0xff]
      %s2977 = scalar_lea.vmem %s2830, 192 [#allocation3]
      %v2978 = vld [vmem:[%s2977] ss:$2 sm:$0xff]
      %s2979 = scalar_lea.vmem %s2830, 240 [#allocation3]
      %v2980 = vld [vmem:[%s2979] ss:$2 sm:$0xff]
      %s2981 = scalar_lea.vmem %s2830, 288 [#allocation3]
      %v2982 = vld [vmem:[%s2981] ss:$2 sm:$0xff]
      %s2983 = scalar_lea.vmem %s2830, 336 [#allocation3]
      %v2984 = vld [vmem:[%s2983] ss:$2 sm:$0xff]
      %v2985 = vpack.c.bf16 %v2972, %v2970
      %v2986 = vpack.c.bf16 %v2976, %v2974
      %v2987 = vpack.c.bf16 %v2980, %v2978
      %v2988 = vpack.c.bf16 %v2984, %v2982
      %s2989 = scalar_lea.vmem %s2830, 1 [#allocation3]
      %v2990 = vld [vmem:[%s2989] ss:$2 sm:$0xff]
      %s2991 = scalar_lea.vmem %s2830, 49 [#allocation3]
      %v2992 = vld [vmem:[%s2991] ss:$2 sm:$0xff]
      %s2993 = scalar_lea.vmem %s2830, 97 [#allocation3]
      %v2994 = vld [vmem:[%s2993] ss:$2 sm:$0xff]
      %s2995 = scalar_lea.vmem %s2830, 145 [#allocation3]
      %v2996 = vld [vmem:[%s2995] ss:$2 sm:$0xff]
      %s2997 = scalar_lea.vmem %s2830, 193 [#allocation3]
      %v2998 = vld [vmem:[%s2997] ss:$2 sm:$0xff]
      %s2999 = scalar_lea.vmem %s2830, 241 [#allocation3]
      %v3000 = vld [vmem:[%s2999] ss:$2 sm:$0xff]
      %s3001 = scalar_lea.vmem %s2830, 289 [#allocation3]
      %v3002 = vld [vmem:[%s3001] ss:$2 sm:$0xff]
      %s3003 = scalar_lea.vmem %s2830, 337 [#allocation3]
      %v3004 = vld [vmem:[%s3003] ss:$2 sm:$0xff]
      %v3005 = vpack.c.bf16 %v2992, %v2990
      %v3006 = vpack.c.bf16 %v2996, %v2994
      %v3007 = vpack.c.bf16 %v3000, %v2998
      %v3008 = vpack.c.bf16 %v3004, %v3002
      %s3009 = scalar_lea.vmem %s2830, 2 [#allocation3]
      %v3010 = vld [vmem:[%s3009] ss:$2 sm:$0xff]
      %s3011 = scalar_lea.vmem %s2830, 50 [#allocation3]
      %v3012 = vld [vmem:[%s3011] ss:$2 sm:$0xff]
      %s3013 = scalar_lea.vmem %s2830, 98 [#allocation3]
      %v3014 = vld [vmem:[%s3013] ss:$2 sm:$0xff]
      %s3015 = scalar_lea.vmem %s2830, 146 [#allocation3]
      %v3016 = vld [vmem:[%s3015] ss:$2 sm:$0xff]
      %s3017 = scalar_lea.vmem %s2830, 194 [#allocation3]
      %v3018 = vld [vmem:[%s3017] ss:$2 sm:$0xff]
      %s3019 = scalar_lea.vmem %s2830, 242 [#allocation3]
      %v3020 = vld [vmem:[%s3019] ss:$2 sm:$0xff]
      %s3021 = scalar_lea.vmem %s2830, 290 [#allocation3]
      %v3022 = vld [vmem:[%s3021] ss:$2 sm:$0xff]
      %s3023 = scalar_lea.vmem %s2830, 338 [#allocation3]
      %v3024 = vld [vmem:[%s3023] ss:$2 sm:$0xff]
      %v3025 = vpack.c.bf16 %v3012, %v3010
      %v3026 = vpack.c.bf16 %v3016, %v3014
      %v3027 = vpack.c.bf16 %v3020, %v3018
      %v3028 = vpack.c.bf16 %v3024, %v3022
      %s3029 = scalar_lea.vmem %s3, 192
      %v3030 = vld [vmem:[%s3029] sm:$0xf]
      %v3031 = vld [vmem:[%s3029 + $0x4] sm:$0xf]
      %v3032 = vld [vmem:[%s3029 + $0x8] sm:$0xf]
      %v3033 = vld [vmem:[%s3029 + $0xc] sm:$0xf]
      %v3034 = vld [vmem:[%s3029 + $0x10] sm:$0xf]
      %v3035 = vld [vmem:[%s3029 + $0x14] sm:$0xf]
      %v3036 = vld [vmem:[%s3029 + $0x18] sm:$0xf]
      %v3037 = vld [vmem:[%s3029 + $0x1c] sm:$0xf]
      %v3038 = vld [vmem:[%s3029 + $0x20] sm:$0xf]
      %v3039 = vld [vmem:[%s3029 + $0x24] sm:$0xf]
      %v3040 = vld [vmem:[%s3029 + $0x28] sm:$0xf]
      %v3041 = vld [vmem:[%s3029 + $0x2c] sm:$0xf]
      %v3042 = vld [vmem:[%s3029 + $0x30] sm:$0xf]
      %v3043 = vld [vmem:[%s3029 + $0x34] sm:$0xf]
      %v3044 = vld [vmem:[%s3029 + $0x38] sm:$0xf]
      %v3045 = vld [vmem:[%s3029 + $0x3c] sm:$0xf]
      %v3046 = vld [vmem:[%s3029 + $0x40] sm:$0xf]
      %v3047 = vld [vmem:[%s3029 + $0x44] sm:$0xf]
      %v3048 = vld [vmem:[%s3029 + $0x48] sm:$0xf]
      %v3049 = vld [vmem:[%s3029 + $0x4c] sm:$0xf]
      %v3050 = vld [vmem:[%s3029 + $0x50] sm:$0xf]
      %v3051 = vld [vmem:[%s3029 + $0x54] sm:$0xf]
      %v3052 = vld [vmem:[%s3029 + $0x58] sm:$0xf]
      %v3053 = vld [vmem:[%s3029 + $0x5c] sm:$0xf]
      %v3054 = vld [vmem:[%s3029 + $0x60] sm:$0xf]
      %v3055 = vld [vmem:[%s3029 + $0x64] sm:$0xf]
      %v3056 = vld [vmem:[%s3029 + $0x68] sm:$0xf]
      %v3057 = vld [vmem:[%s3029 + $0x6c] sm:$0xf]
      %v3058 = vld [vmem:[%s3029 + $0x70] sm:$0xf]
      %v3059 = vld [vmem:[%s3029 + $0x74] sm:$0xf]
      %v3060 = vld [vmem:[%s3029 + $0x78] sm:$0xf]
      %v3061 = vld [vmem:[%s3029 + $0x7c] sm:$0xf]
      %v3062 = vld [vmem:[%s3029 + $0x80] sm:$0xf]
      %v3063 = vld [vmem:[%s3029 + $0x84] sm:$0xf]
      %v3064 = vld [vmem:[%s3029 + $0x88] sm:$0xf]
      %v3065 = vld [vmem:[%s3029 + $0x8c] sm:$0xf]
      %v3066 = vld [vmem:[%s3029 + $0x90] sm:$0xf]
      %v3067 = vld [vmem:[%s3029 + $0x94] sm:$0xf]
      %v3068 = vld [vmem:[%s3029 + $0x98] sm:$0xf]
      %v3069 = vld [vmem:[%s3029 + $0x9c] sm:$0xf]
      %v3070 = vld [vmem:[%s3029 + $0xa0] sm:$0xf]
      %v3071 = vld [vmem:[%s3029 + $0xa4] sm:$0xf]
      %v3072 = vld [vmem:[%s3029 + $0xa8] sm:$0xf]
      %v3073 = vld [vmem:[%s3029 + $0xac] sm:$0xf]
      %v3074 = vld [vmem:[%s3029 + $0xb0] sm:$0xf]
      %v3075 = vld [vmem:[%s3029 + $0xb4] sm:$0xf]
      %v3076 = vld [vmem:[%s3029 + $0xb8] sm:$0xf]
      %v3077 = vld [vmem:[%s3029 + $0xbc] sm:$0xf]
      %v3126 = vunpack.c.l.b16 %v3030
      %v3127 = vunpack.c.l.b16 %v3031
      %v3128 = vunpack.c.l.b16 %v3032
      %v3129 = vunpack.c.l.b16 %v3033
      %v3130 = vunpack.c.l.b16 %v3034
      %v3131 = vunpack.c.l.b16 %v3035
      %v3132 = vunpack.c.l.b16 %v3036
      %v3133 = vunpack.c.l.b16 %v3037
      %v3134 = vunpack.c.l.b16 %v3038
      %v3135 = vunpack.c.l.b16 %v3039
      %v3136 = vunpack.c.l.b16 %v3040
      %v3137 = vunpack.c.l.b16 %v3041
      %v3138 = vunpack.c.l.b16 %v3042
      %v3139 = vunpack.c.l.b16 %v3043
      %v3140 = vunpack.c.l.b16 %v3044
      %v3141 = vunpack.c.l.b16 %v3045
      %v3142 = vunpack.c.l.b16 %v3046
      %v3143 = vunpack.c.l.b16 %v3047
      %v3144 = vunpack.c.l.b16 %v3048
      %v3145 = vunpack.c.l.b16 %v3049
      %v3146 = vunpack.c.l.b16 %v3050
      %v3147 = vunpack.c.l.b16 %v3051
      %v3148 = vunpack.c.l.b16 %v3052
      %v3149 = vunpack.c.l.b16 %v3053
      %v3150 = vunpack.c.l.b16 %v3054
      %v3151 = vunpack.c.l.b16 %v3055
      %v3152 = vunpack.c.l.b16 %v3056
      %v3153 = vunpack.c.l.b16 %v3057
      %v3154 = vunpack.c.l.b16 %v3058
      %v3155 = vunpack.c.l.b16 %v3059
      %v3156 = vunpack.c.l.b16 %v3060
      %v3157 = vunpack.c.l.b16 %v3061
      %v3158 = vunpack.c.l.b16 %v3062
      %v3159 = vunpack.c.l.b16 %v3063
      %v3160 = vunpack.c.l.b16 %v3064
      %v3161 = vunpack.c.l.b16 %v3065
      %v3162 = vunpack.c.l.b16 %v3066
      %v3163 = vunpack.c.l.b16 %v3067
      %v3164 = vunpack.c.l.b16 %v3068
      %v3165 = vunpack.c.l.b16 %v3069
      %v3166 = vunpack.c.l.b16 %v3070
      %v3167 = vunpack.c.l.b16 %v3071
      %v3168 = vunpack.c.l.b16 %v3072
      %v3169 = vunpack.c.l.b16 %v3073
      %v3170 = vunpack.c.l.b16 %v3074
      %v3171 = vunpack.c.l.b16 %v3075
      %v3172 = vunpack.c.l.b16 %v3076
      %v3173 = vunpack.c.l.b16 %v3077
      %v3174 = vpack.c.b16 %v3127, %v3126
      %v3175 = vpack.c.b16 %v3129, %v3128
      %v3176 = vpack.c.b16 %v3131, %v3130
      %v3177 = vpack.c.b16 %v3133, %v3132
      %v3178 = vpack.c.b16 %v3135, %v3134
      %v3179 = vpack.c.b16 %v3137, %v3136
      %v3180 = vpack.c.b16 %v3139, %v3138
      %v3181 = vpack.c.b16 %v3141, %v3140
      %v3182 = vpack.c.b16 %v3143, %v3142
      %v3183 = vpack.c.b16 %v3145, %v3144
      %v3184 = vpack.c.b16 %v3147, %v3146
      %v3185 = vpack.c.b16 %v3149, %v3148
      %v3186 = vpack.c.b16 %v3151, %v3150
      %v3187 = vpack.c.b16 %v3153, %v3152
      %v3188 = vpack.c.b16 %v3155, %v3154
      %v3189 = vpack.c.b16 %v3157, %v3156
      %v3190 = vpack.c.b16 %v3159, %v3158
      %v3191 = vpack.c.b16 %v3161, %v3160
      %v3192 = vpack.c.b16 %v3163, %v3162
      %v3193 = vpack.c.b16 %v3165, %v3164
      %v3194 = vpack.c.b16 %v3167, %v3166
      %v3195 = vpack.c.b16 %v3169, %v3168
      %v3196 = vpack.c.b16 %v3171, %v3170
      %v3197 = vpack.c.b16 %v3173, %v3172
      %3222 = vmatprep.subr.bf16.mxu0 0
      %3223 = vmatpush1.bf16.msra.mxu0 %v3174
      %3224 = vmatprep.subr.bf16.mxu0 0
      %3225 = vmatpush1.bf16.msra.mxu0 %v3175
      %3226 = vmatprep.subr.bf16.mxu0 0
      %3227 = vmatpush1.bf16.msra.mxu0 %v3176
      %3228 = vmatprep.subr.bf16.mxu0 0
      %3229 = vmatpush1.bf16.msra.mxu0 %v3177
      %3230 = vmatprep.subr.bf16.mxu0 0
      %3231 = vmatpush1.bf16.msra.mxu0 %v3178
      %3232 = vmatprep.subr.bf16.mxu0 0
      %3233 = vmatpush1.bf16.msra.mxu0 %v3179
      %3234 = vmatprep.subr.bf16.mxu0 0
      %3235 = vmatpush1.bf16.msra.mxu0 %v3180
      %3236 = vmatprep.subr.bf16.mxu0 0
      %3237 = vmatpush1.bf16.msra.mxu0 %v3181
      %3238 = vmatprep.subr.bf16.mxu0 0
      %3239 = vmatpush1.bf16.msra.mxu0 %v3182
      %3240 = vmatprep.subr.bf16.mxu0 0
      %3241 = vmatpush1.bf16.msra.mxu0 %v3183
      %3242 = vmatprep.subr.bf16.mxu0 0
      %3243 = vmatpush1.bf16.msra.mxu0 %v3184
      %3244 = vmatprep.subr.bf16.mxu0 0
      %3245 = vmatpush1.bf16.msra.mxu0 %v3185
      %3246 = vmatprep.subr.bf16.mxu0 0
      %3247 = vmatpush1.bf16.msra.mxu0 %v3186
      %3248 = vmatprep.subr.bf16.mxu0 0
      %3249 = vmatpush1.bf16.msra.mxu0 %v3187
      %3250 = vmatprep.subr.bf16.mxu0 0
      %3251 = vmatpush1.bf16.msra.mxu0 %v3188
      %3252 = vmatprep.subr.bf16.mxu0 0
      %3253 = vmatpush1.bf16.msra.mxu0 %v3189
      %3254 = vmatprep.mubr.bf16.mxu0 %v3005
      %3255 = vmatmul.mubr.bf16.gmra.mrb[0].mxu0 %v2985
      %v3256 = vpop.f32.mrb[0].mxu0
      %v3257 = vadd.f32 0.0, %v3256
      %v3258 = vpop.f32.mrb[0].mxu0
      %v3259 = vpop.f32.mrb[0].mxu0
      %v3260 = vadd.f32 0.0, %v3259
      %v3261 = vpop.f32.mrb[0].mxu0
      %3262 = vmatprep.mubr.bf16.mxu0 %v3006
      %3263 = vmatmul.mubr.bf16.gmra.mrb[0].mxu0 %v2986
      %v3264 = vpop.f32.mrb[0].mxu0
      %v3265 = vadd.f32 0.0, %v3264
      %v3266 = vpop.f32.mrb[0].mxu0
      %v3267 = vpop.f32.mrb[0].mxu0
      %v3268 = vadd.f32 0.0, %v3267
      %v3269 = vpop.f32.mrb[0].mxu0
      %3270 = vmatprep.mubr.bf16.mxu0 %v3007
      %3271 = vmatmul.mubr.bf16.gmra.mrb[0].mxu0 %v2987
      %v3272 = vpop.f32.mrb[0].mxu0
      %v3273 = vadd.f32 0.0, %v3272
      %v3274 = vpop.f32.mrb[0].mxu0
      %v3275 = vpop.f32.mrb[0].mxu0
      %v3276 = vadd.f32 0.0, %v3275
      %v3277 = vpop.f32.mrb[0].mxu0
      %3278 = vmatprep.mubr.bf16.mxu0 %v3008
      %3279 = vmatmul.mubr.bf16.gmra.mrb[0].mxu0 %v2988
      %v3280 = vpop.f32.mrb[0].mxu0
      %v3281 = vadd.f32 0.0, %v3280
      %v3282 = vpop.f32.mrb[0].mxu0
      %v3283 = vpop.f32.mrb[0].mxu0
      %v3284 = vadd.f32 0.0, %v3283
      %v3285 = vpop.f32.mrb[0].mxu0
      %3286 = vdwg.mxu0
      %3287 = vmatprep.subr.bf16.mxu0 0
      %3288 = vmatpush1.bf16.msra.mxu0 %v3190
      %3289 = vmatprep.subr.bf16.mxu0 0
      %3290 = vmatpush1.bf16.msra.mxu0 %v3191
      %3291 = vmatprep.subr.bf16.mxu0 0
      %3292 = vmatpush1.bf16.msra.mxu0 %v3192
      %3293 = vmatprep.subr.bf16.mxu0 0
      %3294 = vmatpush1.bf16.msra.mxu0 %v3193
      %3295 = vmatprep.subr.bf16.mxu0 0
      %3296 = vmatpush1.bf16.msra.mxu0 %v3194
      %3297 = vmatprep.subr.bf16.mxu0 0
      %3298 = vmatpush1.bf16.msra.mxu0 %v3195
      %3299 = vmatprep.subr.bf16.mxu0 0
      %3300 = vmatpush1.bf16.msra.mxu0 %v3196
      %3301 = vmatprep.subr.bf16.mxu0 0
      %3302 = vmatpush1.bf16.msra.mxu0 %v3197
      %3303 = vmatprep.subr.bf16.mxu0 0
      %3304 = vmatpush1.bf16.msra.mxu0 0
      %3305 = vmatprep.subr.bf16.mxu0 0
      %3306 = vmatpush1.bf16.msra.mxu0 0
      %3307 = vmatprep.subr.bf16.mxu0 0
      %3308 = vmatpush1.bf16.msra.mxu0 0
      %3309 = vmatprep.subr.bf16.mxu0 0
      %3310 = vmatpush1.bf16.msra.mxu0 0
      %3311 = vmatprep.subr.bf16.mxu0 0
      %3312 = vmatpush1.bf16.msra.mxu0 0
      %3313 = vmatprep.subr.bf16.mxu0 0
      %3314 = vmatpush1.bf16.msra.mxu0 0
      %3315 = vmatprep.subr.bf16.mxu0 0
      %3316 = vmatpush1.bf16.msra.mxu0 0
      %3317 = vmatprep.subr.bf16.mxu0 0
      %3318 = vmatpush1.bf16.msra.mxu0 0
      %3319 = vmatprep.mubr.bf16.mxu0 0
      %3320 = vmatmul.mubr.bf16.gmra.mrb[0].mxu0 %v3025
      %v3321 = vpop.f32.mrb[0].mxu0
      %v3322 = vadd.f32 %v3257, %v3321
      %v3323 = vpop.f32.mrb[0].mxu0
      %v3324 = vpop.f32.mrb[0].mxu0
      %v3325 = vadd.f32 %v3260, %v3324
      %v3326 = vpop.f32.mrb[0].mxu0
      %3327 = vmatprep.mubr.bf16.mxu0 0
      %3328 = vmatmul.mubr.bf16.gmra.mrb[0].mxu0 %v3026
      %v3329 = vpop.f32.mrb[0].mxu0
      %v3330 = vadd.f32 %v3265, %v3329
      %v3331 = vpop.f32.mrb[0].mxu0
      %v3332 = vpop.f32.mrb[0].mxu0
      %v3333 = vadd.f32 %v3268, %v3332
      %v3334 = vpop.f32.mrb[0].mxu0
      %3335 = vmatprep.mubr.bf16.mxu0 0
      %3336 = vmatmul.mubr.bf16.gmra.mrb[0].mxu0 %v3027
      %v3337 = vpop.f32.mrb[0].mxu0
      %v3338 = vadd.f32 %v3273, %v3337
      %v3339 = vpop.f32.mrb[0].mxu0
      %v3340 = vpop.f32.mrb[0].mxu0
      %v3341 = vadd.f32 %v3276, %v3340
      %v3342 = vpop.f32.mrb[0].mxu0
      %3343 = vmatprep.mubr.bf16.mxu0 0
      %3344 = vmatmul.mubr.bf16.gmra.mrb[0].mxu0 %v3028
      %v3345 = vpop.f32.mrb[0].mxu0
      %v3346 = vadd.f32 %v3281, %v3345
      %v3347 = vpop.f32.mrb[0].mxu0
      %v3348 = vpop.f32.mrb[0].mxu0
      %v3349 = vadd.f32 %v3284, %v3348
      %v3350 = vpop.f32.mrb[0].mxu0
      %3351 = vdwg.mxu0
      %v3400 = vunpack.c.l.b16 %v2922
      %v3401 = vunpack.c.l.b16 %v2923
      %v3402 = vunpack.c.l.b16 %v2924
      %v3403 = vunpack.c.l.b16 %v2925
      %v3404 = vunpack.c.l.b16 %v2926
      %v3405 = vunpack.c.l.b16 %v2927
      %v3406 = vunpack.c.l.b16 %v2928
      %v3407 = vunpack.c.l.b16 %v2929
      %v3408 = vunpack.c.l.b16 %v2930
      %v3409 = vunpack.c.l.b16 %v2931
      %v3410 = vunpack.c.l.b16 %v2932
      %v3411 = vunpack.c.l.b16 %v2933
      %v3412 = vunpack.c.l.b16 %v2934
      %v3413 = vunpack.c.l.b16 %v2935
      %v3414 = vunpack.c.l.b16 %v2936
      %v3415 = vunpack.c.l.b16 %v2937
      %v3416 = vunpack.c.l.b16 %v2938
      %v3417 = vunpack.c.l.b16 %v2939
      %v3418 = vunpack.c.l.b16 %v2940
      %v3419 = vunpack.c.l.b16 %v2941
      %v3420 = vunpack.c.l.b16 %v2942
      %v3421 = vunpack.c.l.b16 %v2943
      %v3422 = vunpack.c.l.b16 %v2944
      %v3423 = vunpack.c.l.b16 %v2945
      %v3424 = vunpack.c.l.b16 %v2946
      %v3425 = vunpack.c.l.b16 %v2947
      %v3426 = vunpack.c.l.b16 %v2948
      %v3427 = vunpack.c.l.b16 %v2949
      %v3428 = vunpack.c.l.b16 %v2950
      %v3429 = vunpack.c.l.b16 %v2951
      %v3430 = vunpack.c.l.b16 %v2952
      %v3431 = vunpack.c.l.b16 %v2953
      %v3432 = vunpack.c.l.b16 %v2954
      %v3433 = vunpack.c.l.b16 %v2955
      %v3434 = vunpack.c.l.b16 %v2956
      %v3435 = vunpack.c.l.b16 %v2957
      %v3436 = vunpack.c.l.b16 %v2958
      %v3437 = vunpack.c.l.b16 %v2959
      %v3438 = vunpack.c.l.b16 %v2960
      %v3439 = vunpack.c.l.b16 %v2961
      %v3440 = vunpack.c.l.b16 %v2962
      %v3441 = vunpack.c.l.b16 %v2963
      %v3442 = vunpack.c.l.b16 %v2964
      %v3443 = vunpack.c.l.b16 %v2965
      %v3444 = vunpack.c.l.b16 %v2966
      %v3445 = vunpack.c.l.b16 %v2967
      %v3446 = vunpack.c.l.b16 %v2968
      %v3447 = vunpack.c.l.b16 %v2969
      %v3448 = vpack.c.b16 %v3401, %v3400
      %v3449 = vpack.c.b16 %v3403, %v3402
      %v3450 = vpack.c.b16 %v3405, %v3404
      %v3451 = vpack.c.b16 %v3407, %v3406
      %v3452 = vpack.c.b16 %v3409, %v3408
      %v3453 = vpack.c.b16 %v3411, %v3410
      %v3454 = vpack.c.b16 %v3413, %v3412
      %v3455 = vpack.c.b16 %v3415, %v3414
      %v3456 = vpack.c.b16 %v3417, %v3416
      %v3457 = vpack.c.b16 %v3419, %v3418
      %v3458 = vpack.c.b16 %v3421, %v3420
      %v3459 = vpack.c.b16 %v3423, %v3422
      %v3460 = vpack.c.b16 %v3425, %v3424
      %v3461 = vpack.c.b16 %v3427, %v3426
      %v3462 = vpack.c.b16 %v3429, %v3428
      %v3463 = vpack.c.b16 %v3431, %v3430
      %v3464 = vpack.c.b16 %v3433, %v3432
      %v3465 = vpack.c.b16 %v3435, %v3434
      %v3466 = vpack.c.b16 %v3437, %v3436
      %v3467 = vpack.c.b16 %v3439, %v3438
      %v3468 = vpack.c.b16 %v3441, %v3440
      %v3469 = vpack.c.b16 %v3443, %v3442
      %v3470 = vpack.c.b16 %v3445, %v3444
      %v3471 = vpack.c.b16 %v3447, %v3446
      %3496 = vmatprep.subr.bf16.mxu0 0
      %3497 = vmatpush1.bf16.msra.mxu0 %v3448
      %3498 = vmatprep.subr.bf16.mxu0 0
      %3499 = vmatpush1.bf16.msra.mxu0 %v3449
      %3500 = vmatprep.subr.bf16.mxu0 0
      %3501 = vmatpush1.bf16.msra.mxu0 %v3450
      %3502 = vmatprep.subr.bf16.mxu0 0
      %3503 = vmatpush1.bf16.msra.mxu0 %v3451
      %3504 = vmatprep.subr.bf16.mxu0 0
      %3505 = vmatpush1.bf16.msra.mxu0 %v3452
      %3506 = vmatprep.subr.bf16.mxu0 0
      %3507 = vmatpush1.bf16.msra.mxu0 %v3453
      %3508 = vmatprep.subr.bf16.mxu0 0
      %3509 = vmatpush1.bf16.msra.mxu0 %v3454
      %3510 = vmatprep.subr.bf16.mxu0 0
      %3511 = vmatpush1.bf16.msra.mxu0 %v3455
      %3512 = vmatprep.subr.bf16.mxu0 0
      %3513 = vmatpush1.bf16.msra.mxu0 %v3456
      %3514 = vmatprep.subr.bf16.mxu0 0
      %3515 = vmatpush1.bf16.msra.mxu0 %v3457
      %3516 = vmatprep.subr.bf16.mxu0 0
      %3517 = vmatpush1.bf16.msra.mxu0 %v3458
      %3518 = vmatprep.subr.bf16.mxu0 0
      %3519 = vmatpush1.bf16.msra.mxu0 %v3459
      %3520 = vmatprep.subr.bf16.mxu0 0
      %3521 = vmatpush1.bf16.msra.mxu0 %v3460
      %3522 = vmatprep.subr.bf16.mxu0 0
      %3523 = vmatpush1.bf16.msra.mxu0 %v3461
      %3524 = vmatprep.subr.bf16.mxu0 0
      %3525 = vmatpush1.bf16.msra.mxu0 %v3462
      %3526 = vmatprep.subr.bf16.mxu0 0
      %3527 = vmatpush1.bf16.msra.mxu0 %v3463
      %3528 = vmatprep.mubr.bf16.mxu0 %v2898
      %3529 = vmatmul.mubr.bf16.gmra.mrb[0].mxu0 %v2878
      %v3530 = vpop.f32.mrb[0].mxu0
      %v3531 = vadd.f32 %v3322, %v3530
      %v3532 = vpop.f32.mrb[0].mxu0
      %v3533 = vpop.f32.mrb[0].mxu0
      %v3534 = vadd.f32 %v3325, %v3533
      %v3535 = vpop.f32.mrb[0].mxu0
      %3536 = vmatprep.mubr.bf16.mxu0 %v2899
      %3537 = vmatmul.mubr.bf16.gmra.mrb[0].mxu0 %v2879
      %v3538 = vpop.f32.mrb[0].mxu0
      %v3539 = vadd.f32 %v3330, %v3538
      %v3540 = vpop.f32.mrb[0].mxu0
      %v3541 = vpop.f32.mrb[0].mxu0
      %v3542 = vadd.f32 %v3333, %v3541
      %v3543 = vpop.f32.mrb[0].mxu0
      %3544 = vmatprep.mubr.bf16.mxu0 %v2900
      %3545 = vmatmul.mubr.bf16.gmra.mrb[0].mxu0 %v2880
      %v3546 = vpop.f32.mrb[0].mxu0
      %v3547 = vadd.f32 %v3338, %v3546
      %v3548 = vpop.f32.mrb[0].mxu0
      %v3549 = vpop.f32.mrb[0].mxu0
      %v3550 = vadd.f32 %v3341, %v3549
      %v3551 = vpop.f32.mrb[0].mxu0
      %3552 = vmatprep.mubr.bf16.mxu0 %v2901
      %3553 = vmatmul.mubr.bf16.gmra.mrb[0].mxu0 %v2881
      %v3554 = vpop.f32.mrb[0].mxu0
      %v3555 = vadd.f32 %v3346, %v3554
      %v3556 = vpop.f32.mrb[0].mxu0
      %v3557 = vpop.f32.mrb[0].mxu0
      %v3558 = vadd.f32 %v3349, %v3557
      %v3559 = vpop.f32.mrb[0].mxu0
      %3560 = vdwg.mxu0
      %3561 = vmatprep.subr.bf16.mxu0 0
      %3562 = vmatpush1.bf16.msra.mxu0 %v3464
      %3563 = vmatprep.subr.bf16.mxu0 0
      %3564 = vmatpush1.bf16.msra.mxu0 %v3465
      %3565 = vmatprep.subr.bf16.mxu0 0
      %3566 = vmatpush1.bf16.msra.mxu0 %v3466
      %3567 = vmatprep.subr.bf16.mxu0 0
      %3568 = vmatpush1.bf16.msra.mxu0 %v3467
      %3569 = vmatprep.subr.bf16.mxu0 0
      %3570 = vmatpush1.bf16.msra.mxu0 %v3468
      %3571 = vmatprep.subr.bf16.mxu0 0
      %3572 = vmatpush1.bf16.msra.mxu0 %v3469
      %3573 = vmatprep.subr.bf16.mxu0 0
      %3574 = vmatpush1.bf16.msra.mxu0 %v3470
      %3575 = vmatprep.subr.bf16.mxu0 0
      %3576 = vmatpush1.bf16.msra.mxu0 %v3471
      %3577 = vmatprep.subr.bf16.mxu0 0
      %3578 = vmatpush1.bf16.msra.mxu0 0
      %3579 = vmatprep.subr.bf16.mxu0 0
      %3580 = vmatpush1.bf16.msra.mxu0 0
      %3581 = vmatprep.subr.bf16.mxu0 0
      %3582 = vmatpush1.bf16.msra.mxu0 0
      %3583 = vmatprep.subr.bf16.mxu0 0
      %3584 = vmatpush1.bf16.msra.mxu0 0
      %3585 = vmatprep.subr.bf16.mxu0 0
      %3586 = vmatpush1.bf16.msra.mxu0 0
      %3587 = vmatprep.subr.bf16.mxu0 0
      %3588 = vmatpush1.bf16.msra.mxu0 0
      %3589 = vmatprep.subr.bf16.mxu0 0
      %3590 = vmatpush1.bf16.msra.mxu0 0
      %3591 = vmatprep.subr.bf16.mxu0 0
      %3592 = vmatpush1.bf16.msra.mxu0 0
      %3593 = vmatprep.mubr.bf16.mxu0 0
      %3594 = vmatmul.mubr.bf16.gmra.mrb[0].mxu0 %v2918
      %v3595 = vpop.f32.mrb[0].mxu0
      %v3596 = vadd.f32 %v3531, %v3595
      %v3597 = vpop.f32.mrb[0].mxu0
      %v3598 = vpop.f32.mrb[0].mxu0
      %v3599 = vadd.f32 %v3534, %v3598
      %v3600 = vpop.f32.mrb[0].mxu0
      %3601 = vmatprep.mubr.bf16.mxu0 0
      %3602 = vmatmul.mubr.bf16.gmra.mrb[0].mxu0 %v2919
      %v3603 = vpop.f32.mrb[0].mxu0
      %v3604 = vadd.f32 %v3539, %v3603
      %v3605 = vpop.f32.mrb[0].mxu0
      %v3606 = vpop.f32.mrb[0].mxu0
      %v3607 = vadd.f32 %v3542, %v3606
      %v3608 = vpop.f32.mrb[0].mxu0
      %3609 = vmatprep.mubr.bf16.mxu0 0
      %3610 = vmatmul.mubr.bf16.gmra.mrb[0].mxu0 %v2920
      %v3611 = vpop.f32.mrb[0].mxu0
      %v3612 = vadd.f32 %v3547, %v3611
      %v3613 = vpop.f32.mrb[0].mxu0
      %v3614 = vpop.f32.mrb[0].mxu0
      %v3615 = vadd.f32 %v3550, %v3614
      %v3616 = vpop.f32.mrb[0].mxu0
      %3617 = vmatprep.mubr.bf16.mxu0 0
      %3618 = vmatmul.mubr.bf16.gmra.mrb[0].mxu0 %v2921
      %v3619 = vpop.f32.mrb[0].mxu0
      %v3620 = vadd.f32 %v3555, %v3619
      %v3621 = vpop.f32.mrb[0].mxu0
      %v3622 = vpop.f32.mrb[0].mxu0
      %v3623 = vadd.f32 %v3558, %v3622
      %v3624 = vpop.f32.mrb[0].mxu0
      %3625 = vdwg.mxu0
      %s3626 = scalar_lea.vmem [#allocation3], 48
      %v3627 = vld [vmem:[%s3626] ss:$2 sm:$0xff]
      %s3628 = scalar_lea.vmem %s3626, 48 [#allocation3]
      %v3629 = vld [vmem:[%s3628] ss:$2 sm:$0xff]
      %s3630 = scalar_lea.vmem %s3626, 96 [#allocation3]
      %v3631 = vld [vmem:[%s3630] ss:$2 sm:$0xff]
      %s3632 = scalar_lea.vmem %s3626, 144 [#allocation3]
      %v3633 = vld [vmem:[%s3632] ss:$2 sm:$0xff]
      %s3634 = scalar_lea.vmem %s3626, 192 [#allocation3]
      %v3635 = vld [vmem:[%s3634] ss:$2 sm:$0xff]
      %s3636 = scalar_lea.vmem %s3626, 240 [#allocation3]
      %v3637 = vld [vmem:[%s3636] ss:$2 sm:$0xff]
      %s3638 = scalar_lea.vmem %s3626, 288 [#allocation3]
      %v3639 = vld [vmem:[%s3638] ss:$2 sm:$0xff]
      %s3640 = scalar_lea.vmem %s3626, 336 [#allocation3]
      %v3641 = vld [vmem:[%s3640] ss:$2 sm:$0xff]
      %v3642 = vpack.c.bf16 %v3629, %v3627
      %v3643 = vpack.c.bf16 %v3633, %v3631
      %v3644 = vpack.c.bf16 %v3637, %v3635
      %v3645 = vpack.c.bf16 %v3641, %v3639
      %s3646 = scalar_lea.vmem %s3626, 1 [#allocation3]
      %v3647 = vld [vmem:[%s3646] ss:$2 sm:$0xff]
      %s3648 = scalar_lea.vmem %s3626, 49 [#allocation3]
      %v3649 = vld [vmem:[%s3648] ss:$2 sm:$0xff]
      %s3650 = scalar_lea.vmem %s3626, 97 [#allocation3]
      %v3651 = vld [vmem:[%s3650] ss:$2 sm:$0xff]
      %s3652 = scalar_lea.vmem %s3626, 145 [#allocation3]
      %v3653 = vld [vmem:[%s3652] ss:$2 sm:$0xff]
      %s3654 = scalar_lea.vmem %s3626, 193 [#allocation3]
      %v3655 = vld [vmem:[%s3654] ss:$2 sm:$0xff]
      %s3656 = scalar_lea.vmem %s3626, 241 [#allocation3]
      %v3657 = vld [vmem:[%s3656] ss:$2 sm:$0xff]
      %s3658 = scalar_lea.vmem %s3626, 289 [#allocation3]
      %v3659 = vld [vmem:[%s3658] ss:$2 sm:$0xff]
      %s3660 = scalar_lea.vmem %s3626, 337 [#allocation3]
      %v3661 = vld [vmem:[%s3660] ss:$2 sm:$0xff]
      %v3662 = vpack.c.bf16 %v3649, %v3647
      %v3663 = vpack.c.bf16 %v3653, %v3651
      %v3664 = vpack.c.bf16 %v3657, %v3655
      %v3665 = vpack.c.bf16 %v3661, %v3659
      %s3666 = scalar_lea.vmem %s3626, 2 [#allocation3]
      %v3667 = vld [vmem:[%s3666] ss:$2 sm:$0xff]
      %s3668 = scalar_lea.vmem %s3626, 50 [#allocation3]
      %v3669 = vld [vmem:[%s3668] ss:$2 sm:$0xff]
      %s3670 = scalar_lea.vmem %s3626, 98 [#allocation3]
      %v3671 = vld [vmem:[%s3670] ss:$2 sm:$0xff]
      %s3672 = scalar_lea.vmem %s3626, 146 [#allocation3]
      %v3673 = vld [vmem:[%s3672] ss:$2 sm:$0xff]
      %s3674 = scalar_lea.vmem %s3626, 194 [#allocation3]
      %v3675 = vld [vmem:[%s3674] ss:$2 sm:$0xff]
      %s3676 = scalar_lea.vmem %s3626, 242 [#allocation3]
      %v3677 = vld [vmem:[%s3676] ss:$2 sm:$0xff]
      %s3678 = scalar_lea.vmem %s3626, 290 [#allocation3]
      %v3679 = vld [vmem:[%s3678] ss:$2 sm:$0xff]
      %s3680 = scalar_lea.vmem %s3626, 338 [#allocation3]
      %v3681 = vld [vmem:[%s3680] ss:$2 sm:$0xff]
      %v3682 = vpack.c.bf16 %v3669, %v3667
      %v3683 = vpack.c.bf16 %v3673, %v3671
      %v3684 = vpack.c.bf16 %v3677, %v3675
      %v3685 = vpack.c.bf16 %v3681, %v3679
      %s3686 = scalar_lea.vmem %s3, 384
      %v3687 = vld [vmem:[%s3686] sm:$0xf]
      %v3688 = vld [vmem:[%s3686 + $0x4] sm:$0xf]
      %v3689 = vld [vmem:[%s3686 + $0x8] sm:$0xf]
      %v3690 = vld [vmem:[%s3686 + $0xc] sm:$0xf]
      %v3691 = vld [vmem:[%s3686 + $0x10] sm:$0xf]
      %v3692 = vld [vmem:[%s3686 + $0x14] sm:$0xf]
      %v3693 = vld [vmem:[%s3686 + $0x18] sm:$0xf]
      %v3694 = vld [vmem:[%s3686 + $0x1c] sm:$0xf]
      %v3695 = vld [vmem:[%s3686 + $0x20] sm:$0xf]
      %v3696 = vld [vmem:[%s3686 + $0x24] sm:$0xf]
      %v3697 = vld [vmem:[%s3686 + $0x28] sm:$0xf]
      %v3698 = vld [vmem:[%s3686 + $0x2c] sm:$0xf]
      %v3699 = vld [vmem:[%s3686 + $0x30] sm:$0xf]
      %v3700 = vld [vmem:[%s3686 + $0x34] sm:$0xf]
      %v3701 = vld [vmem:[%s3686 + $0x38] sm:$0xf]
      %v3702 = vld [vmem:[%s3686 + $0x3c] sm:$0xf]
      %v3703 = vld [vmem:[%s3686 + $0x40] sm:$0xf]
      %v3704 = vld [vmem:[%s3686 + $0x44] sm:$0xf]
      %v3705 = vld [vmem:[%s3686 + $0x48] sm:$0xf]
      %v3706 = vld [vmem:[%s3686 + $0x4c] sm:$0xf]
      %v3707 = vld [vmem:[%s3686 + $0x50] sm:$0xf]
      %v3708 = vld [vmem:[%s3686 + $0x54] sm:$0xf]
      %v3709 = vld [vmem:[%s3686 + $0x58] sm:$0xf]
      %v3710 = vld [vmem:[%s3686 + $0x5c] sm:$0xf]
      %v3711 = vld [vmem:[%s3686 + $0x60] sm:$0xf]
      %v3712 = vld [vmem:[%s3686 + $0x64] sm:$0xf]
      %v3713 = vld [vmem:[%s3686 + $0x68] sm:$0xf]
      %v3714 = vld [vmem:[%s3686 + $0x6c] sm:$0xf]
      %v3715 = vld [vmem:[%s3686 + $0x70] sm:$0xf]
      %v3716 = vld [vmem:[%s3686 + $0x74] sm:$0xf]
      %v3717 = vld [vmem:[%s3686 + $0x78] sm:$0xf]
      %v3718 = vld [vmem:[%s3686 + $0x7c] sm:$0xf]
      %v3719 = vld [vmem:[%s3686 + $0x80] sm:$0xf]
      %v3720 = vld [vmem:[%s3686 + $0x84] sm:$0xf]
      %v3721 = vld [vmem:[%s3686 + $0x88] sm:$0xf]
      %v3722 = vld [vmem:[%s3686 + $0x8c] sm:$0xf]
      %v3723 = vld [vmem:[%s3686 + $0x90] sm:$0xf]
      %v3724 = vld [vmem:[%s3686 + $0x94] sm:$0xf]
      %v3725 = vld [vmem:[%s3686 + $0x98] sm:$0xf]
      %v3726 = vld [vmem:[%s3686 + $0x9c] sm:$0xf]
      %v3727 = vld [vmem:[%s3686 + $0xa0] sm:$0xf]
      %v3728 = vld [vmem:[%s3686 + $0xa4] sm:$0xf]
      %v3729 = vld [vmem:[%s3686 + $0xa8] sm:$0xf]
      %v3730 = vld [vmem:[%s3686 + $0xac] sm:$0xf]
      %v3731 = vld [vmem:[%s3686 + $0xb0] sm:$0xf]
      %v3732 = vld [vmem:[%s3686 + $0xb4] sm:$0xf]
      %v3733 = vld [vmem:[%s3686 + $0xb8] sm:$0xf]
      %v3734 = vld [vmem:[%s3686 + $0xbc] sm:$0xf]
      %v3783 = vunpack.c.l.b16 %v3687
      %v3784 = vunpack.c.l.b16 %v3688
      %v3785 = vunpack.c.l.b16 %v3689
      %v3786 = vunpack.c.l.b16 %v3690
      %v3787 = vunpack.c.l.b16 %v3691
      %v3788 = vunpack.c.l.b16 %v3692
      %v3789 = vunpack.c.l.b16 %v3693
      %v3790 = vunpack.c.l.b16 %v3694
      %v3791 = vunpack.c.l.b16 %v3695
      %v3792 = vunpack.c.l.b16 %v3696
      %v3793 = vunpack.c.l.b16 %v3697
      %v3794 = vunpack.c.l.b16 %v3698
      %v3795 = vunpack.c.l.b16 %v3699
      %v3796 = vunpack.c.l.b16 %v3700
      %v3797 = vunpack.c.l.b16 %v3701
      %v3798 = vunpack.c.l.b16 %v3702
      %v3799 = vunpack.c.l.b16 %v3703
      %v3800 = vunpack.c.l.b16 %v3704
      %v3801 = vunpack.c.l.b16 %v3705
      %v3802 = vunpack.c.l.b16 %v3706
      %v3803 = vunpack.c.l.b16 %v3707
      %v3804 = vunpack.c.l.b16 %v3708
      %v3805 = vunpack.c.l.b16 %v3709
      %v3806 = vunpack.c.l.b16 %v3710
      %v3807 = vunpack.c.l.b16 %v3711
      %v3808 = vunpack.c.l.b16 %v3712
      %v3809 = vunpack.c.l.b16 %v3713
      %v3810 = vunpack.c.l.b16 %v3714
      %v3811 = vunpack.c.l.b16 %v3715
      %v3812 = vunpack.c.l.b16 %v3716
      %v3813 = vunpack.c.l.b16 %v3717
      %v3814 = vunpack.c.l.b16 %v3718
      %v3815 = vunpack.c.l.b16 %v3719
      %v3816 = vunpack.c.l.b16 %v3720
      %v3817 = vunpack.c.l.b16 %v3721
      %v3818 = vunpack.c.l.b16 %v3722
      %v3819 = vunpack.c.l.b16 %v3723
      %v3820 = vunpack.c.l.b16 %v3724
      %v3821 = vunpack.c.l.b16 %v3725
      %v3822 = vunpack.c.l.b16 %v3726
      %v3823 = vunpack.c.l.b16 %v3727
      %v3824 = vunpack.c.l.b16 %v3728
      %v3825 = vunpack.c.l.b16 %v3729
      %v3826 = vunpack.c.l.b16 %v3730
      %v3827 = vunpack.c.l.b16 %v3731
      %v3828 = vunpack.c.l.b16 %v3732
      %v3829 = vunpack.c.l.b16 %v3733
      %v3830 = vunpack.c.l.b16 %v3734
      %v3831 = vpack.c.b16 %v3784, %v3783
      %v3832 = vpack.c.b16 %v3786, %v3785
      %v3833 = vpack.c.b16 %v3788, %v3787
      %v3834 = vpack.c.b16 %v3790, %v3789
      %v3835 = vpack.c.b16 %v3792, %v3791
      %v3836 = vpack.c.b16 %v3794, %v3793
      %v3837 = vpack.c.b16 %v3796, %v3795
      %v3838 = vpack.c.b16 %v3798, %v3797
      %v3839 = vpack.c.b16 %v3800, %v3799
      %v3840 = vpack.c.b16 %v3802, %v3801
      %v3841 = vpack.c.b16 %v3804, %v3803
      %v3842 = vpack.c.b16 %v3806, %v3805
      %v3843 = vpack.c.b16 %v3808, %v3807
      %v3844 = vpack.c.b16 %v3810, %v3809
      %v3845 = vpack.c.b16 %v3812, %v3811
      %v3846 = vpack.c.b16 %v3814, %v3813
      %v3847 = vpack.c.b16 %v3816, %v3815
      %v3848 = vpack.c.b16 %v3818, %v3817
      %v3849 = vpack.c.b16 %v3820, %v3819
      %v3850 = vpack.c.b16 %v3822, %v3821
      %v3851 = vpack.c.b16 %v3824, %v3823
      %v3852 = vpack.c.b16 %v3826, %v3825
      %v3853 = vpack.c.b16 %v3828, %v3827
      %v3854 = vpack.c.b16 %v3830, %v3829
      %3879 = vmatprep.subr.bf16.mxu0 0
      %3880 = vmatpush1.bf16.msra.mxu0 %v3831
      %3881 = vmatprep.subr.bf16.mxu0 0
      %3882 = vmatpush1.bf16.msra.mxu0 %v3832
      %3883 = vmatprep.subr.bf16.mxu0 0
      %3884 = vmatpush1.bf16.msra.mxu0 %v3833
      %3885 = vmatprep.subr.bf16.mxu0 0
      %3886 = vmatpush1.bf16.msra.mxu0 %v3834
      %3887 = vmatprep.subr.bf16.mxu0 0
      %3888 = vmatpush1.bf16.msra.mxu0 %v3835
      %3889 = vmatprep.subr.bf16.mxu0 0
      %3890 = vmatpush1.bf16.msra.mxu0 %v3836
      %3891 = vmatprep.subr.bf16.mxu0 0
      %3892 = vmatpush1.bf16.msra.mxu0 %v3837
      %3893 = vmatprep.subr.bf16.mxu0 0
      %3894 = vmatpush1.bf16.msra.mxu0 %v3838
      %3895 = vmatprep.subr.bf16.mxu0 0
      %3896 = vmatpush1.bf16.msra.mxu0 %v3839
      %3897 = vmatprep.subr.bf16.mxu0 0
      %3898 = vmatpush1.bf16.msra.mxu0 %v3840
      %3899 = vmatprep.subr.bf16.mxu0 0
      %3900 = vmatpush1.bf16.msra.mxu0 %v3841
      %3901 = vmatprep.subr.bf16.mxu0 0
      %3902 = vmatpush1.bf16.msra.mxu0 %v3842
      %3903 = vmatprep.subr.bf16.mxu0 0
      %3904 = vmatpush1.bf16.msra.mxu0 %v3843
      %3905 = vmatprep.subr.bf16.mxu0 0
      %3906 = vmatpush1.bf16.msra.mxu0 %v3844
      %3907 = vmatprep.subr.bf16.mxu0 0
      %3908 = vmatpush1.bf16.msra.mxu0 %v3845
      %3909 = vmatprep.subr.bf16.mxu0 0
      %3910 = vmatpush1.bf16.msra.mxu0 %v3846
      %3911 = vmatprep.mubr.bf16.mxu0 %v3662
      %3912 = vmatmul.mubr.bf16.gmra.mrb[0].mxu0 %v3642
      %v3913 = vpop.f32.mrb[0].mxu0
      %v3914 = vadd.f32 0.0, %v3913
      %v3915 = vpop.f32.mrb[0].mxu0
      %v3916 = vpop.f32.mrb[0].mxu0
      %v3917 = vadd.f32 0.0, %v3916
      %v3918 = vpop.f32.mrb[0].mxu0
      %3919 = vmatprep.mubr.bf16.mxu0 %v3663
      %3920 = vmatmul.mubr.bf16.gmra.mrb[0].mxu0 %v3643
      %v3921 = vpop.f32.mrb[0].mxu0
      %v3922 = vadd.f32 0.0, %v3921
      %v3923 = vpop.f32.mrb[0].mxu0
      %v3924 = vpop.f32.mrb[0].mxu0
      %v3925 = vadd.f32 0.0, %v3924
      %v3926 = vpop.f32.mrb[0].mxu0
      %3927 = vmatprep.mubr.bf16.mxu0 %v3664
      %3928 = vmatmul.mubr.bf16.gmra.mrb[0].mxu0 %v3644
      %v3929 = vpop.f32.mrb[0].mxu0
      %v3930 = vadd.f32 0.0, %v3929
      %v3931 = vpop.f32.mrb[0].mxu0
      %v3932 = vpop.f32.mrb[0].mxu0
      %v3933 = vadd.f32 0.0, %v3932
      %v3934 = vpop.f32.mrb[0].mxu0
      %3935 = vmatprep.mubr.bf16.mxu0 %v3665
      %3936 = vmatmul.mubr.bf16.gmra.mrb[0].mxu0 %v3645
      %v3937 = vpop.f32.mrb[0].mxu0
      %v3938 = vadd.f32 0.0, %v3937
      %v3939 = vpop.f32.mrb[0].mxu0
      %v3940 = vpop.f32.mrb[0].mxu0
      %v3941 = vadd.f32 0.0, %v3940
      %v3942 = vpop.f32.mrb[0].mxu0
      %3943 = vdwg.mxu0
      %3944 = vmatprep.subr.bf16.mxu0 0
      %3945 = vmatpush1.bf16.msra.mxu0 %v3847
      %3946 = vmatprep.subr.bf16.mxu0 0
      %3947 = vmatpush1.bf16.msra.mxu0 %v3848
      %3948 = vmatprep.subr.bf16.mxu0 0
      %3949 = vmatpush1.bf16.msra.mxu0 %v3849
      %3950 = vmatprep.subr.bf16.mxu0 0
      %3951 = vmatpush1.bf16.msra.mxu0 %v3850
      %3952 = vmatprep.subr.bf16.mxu0 0
      %3953 = vmatpush1.bf16.msra.mxu0 %v3851
      %3954 = vmatprep.subr.bf16.mxu0 0
      %3955 = vmatpush1.bf16.msra.mxu0 %v3852
      %3956 = vmatprep.subr.bf16.mxu0 0
      %3957 = vmatpush1.bf16.msra.mxu0 %v3853
      %3958 = vmatprep.subr.bf16.mxu0 0
      %3959 = vmatpush1.bf16.msra.mxu0 %v3854
      %3960 = vmatprep.subr.bf16.mxu0 0
      %3961 = vmatpush1.bf16.msra.mxu0 0
      %3962 = vmatprep.subr.bf16.mxu0 0
      %3963 = vmatpush1.bf16.msra.mxu0 0
      %3964 = vmatprep.subr.bf16.mxu0 0
      %3965 = vmatpush1.bf16.msra.mxu0 0
      %3966 = vmatprep.subr.bf16.mxu0 0
      %3967 = vmatpush1.bf16.msra.mxu0 0
      %3968 = vmatprep.subr.bf16.mxu0 0
      %3969 = vmatpush1.bf16.msra.mxu0 0
      %3970 = vmatprep.subr.bf16.mxu0 0
      %3971 = vmatpush1.bf16.msra.mxu0 0
      %3972 = vmatprep.subr.bf16.mxu0 0
      %3973 = vmatpush1.bf16.msra.mxu0 0
      %3974 = vmatprep.subr.bf16.mxu0 0
      %3975 = vmatpush1.bf16.msra.mxu0 0
      %3976 = vmatprep.mubr.bf16.mxu0 0
      %3977 = vmatmul.mubr.bf16.gmra.mrb[0].mxu0 %v3682
      %v3978 = vpop.f32.mrb[0].mxu0
      %v3979 = vadd.f32 %v3914, %v3978
      %v3980 = vpop.f32.mrb[0].mxu0
      %v3981 = vpop.f32.mrb[0].mxu0
      %v3982 = vadd.f32 %v3917, %v3981
      %v3983 = vpop.f32.mrb[0].mxu0
      %3984 = vmatprep.mubr.bf16.mxu0 0
      %3985 = vmatmul.mubr.bf16.gmra.mrb[0].mxu0 %v3683
      %v3986 = vpop.f32.mrb[0].mxu0
      %v3987 = vadd.f32 %v3922, %v3986
      %v3988 = vpop.f32.mrb[0].mxu0
      %v3989 = vpop.f32.mrb[0].mxu0
      %v3990 = vadd.f32 %v3925, %v3989
      %v3991 = vpop.f32.mrb[0].mxu0
      %3992 = vmatprep.mubr.bf16.mxu0 0
      %3993 = vmatmul.mubr.bf16.gmra.mrb[0].mxu0 %v3684
      %v3994 = vpop.f32.mrb[0].mxu0
      %v3995 = vadd.f32 %v3930, %v3994
      %v3996 = vpop.f32.mrb[0].mxu0
      %v3997 = vpop.f32.mrb[0].mxu0
      %v3998 = vadd.f32 %v3933, %v3997
      %v3999 = vpop.f32.mrb[0].mxu0
      %4000 = vmatprep.mubr.bf16.mxu0 0
      %4001 = vmatmul.mubr.bf16.gmra.mrb[0].mxu0 %v3685
      %v4002 = vpop.f32.mrb[0].mxu0
      %v4003 = vadd.f32 %v3938, %v4002
      %v4004 = vpop.f32.mrb[0].mxu0
      %v4005 = vpop.f32.mrb[0].mxu0
      %v4006 = vadd.f32 %v3941, %v4005
      %v4007 = vpop.f32.mrb[0].mxu0
      %4008 = vdwg.mxu0
      %v4009 = vadd.f32 %v3596, %v3979
      %v4010 = vadd.f32 %v3599, %v3982
      %v4011 = vadd.f32 %v3604, %v3987
      %v4012 = vadd.f32 %v3607, %v3990
      %v4013 = vadd.f32 %v3612, %v3995
      %v4014 = vadd.f32 %v3615, %v3998
      %v4015 = vadd.f32 %v3620, %v4003
      %v4016 = vadd.f32 %v3623, %v4006
      %v4017 = vld [vmem:[%s8] sm:$0x1]
      %v4019 = vlaneseq
      %v4020 = vshrl.u32 %v4019, 7
      %v4021 = vsub.s32 0, %v4020
      %v4022 = vrot.slane %v4017, %v4021
      %v4024 = vmul.f32 %v4009, %v4022
      %v4025 = vmul.f32 %v4010, %v4022
      %v4026 = vmul.f32 %v4011, %v4022
      %v4027 = vmul.f32 %v4012, %v4022
      %v4028 = vmul.f32 %v4013, %v4022
      %v4029 = vmul.f32 %v4014, %v4022
      %v4030 = vmul.f32 %v4015, %v4022
      %v4031 = vmul.f32 %v4016, %v4022
      %v4032 = vld [vmem:[%s9] sm:$0x1]
      %v4034 = vlaneseq
      %v4035 = vshrl.u32 %v4034, 7
      %v4036 = vsub.s32 0, %v4035
      %v4037 = vrot.slane %v4032, %v4036
      %v4039 = vadd.f32 %v4024, %v4037
      %v4040 = vadd.f32 %v4025, %v4037
      %v4041 = vadd.f32 %v4026, %v4037
      %v4042 = vadd.f32 %v4027, %v4037
      %v4043 = vadd.f32 %v4028, %v4037
      %v4044 = vadd.f32 %v4029, %v4037
      %v4045 = vadd.f32 %v4030, %v4037
      %v4046 = vadd.f32 %v4031, %v4037
      %v4047 = vld [vmem:[%s428] sm:$0xf]
      %v4048 = vld [vmem:[%s428 + $0x4] sm:$0xf]
      %v4049 = vld [vmem:[%s428 + $0x8] sm:$0xf]
      %v4050 = vld [vmem:[%s428 + $0xc] sm:$0xf]
      %v4051 = vld [vmem:[%s428 + $0x10] sm:$0xf]
      %v4052 = vld [vmem:[%s428 + $0x14] sm:$0xf]
      %v4053 = vld [vmem:[%s428 + $0x18] sm:$0xf]
      %v4054 = vld [vmem:[%s428 + $0x1c] sm:$0xf]
      %v4055 = vld [vmem:[%s4] sm:$0xf]
      %v4056 = vld [vmem:[%s4 + $0x4] sm:$0xf]
      %v4057 = vld [vmem:[%s4 + $0x8] sm:$0xf]
      %v4058 = vld [vmem:[%s4 + $0xc] sm:$0xf]
      %v4059 = vld [vmem:[%s4 + $0x10] sm:$0xf]
      %v4060 = vld [vmem:[%s4 + $0x14] sm:$0xf]
      %v4061 = vld [vmem:[%s4 + $0x18] sm:$0xf]
      %v4062 = vld [vmem:[%s4 + $0x1c] sm:$0xf]
      %v4063 = vld [vmem:[%s4 + $0x20] sm:$0xf]
      %v4064 = vld [vmem:[%s4 + $0x24] sm:$0xf]
      %v4065 = vld [vmem:[%s4 + $0x28] sm:$0xf]
      %v4066 = vld [vmem:[%s4 + $0x2c] sm:$0xf]
      %v4067 = vld [vmem:[%s4 + $0x30] sm:$0xf]
      %v4068 = vld [vmem:[%s4 + $0x34] sm:$0xf]
      %v4069 = vld [vmem:[%s4 + $0x38] sm:$0xf]
      %v4070 = vld [vmem:[%s4 + $0x3c] sm:$0xf]
      %v4079 = vunpack.c.l.b16 %v4047
      %v4080 = vunpack.c.l.b16 %v4048
      %v4081 = vunpack.c.l.b16 %v4049
      %v4082 = vunpack.c.l.b16 %v4050
      %v4083 = vunpack.c.l.b16 %v4051
      %v4084 = vunpack.c.l.b16 %v4052
      %v4085 = vunpack.c.l.b16 %v4053
      %v4086 = vunpack.c.l.b16 %v4054
      %v4087 = vpack.c.b16 %v4080, %v4079
      %v4088 = vpack.c.b16 %v4082, %v4081
      %v4089 = vpack.c.b16 %v4084, %v4083
      %v4090 = vpack.c.b16 %v4086, %v4085
      %v4111 = vunpack.c.l.b16 %v4055
      %v4112 = vunpack.c.l.b16 %v4056
      %v4113 = vunpack.c.l.b16 %v4057
      %v4114 = vunpack.c.l.b16 %v4058
      %v4115 = vunpack.c.l.b16 %v4059
      %v4116 = vunpack.c.l.b16 %v4060
      %v4117 = vunpack.c.l.b16 %v4061
      %v4118 = vunpack.c.l.b16 %v4062
      %v4119 = vunpack.c.l.b16 %v4063
      %v4120 = vunpack.c.l.b16 %v4064
      %v4121 = vunpack.c.l.b16 %v4065
      %v4122 = vunpack.c.l.b16 %v4066
      %v4123 = vunpack.c.l.b16 %v4067
      %v4124 = vunpack.c.l.b16 %v4068
      %v4125 = vunpack.c.l.b16 %v4069
      %v4126 = vunpack.c.l.b16 %v4070
      %v4127 = vpack.c.b16 %v4112, %v4111
      %v4128 = vpack.c.b16 %v4114, %v4113
      %v4129 = vpack.c.b16 %v4116, %v4115
      %v4130 = vpack.c.b16 %v4118, %v4117
      %v4131 = vpack.c.b16 %v4120, %v4119
      %v4132 = vpack.c.b16 %v4122, %v4121
      %v4133 = vpack.c.b16 %v4124, %v4123
      %v4134 = vpack.c.b16 %v4126, %v4125
      %4143 = vmatprep.subr.bf16.mxu0 0
      %4144 = vmatpush1.bf16.msra.mxu0 %v4127
      %4145 = vmatprep.subr.bf16.mxu0 0
      %4146 = vmatpush1.bf16.msra.mxu0 %v4128
      %4147 = vmatprep.subr.bf16.mxu0 0
      %4148 = vmatpush1.bf16.msra.mxu0 %v4129
      %4149 = vmatprep.subr.bf16.mxu0 0
      %4150 = vmatpush1.bf16.msra.mxu0 %v4130
      %4151 = vmatprep.subr.bf16.mxu0 0
      %4152 = vmatpush1.bf16.msra.mxu0 %v4131
      %4153 = vmatprep.subr.bf16.mxu0 0
      %4154 = vmatpush1.bf16.msra.mxu0 %v4132
      %4155 = vmatprep.subr.bf16.mxu0 0
      %4156 = vmatpush1.bf16.msra.mxu0 %v4133
      %4157 = vmatprep.subr.bf16.mxu0 0
      %4158 = vmatpush1.bf16.msra.mxu0 %v4134
      %4159 = vmatprep.subr.bf16.mxu0 0
      %4160 = vmatpush1.bf16.msra.mxu0 0
      %4161 = vmatprep.subr.bf16.mxu0 0
      %4162 = vmatpush1.bf16.msra.mxu0 0
      %4163 = vmatprep.subr.bf16.mxu0 0
      %4164 = vmatpush1.bf16.msra.mxu0 0
      %4165 = vmatprep.subr.bf16.mxu0 0
      %4166 = vmatpush1.bf16.msra.mxu0 0
      %4167 = vmatprep.subr.bf16.mxu0 0
      %4168 = vmatpush1.bf16.msra.mxu0 0
      %4169 = vmatprep.subr.bf16.mxu0 0
      %4170 = vmatpush1.bf16.msra.mxu0 0
      %4171 = vmatprep.subr.bf16.mxu0 0
      %4172 = vmatpush1.bf16.msra.mxu0 0
      %4173 = vmatprep.subr.bf16.mxu0 0
      %4174 = vmatpush1.bf16.msra.mxu0 0
      %4175 = vmatprep.mubr.bf16.mxu0 0
      %4176 = vmatmul.mubr.bf16.gmra.mrb[0].mxu0 %v4087
      %v4177 = vpop.f32.mrb[0].mxu0
      %v4178 = vadd.f32 0.0, %v4177
      %v4179 = vpop.f32.mrb[0].mxu0
      %v4180 = vpop.f32.mrb[0].mxu0
      %v4181 = vadd.f32 0.0, %v4180
      %v4182 = vpop.f32.mrb[0].mxu0
      %4183 = vmatprep.mubr.bf16.mxu0 0
      %4184 = vmatmul.mubr.bf16.gmra.mrb[0].mxu0 %v4088
      %v4185 = vpop.f32.mrb[0].mxu0
      %v4186 = vadd.f32 0.0, %v4185
      %v4187 = vpop.f32.mrb[0].mxu0
      %v4188 = vpop.f32.mrb[0].mxu0
      %v4189 = vadd.f32 0.0, %v4188
      %v4190 = vpop.f32.mrb[0].mxu0
      %4191 = vmatprep.mubr.bf16.mxu0 0
      %4192 = vmatmul.mubr.bf16.gmra.mrb[0].mxu0 %v4089
      %v4193 = vpop.f32.mrb[0].mxu0
      %v4194 = vadd.f32 0.0, %v4193
      %v4195 = vpop.f32.mrb[0].mxu0
      %v4196 = vpop.f32.mrb[0].mxu0
      %v4197 = vadd.f32 0.0, %v4196
      %v4198 = vpop.f32.mrb[0].mxu0
      %4199 = vmatprep.mubr.bf16.mxu0 0
      %4200 = vmatmul.mubr.bf16.gmra.mrb[0].mxu0 %v4090
      %v4201 = vpop.f32.mrb[0].mxu0
      %v4202 = vadd.f32 0.0, %v4201
      %v4203 = vpop.f32.mrb[0].mxu0
      %v4204 = vpop.f32.mrb[0].mxu0
      %v4205 = vadd.f32 0.0, %v4204
      %v4206 = vpop.f32.mrb[0].mxu0
      %4207 = vdwg.mxu0
      %v4208 = vld [vmem:[%s10] sm:$0x1]
      %v4210 = vlaneseq
      %v4211 = vshrl.u32 %v4210, 7
      %v4212 = vsub.s32 0, %v4211
      %v4213 = vrot.slane %v4208, %v4212
      %v4215 = vmul.f32 %v4178, %v4213
      %v4216 = vmul.f32 %v4181, %v4213
      %v4217 = vmul.f32 %v4186, %v4213
      %v4218 = vmul.f32 %v4189, %v4213
      %v4219 = vmul.f32 %v4194, %v4213
      %v4220 = vmul.f32 %v4197, %v4213
      %v4221 = vmul.f32 %v4202, %v4213
      %v4222 = vmul.f32 %v4205, %v4213
      %v4223 = vld [vmem:[%s11] sm:$0x1]
      %v4225 = vlaneseq
      %v4226 = vshrl.u32 %v4225, 7
      %v4227 = vsub.s32 0, %v4226
      %v4228 = vrot.slane %v4223, %v4227
      %v4230 = vadd.f32 %v4215, %v4228
      %v4231 = vadd.f32 %v4216, %v4228
      %v4232 = vadd.f32 %v4217, %v4228
      %v4233 = vadd.f32 %v4218, %v4228
      %v4234 = vadd.f32 %v4219, %v4228
      %v4235 = vadd.f32 %v4220, %v4228
      %v4236 = vadd.f32 %v4221, %v4228
      %v4237 = vadd.f32 %v4222, %v4228
      %v4238 = vadd.f32 %v4039, %v4230
      %v4239 = vadd.f32 %v4040, %v4231
      %v4240 = vadd.f32 %v4041, %v4232
      %v4241 = vadd.f32 %v4042, %v4233
      %v4242 = vadd.f32 %v4043, %v4234
      %v4243 = vadd.f32 %v4044, %v4235
      %v4244 = vadd.f32 %v4045, %v4236
      %v4245 = vadd.f32 %v4046, %v4237
      %4246 = vst [vmem:[%s433] sm:$0xff] %v4238
      %4247 = vst [vmem:[%s433 + $0x8] sm:$0xff] %v4239
      %4248 = vst [vmem:[%s433 + $0x10] sm:$0xff] %v4240
      %4249 = vst [vmem:[%s433 + $0x18] sm:$0xff] %v4241
      %4250 = vst [vmem:[%s433 + $0x20] sm:$0xff] %v4242
      %4251 = vst [vmem:[%s433 + $0x28] sm:$0xff] %v4243
      %4252 = vst [vmem:[%s433 + $0x30] sm:$0xff] %v4244
      %4253 = vst [vmem:[%s433 + $0x38] sm:$0xff] %v4245
      %p4254 = scmp.lt.s32.totalorder %s23, 1
      %s4255 = scalar_select %p4254, %s23, 1
      %s4256 = smul.addr %s4255, 8
      %s4257 = smul.addr %s4256, 8
      %s4258 = scalar_lea.vmem %s12, %s4257
      // Predicated region
      $region69: #{bottleneck_forward.1} parent=67 // pred_check
        %p4259 = pneg %p303
      $region70: #{bottleneck_forward.1} parent=67 // pred_check_branch
        %4261 = sbr.rel (%p4259) target = $region72
      $region71: #{bottleneck_forward.1} parent=67 // pred_region
        _
      $region72: #{bottleneck_forward.1} parent=67 // pred_fallthru
        _
    $region68: #{bottleneck_forward.1} parent=5 // pred_fallthru
      _
    %p4262 = scmp.le.s32.totalorder 2, %s18
    // Predicated region
    $region73: #{bottleneck_forward.1} parent=5 // pred_check
      %p4263 = pneg %p4262
    $region74: #{bottleneck_forward.1} parent=5 // pred_check_branch
      %4265 = sbr.rel (%p4263) target = $region76
    $region75: #{bottleneck_forward.1} parent=5 // pred_region
      %s4266 = ssub.s32 %s18, 2
      // Predicated region
      $region77: #{bottleneck_forward.1} parent=75 // pred_check
        %p4267 = pneg %p309
      $region78: #{bottleneck_forward.1} parent=75 // pred_check_branch
        %4269 = sbr.rel (%p4267) target = $region80
      $region79: #{bottleneck_forward.1} parent=75 // pred_region
        %p4270 = scmp.lt.s32.totalorder %s24, 1
        %s4271 = scalar_select %p4270, %s24, 1
        %s4272 = smul.addr %s4271, 8
        %s4273 = smul.addr %s4272, 8
        %s4274 = scalar_lea.vmem %s12, %s4273
      $region80: #{bottleneck_forward.1} parent=75 // pred_fallthru
        _
    $region76: #{bottleneck_forward.1} parent=5 // pred_fallthru
      _
  $region6: #{bottleneck_forward.1} parent=0 // loop_footer
    %s22 = sadd.s32 1, %s18
  $region7: #{bottleneck_forward.1} parent=0 // loop_footer_branch
    %17 = sbr.rel target = $region3
  $region8: #{bottleneck_forward.1} parent=0 // loop_exit
    _

</llo_original>
